<compile_context>
chip_gen: v7x
topology: tpu7x:2x2x1
jax: 0.10.0
libtpu: 0.0.40
codegen_flags: <defaults>
</compile_context>

<pallas_src>
import jax
import jax.numpy as jnp
import numpy as np
from jax.experimental import pallas as pl
from jax.experimental.pallas import tpu as pltpu


def _round_up(a, b):
    return -(-a // b) * b


def notears_mlp_kernel(x_ref, w1t_ref, b1_ref, lcw_ref, b2_ref, o_ref):
    d = o_ref.shape[-1]
    dm1 = w1t_ref.shape[-1]
    m1 = dm1 // d
    # fc1 on the MXU: [bn, d] @ [d, m1*d], f32 accumulation.
    h = jnp.dot(x_ref[...], w1t_ref[...], preferred_element_type=jnp.float32)
    h = jax.nn.sigmoid(h + b1_ref[...])                 # bias + sigmoid in f32
    # LocallyConnected: VPU multiply by the (m-major, j) flattened lc weight,
    # then tree-sum the m1 groups of d lanes (lane-aligned when d % 128 == 0).
    hw = h * lcw_ref[...]
    parts = [hw[:, m * d:(m + 1) * d] for m in range(m1)]   # static slices
    while len(parts) > 1:                                    # depth log2(m1)
        nxt = [parts[a] + parts[a + 1] for a in range(0, len(parts) - 1, 2)]
        if len(parts) % 2:
            nxt.append(parts[-1])
        parts = nxt
    o_ref[...] = (parts[0] + b2_ref[...]).astype(o_ref.dtype)


def notears_mlp_forward(x, fc1_weight, fc1_bias, lc_weight, lc_bias, *,
                        block_n=None, compute_dtype=None):
    """Forward pass of NotearsMLP with dims = [d, m1, 1].

    x:          [n, d]
    fc1_weight: [d*m1, d]   (PyTorch nn.Linear: out = x @ W.T + b)
    fc1_bias:   [d*m1]
    lc_weight:  [d, m1, 1]
    lc_bias:    [d, 1]
    compute_dtype: dtype of the MXU matmul inputs (e.g. jnp.bfloat16).
                   Accumulation / bias / sigmoid / reduction stay float32.
    returns:    [n, d] float32
    """
    n, d = x.shape
    dm1 = fc1_weight.shape[0]
    assert dm1 % d == 0, "fc1_weight must have d * m1 rows"
    m1 = dm1 // d
    if compute_dtype is None:
        compute_dtype = x.dtype
    in_itemsize = jnp.dtype(compute_dtype).itemsize

    # ---- batch tiling: many grid steps, ragged batches handled by padding ---
    if block_n is None:
        # Keep per-step live data (double-buffered x/out tiles + the h/hw
        # intermediates) around ~8 MiB: large enough to amortize the ~0.35 us
        # per-step overhead, small enough to stay well under the scoped-VMEM
        # default.
        per_row = 2 * d * in_itemsize + 2 * d * 4 + 2 * dm1 * 4
        block_n = (8 * 1024 * 1024) // max(per_row, 1)
        block_n = max(8, min(1024, block_n))
    block_n = max(8, _round_up(min(block_n, _round_up(n, 8)), 8))
    n_pad = _round_up(n, block_n)

    # ---- plain-JAX glue: one-time parameter layout prep (off the hot path) --
    # Permute fc1 rows from (j*m1 + m) to (m*d + j) order so h's columns come
    # out grouped by hidden unit m with node j on the lane axis.
    w1_mjd = jnp.transpose(fc1_weight.reshape(d, m1, d), (1, 0, 2))   # [m, j, i]
    w1t = w1_mjd.reshape(m1 * d, d).T                                 # [d, m1*d]
    b1 = fc1_bias.reshape(d, m1).T.reshape(1, m1 * d).astype(jnp.float32)
    lcw = lc_weight[:, :, 0].T.reshape(1, m1 * d).astype(jnp.float32)  # col m*d+j
    b2 = lc_bias.reshape(1, d).astype(jnp.float32)

    x_p = x.astype(compute_dtype)
    w1t = w1t.astype(compute_dtype)
    if n_pad != n:
        x_p = jnp.pad(x_p, ((0, n_pad - n), (0, 0)))

    # ---- cost / VMEM bookkeeping -------------------------------------------
    flops = 2 * n_pad * d * dm1 + 4 * n_pad * dm1
    bytes_accessed = (n_pad * d * (in_itemsize + 4)
                      + d * dm1 * in_itemsize + (2 * dm1 + d) * 4)
    cost = pl.CostEstimate(flops=int(flops),
                           transcendentals=int(n_pad * dm1),
                           bytes_accessed=int(bytes_accessed))
    weight_vmem = d * dm1 * in_itemsize + (2 * dm1 + d) * 4    # single-buffered
    step_vmem = 2 * block_n * d * (in_itemsize + 4)            # x/out, double-buffered
    live_vmem = 2 * block_n * dm1 * 4                          # h and hw
    vmem_est = weight_vmem + step_vmem + live_vmem
    vmem_limit = None
    if vmem_est > 30 * 2 ** 20:
        vmem_limit = int(min(64 * 2 ** 20, vmem_est * 1.25))

    def run(weight_mode):
        wkw = {} if weight_mode is None else {"pipeline_mode": weight_mode}

        def const_spec(shape):
            return pl.BlockSpec(shape, lambda i: (0, 0), **wkw)

        grid_spec = pltpu.PrefetchScalarGridSpec(
            num_scalar_prefetch=0,
            grid=(n_pad // block_n,),
            in_specs=[
                pl.BlockSpec((block_n, d), lambda i: (i, 0)),   # x tile
                const_spec((d, dm1)),                           # w1t (resident)
                const_spec((1, dm1)),                           # b1
                const_spec((1, dm1)),                           # lc weight (flat)
                const_spec((1, d)),                             # b2
            ],
            # Output last dim = d: lane-dense for d >= 128 (demo uses d=128).
            out_specs=pl.BlockSpec((block_n, d), lambda i: (i, 0)),
        )
        return pl.pallas_call(
            notears_mlp_kernel,
            out_shape=jax.ShapeDtypeStruct((n_pad, d), jnp.float32),
            grid_spec=grid_spec,
            compiler_params=pltpu.CompilerParams(
                dimension_semantics=("parallel",),
                vmem_limit_bytes=vmem_limit),
            cost_estimate=cost,
        )(x_p, w1t, b1, lcw, b2)

    if getattr(pl, "Buffered", None) is not None:
        try:
            out = run(pl.Buffered(1))   # single-buffer the resident weights
        except Exception:               # fallback if Buffered(1) is unsupported
            out = run(None)
    else:
        out = run(None)
    return out[:n]


def notears_mlp_reference(x, fc1_weight, fc1_bias, lc_weight, lc_bias):
    """float64 numpy reference mirroring the PyTorch forward exactly."""
    x = np.asarray(x, np.float64)
    w1 = np.asarray(fc1_weight, np.float64)
    b1 = np.asarray(fc1_bias, np.float64)
    lw = np.asarray(lc_weight, np.float64)
    lb = np.asarray(lc_bias, np.float64)
    n, d = x.shape
    m1 = w1.shape[0] // d
    h = x @ w1.T + b1
    h = 1.0 / (1.0 + np.exp(-h.reshape(n, d, m1)))
    y = np.einsum("njm,jmo->njo", h, lw) + lb[None, :, :]
    return y[:, :, 0]


if __name__ == "__main__":
    # Small but TPU-friendly shapes: d is a lane-width multiple (128) so both
    # the matmul N/K and the output stores are lane-dense; the ragged batch
    # (250) exercises the padding path; block_n=64 gives a 4-step grid so the
    # pipeline (and megacore sharding) is actually exercised.
    n, d, m1 = 250, 128, 8
    key = jax.random.PRNGKey(0)
    k1, k2, k3, k4, k5 = jax.random.split(key, 5)

    x = jax.random.normal(k1, (n, d), dtype=jnp.float32)
    bound1 = 1.0 / (d ** 0.5)
    fc1_weight = jax.random.uniform(k2, (d * m1, d), jnp.float32, -bound1, bound1)
    fc1_bias = jax.random.uniform(k3, (d * m1,), jnp.float32, -bound1, bound1)
    bound2 = 1.0 / (m1 ** 0.5)
    lc_weight = jax.random.uniform(k4, (d, m1, 1), jnp.float32, -bound2, bound2)
    lc_bias = jax.random.uniform(k5, (d, 1), jnp.float32, -bound2, bound2)

    ref = notears_mlp_reference(x, fc1_weight, fc1_bias, lc_weight, lc_bias)

    # float32 path
    out_f32 = notears_mlp_forward(x, fc1_weight, fc1_bias, lc_weight, lc_bias,
                                  block_n=64)
    out_f32 = jax.block_until_ready(out_f32)
    assert out_f32.shape == (n, d)
    np.testing.assert_allclose(np.asarray(out_f32, np.float64), ref,
                               atol=5e-3, rtol=5e-3)

    # bfloat16 matmul inputs (f32 accumulation): halves weight traffic / VMEM
    # and doubles MXU throughput; checked against the f64 reference loosely.
    out_bf16 = notears_mlp_forward(x, fc1_weight, fc1_bias, lc_weight, lc_bias,
                                   block_n=64, compute_dtype=jnp.bfloat16)
    out_bf16 = jax.block_until_ready(out_bf16)
    assert out_bf16.shape == (n, d)
    np.testing.assert_allclose(np.asarray(out_bf16, np.float64), ref,
                               atol=2e-2, rtol=2e-2)

    print("KERNEL_OK")
</pallas_src>

<mosaic_0001>
module attributes {stable_mosaic.version = 11 : i64} {
  func.func @notears_mlp_kernel(%arg0: i32, %arg1: memref<64x128xf32, #tpu.memory_space<vmem>>, %arg2: memref<128x1024xf32, #tpu.memory_space<vmem>>, %arg3: memref<1x1024xf32, #tpu.memory_space<vmem>>, %arg4: memref<1x1024xf32, #tpu.memory_space<vmem>>, %arg5: memref<1x128xf32, #tpu.memory_space<vmem>>, %arg6: memref<64x128xf32, #tpu.memory_space<vmem>>) attributes {dimension_semantics = [#tpu.dimension_semantics<parallel>], iteration_bounds = array<i64: 4>, scalar_prefetch = 0 : i64, scratch_operands = 0 : i64, tpu.core_type = #tpu.core_type<tc>, window_params = [{transform_indices = @transform_0, window_bounds = array<i64: 64, 128>}, {pipeline_mode = #tpu.pipeline_mode<synchronous>, transform_indices = @transform_1, window_bounds = array<i64: 128, 1024>}, {pipeline_mode = #tpu.pipeline_mode<synchronous>, transform_indices = @transform_2, window_bounds = array<i64: 1, 1024>}, {pipeline_mode = #tpu.pipeline_mode<synchronous>, transform_indices = @transform_3, window_bounds = array<i64: 1, 1024>}, {pipeline_mode = #tpu.pipeline_mode<synchronous>, transform_indices = @transform_4, window_bounds = array<i64: 1, 128>}, {transform_indices = @transform_5, window_bounds = array<i64: 64, 128>}]} {
    %c0 = arith.constant 0 : index
    %c0_0 = arith.constant 0 : index
    %0 = vector.load %arg1[%c0, %c0_0] : memref<64x128xf32, #tpu.memory_space<vmem>>, vector<64x128xf32>
    %c0_1 = arith.constant 0 : index
    %c0_2 = arith.constant 0 : index
    %1 = vector.load %arg2[%c0_1, %c0_2] : memref<128x1024xf32, #tpu.memory_space<vmem>>, vector<128x1024xf32>
    %cst = arith.constant dense<0.000000e+00> : vector<64x1024xf32>
    %2 = tpu.matmul %0, %1, %cst {dimension_numbers = #tpu.dot_dimension_numbers<[1], [0], [0], [1], [0, 0, 1, 1], [], []>} : vector<64x128xf32>, vector<128x1024xf32>, vector<64x1024xf32> -> vector<64x1024xf32>
    %c0_3 = arith.constant 0 : index
    %c0_4 = arith.constant 0 : index
    %3 = vector.load %arg3[%c0_3, %c0_4] : memref<1x1024xf32, #tpu.memory_space<vmem>>, vector<1x1024xf32>
    %4 = vector.broadcast %3 : vector<1x1024xf32> to vector<64x1024xf32>
    %5 = arith.addf %2, %4 : vector<64x1024xf32>
    %6 = arith.negf %5 : vector<64x1024xf32>
    %7 = math.exp %6 : vector<64x1024xf32>
    %cst_5 = arith.constant 1.000000e+00 : f32
    %8 = vector.broadcast %cst_5 : f32 to vector<64x1024xf32>
    %9 = arith.addf %8, %7 : vector<64x1024xf32>
    %10 = arith.divf %8, %9 : vector<64x1024xf32>
    %c0_6 = arith.constant 0 : index
    %c0_7 = arith.constant 0 : index
    %11 = vector.load %arg4[%c0_6, %c0_7] : memref<1x1024xf32, #tpu.memory_space<vmem>>, vector<1x1024xf32>
    %12 = vector.broadcast %11 : vector<1x1024xf32> to vector<64x1024xf32>
    %13 = arith.mulf %10, %12 : vector<64x1024xf32>
    %14 = vector.extract_strided_slice %13 {offsets = [0, 0], sizes = [64, 128], strides = [1, 1]} : vector<64x1024xf32> to vector<64x128xf32>
    %15 = vector.extract_strided_slice %13 {offsets = [0, 128], sizes = [64, 128], strides = [1, 1]} : vector<64x1024xf32> to vector<64x128xf32>
    %16 = vector.extract_strided_slice %13 {offsets = [0, 256], sizes = [64, 128], strides = [1, 1]} : vector<64x1024xf32> to vector<64x128xf32>
    %17 = vector.extract_strided_slice %13 {offsets = [0, 384], sizes = [64, 128], strides = [1, 1]} : vector<64x1024xf32> to vector<64x128xf32>
    %18 = vector.extract_strided_slice %13 {offsets = [0, 512], sizes = [64, 128], strides = [1, 1]} : vector<64x1024xf32> to vector<64x128xf32>
    %19 = vector.extract_strided_slice %13 {offsets = [0, 640], sizes = [64, 128], strides = [1, 1]} : vector<64x1024xf32> to vector<64x128xf32>
    %20 = vector.extract_strided_slice %13 {offsets = [0, 768], sizes = [64, 128], strides = [1, 1]} : vector<64x1024xf32> to vector<64x128xf32>
    %21 = vector.extract_strided_slice %13 {offsets = [0, 896], sizes = [64, 128], strides = [1, 1]} : vector<64x1024xf32> to vector<64x128xf32>
    %22 = arith.addf %14, %15 : vector<64x128xf32>
    %23 = arith.addf %16, %17 : vector<64x128xf32>
    %24 = arith.addf %18, %19 : vector<64x128xf32>
    %25 = arith.addf %20, %21 : vector<64x128xf32>
    %26 = arith.addf %22, %23 : vector<64x128xf32>
    %27 = arith.addf %24, %25 : vector<64x128xf32>
    %28 = arith.addf %26, %27 : vector<64x128xf32>
    %c0_8 = arith.constant 0 : index
    %c0_9 = arith.constant 0 : index
    %29 = vector.load %arg5[%c0_8, %c0_9] : memref<1x128xf32, #tpu.memory_space<vmem>>, vector<1x128xf32>
    %30 = vector.broadcast %29 : vector<1x128xf32> to vector<64x128xf32>
    %31 = arith.addf %28, %30 : vector<64x128xf32>
    %c0_10 = arith.constant 0 : index
    %c0_11 = arith.constant 0 : index
    %32 = vector.load %arg6[%c0_10, %c0_11] : memref<64x128xf32, #tpu.memory_space<vmem>>, vector<64x128xf32>
    tpu.vector_store %arg6[%c0_10, %c0_11], %31 {strides = array<i32>} : memref<64x128xf32, #tpu.memory_space<vmem>>, vector<64x128xf32>,
    return
  }
  func.func @transform_0(%arg0: i32) -> (i32, i32) {
    %c0_i32 = arith.constant 0 : i32
    %c0_i32_0 = arith.constant 0 : i32
    return %arg0, %c0_i32 : i32, i32
  }
  func.func @transform_1(%arg0: i32) -> (i32, i32) {
    %c0_i32 = arith.constant 0 : i32
    %c0_i32_0 = arith.constant 0 : i32
    %c0_i32_1 = arith.constant 0 : i32
    return %c0_i32, %c0_i32_0 : i32, i32
  }
  func.func @transform_2(%arg0: i32) -> (i32, i32) {
    %c0_i32 = arith.constant 0 : i32
    %c0_i32_0 = arith.constant 0 : i32
    %c0_i32_1 = arith.constant 0 : i32
    return %c0_i32, %c0_i32_0 : i32, i32
  }
  func.func @transform_3(%arg0: i32) -> (i32, i32) {
    %c0_i32 = arith.constant 0 : i32
    %c0_i32_0 = arith.constant 0 : i32
    %c0_i32_1 = arith.constant 0 : i32
    return %c0_i32, %c0_i32_0 : i32, i32
  }
  func.func @transform_4(%arg0: i32) -> (i32, i32) {
    %c0_i32 = arith.constant 0 : i32
    %c0_i32_0 = arith.constant 0 : i32
    %c0_i32_1 = arith.constant 0 : i32
    return %c0_i32, %c0_i32_0 : i32, i32
  }
  func.func @transform_5(%arg0: i32) -> (i32, i32) {
    %c0_i32 = arith.constant 0 : i32
    %c0_i32_0 = arith.constant 0 : i32
    return %arg0, %c0_i32 : i32, i32
  }
}

module attributes {stable_mosaic.version = 11 : i64} {
  func.func @notears_mlp_kernel(%arg0: i32, %arg1: memref<64x128xf32, #tpu.memory_space<vmem>>, %arg2: memref<128x1024xf32, #tpu.memory_space<vmem>>, %arg3: memref<1x1024xf32, #tpu.memory_space<vmem>>, %arg4: memref<1x1024xf32, #tpu.memory_space<vmem>>, %arg5: memref<1x128xf32, #tpu.memory_space<vmem>>, %arg6: memref<64x128xf32, #tpu.memory_space<vmem>>) attributes {dimension_semantics = [#tpu.dimension_semantics<parallel>], iteration_bounds = array<i64: 4>, scalar_prefetch = 0 : i64, scratch_operands = 0 : i64, tpu.core_type = #tpu.core_type<tc>, window_params = [{transform_indices = @transform_0, window_bounds = array<i64: 64, 128>}, {pipeline_mode = #tpu.pipeline_mode<synchronous>, transform_indices = @transform_1, window_bounds = array<i64: 128, 1024>}, {pipeline_mode = #tpu.pipeline_mode<synchronous>, transform_indices = @transform_2, window_bounds = array<i64: 1, 1024>}, {pipeline_mode = #tpu.pipeline_mode<synchronous>, transform_indices = @transform_3, window_bounds = array<i64: 1, 1024>}, {pipeline_mode = #tpu.pipeline_mode<synchronous>, transform_indices = @transform_4, window_bounds = array<i64: 1, 128>}, {transform_indices = @transform_5, window_bounds = array<i64: 64, 128>}]} {
    %c0 = arith.constant 0 : index
    %c0_0 = arith.constant 0 : index
    %0 = vector.load %arg1[%c0, %c0_0] : memref<64x128xf32, #tpu.memory_space<vmem>>, vector<64x128xf32>
    %c0_1 = arith.constant 0 : index
    %c0_2 = arith.constant 0 : index
    %1 = vector.load %arg2[%c0_1, %c0_2] : memref<128x1024xf32, #tpu.memory_space<vmem>>, vector<128x1024xf32>
    %cst = arith.constant dense<0.000000e+00> : vector<64x1024xf32>
    %2 = tpu.matmul %0, %1, %cst {dimension_numbers = #tpu.dot_dimension_numbers<[1], [0], [0], [1], [0, 0, 1, 1], [], []>} : vector<64x128xf32>, vector<128x1024xf32>, vector<64x1024xf32> -> vector<64x1024xf32>
    %c0_3 = arith.constant 0 : index
    %c0_4 = arith.constant 0 : index
    %3 = vector.load %arg3[%c0_3, %c0_4] : memref<1x1024xf32, #tpu.memory_space<vmem>>, vector<1x1024xf32>
    %4 = vector.broadcast %3 : vector<1x1024xf32> to vector<64x1024xf32>
    %5 = arith.addf %2, %4 : vector<64x1024xf32>
    %6 = arith.negf %5 : vector<64x1024xf32>
    %7 = math.exp %6 : vector<64x1024xf32>
    %cst_5 = arith.constant 1.000000e+00 : f32
    %8 = vector.broadcast %cst_5 : f32 to vector<64x1024xf32>
    %9 = arith.addf %8, %7 : vector<64x1024xf32>
    %10 = arith.divf %8, %9 : vector<64x1024xf32>
    %c0_6 = arith.constant 0 : index
    %c0_7 = arith.constant 0 : index
    %11 = vector.load %arg4[%c0_6, %c0_7] : memref<1x1024xf32, #tpu.memory_space<vmem>>, vector<1x1024xf32>
    %12 = vector.broadcast %11 : vector<1x1024xf32> to vector<64x1024xf32>
    %13 = arith.mulf %10, %12 : vector<64x1024xf32>
    %14 = vector.extract_strided_slice %13 {offsets = [0, 0], sizes = [64, 128], strides = [1, 1]} : vector<64x1024xf32> to vector<64x128xf32>
    %15 = vector.extract_strided_slice %13 {offsets = [0, 128], sizes = [64, 128], strides = [1, 1]} : vector<64x1024xf32> to vector<64x128xf32>
    %16 = vector.extract_strided_slice %13 {offsets = [0, 256], sizes = [64, 128], strides = [1, 1]} : vector<64x1024xf32> to vector<64x128xf32>
    %17 = vector.extract_strided_slice %13 {offsets = [0, 384], sizes = [64, 128], strides = [1, 1]} : vector<64x1024xf32> to vector<64x128xf32>
    %18 = vector.extract_strided_slice %13 {offsets = [0, 512], sizes = [64, 128], strides = [1, 1]} : vector<64x1024xf32> to vector<64x128xf32>
    %19 = vector.extract_strided_slice %13 {offsets = [0, 640], sizes = [64, 128], strides = [1, 1]} : vector<64x1024xf32> to vector<64x128xf32>
    %20 = vector.extract_strided_slice %13 {offsets = [0, 768], sizes = [64, 128], strides = [1, 1]} : vector<64x1024xf32> to vector<64x128xf32>
    %21 = vector.extract_strided_slice %13 {offsets = [0, 896], sizes = [64, 128], strides = [1, 1]} : vector<64x1024xf32> to vector<64x128xf32>
    %22 = arith.addf %14, %15 : vector<64x128xf32>
    %23 = arith.addf %16, %17 : vector<64x128xf32>
    %24 = arith.addf %18, %19 : vector<64x128xf32>
    %25 = arith.addf %20, %21 : vector<64x128xf32>
    %26 = arith.addf %22, %23 : vector<64x128xf32>
    %27 = arith.addf %24, %25 : vector<64x128xf32>
    %28 = arith.addf %26, %27 : vector<64x128xf32>
    %c0_8 = arith.constant 0 : index
    %c0_9 = arith.constant 0 : index
    %29 = vector.load %arg5[%c0_8, %c0_9] : memref<1x128xf32, #tpu.memory_space<vmem>>, vector<1x128xf32>
    %30 = vector.broadcast %29 : vector<1x128xf32> to vector<64x128xf32>
    %31 = arith.addf %28, %30 : vector<64x128xf32>
    %c0_10 = arith.constant 0 : index
    %c0_11 = arith.constant 0 : index
    %32 = vector.load %arg6[%c0_10, %c0_11] : memref<64x128xf32, #tpu.memory_space<vmem>>, vector<64x128xf32>
    tpu.vector_store %arg6[%c0_10, %c0_11], %31 {strides = array<i32>} : memref<64x128xf32, #tpu.memory_space<vmem>>, vector<64x128xf32>,
    return
  }
  func.func @transform_0(%arg0: i32) -> (i32, i32) {
    %c0_i32 = arith.constant 0 : i32
    %c0_i32_0 = arith.constant 0 : i32
    return %arg0, %c0_i32 : i32, i32
  }
  func.func @transform_1(%arg0: i32) -> (i32, i32) {
    %c0_i32 = arith.constant 0 : i32
    %c0_i32_0 = arith.constant 0 : i32
    %c0_i32_1 = arith.constant 0 : i32
    return %c0_i32, %c0_i32_0 : i32, i32
  }
  func.func @transform_2(%arg0: i32) -> (i32, i32) {
    %c0_i32 = arith.constant 0 : i32
    %c0_i32_0 = arith.constant 0 : i32
    %c0_i32_1 = arith.constant 0 : i32
    return %c0_i32, %c0_i32_0 : i32, i32
  }
  func.func @transform_3(%arg0: i32) -> (i32, i32) {
    %c0_i32 = arith.constant 0 : i32
    %c0_i32_0 = arith.constant 0 : i32
    %c0_i32_1 = arith.constant 0 : i32
    return %c0_i32, %c0_i32_0 : i32, i32
  }
  func.func @transform_4(%arg0: i32) -> (i32, i32) {
    %c0_i32 = arith.constant 0 : i32
    %c0_i32_0 = arith.constant 0 : i32
    %c0_i32_1 = arith.constant 0 : i32
    return %c0_i32, %c0_i32_0 : i32, i32
  }
  func.func @transform_5(%arg0: i32) -> (i32, i32) {
    %c0_i32 = arith.constant 0 : i32
    %c0_i32_0 = arith.constant 0 : i32
    return %arg0, %c0_i32 : i32, i32
  }
}

</mosaic_0001>

<llo_original>
// kernel: tpu_custom_call.1
$region0: #{tpu_custom_call.1}
  #allocation0 [shape = 'u32[]', space=smem, size = 0x4, offset = 0x4, fixed_abs, tag = 'smem constant byte address 0x4 - core index']
  #allocation1 [shape = 'u32[144,128]{1,0:T(1,128)}', space=vmem, size = 0x12000, scoped, tag = 'internal scratch']
  %s0 = inlined_call_operand.hbm [shape: f32[256,128], index: 0, kind: input, shape index: {}]
  %s1 = inlined_call_operand.hbm [shape: f32[128,1024], index: 1, kind: input, shape index: {}]
  %s2 = inlined_call_operand.hbm [shape: f32[1,1024], index: 2, kind: input, shape index: {}]
  %s3 = inlined_call_operand.vmem [shape: f32[1,1024], index: 3, kind: input, shape index: {}]
  %s4 = inlined_call_operand.vmem [shape: f32[1,128], index: 4, kind: input, shape index: {}]
  %s5 = inlined_call_operand.hbm [shape: f32[256,128], index: 5, kind: output, shape index: {}]
  %s6 = sld [smem:[#allocation0]]
  $region65: #{tpu_custom_call.1} parent=0
    _
  %s8 = ssub.s32 1, %s6
  %s9 = scalar_select 0, %s8, %s6
  $region1: #{tpu_custom_call.1} parent=0
    #allocation2 [shape = 'u8[65536]{0}', space=vmem, size = 0x10000, scoped, tag = 'input window, operand 0']
    #allocation3 [shape = 's32[2]{0}', space=sflag, size = 0x8, scoped, tag = 'scoped memory for tpu_custom_call.1']
    #allocation4 [shape = 's32[2]{0}', space=sflag, size = 0x8, scoped, tag = 'scoped memory for tpu_custom_call.1']
    #allocation5 [shape = 'u8[524288]{0}', space=vmem, size = 0x80000, scoped, tag = 'input window, operand 1, single buffered']
    #allocation6 [shape = 's32[1]{0}', space=sflag, size = 0x4, scoped, tag = 'scoped memory for tpu_custom_call.1']
    #allocation7 [shape = 'u8[4096]{0}', space=vmem, size = 0x1000, scoped, tag = 'input window, operand 2, single buffered']
    #allocation8 [shape = 'u8[65536]{0}', space=vmem, size = 0x10000, scoped, tag = 'output window, operand 0']
    %10 = vsyncpa [#allocation3], 0
    %s11 = scalar_lea.sflag [#allocation3], 1
    %12 = vsyncpa %s11, 0
    %13 = vsyncpa [#allocation6], 0
    %14 = vsyncpa [#allocation4], 0
    %s15 = scalar_lea.sflag [#allocation4], 1
    %16 = vsyncpa %s15, 0
    loop: start=0, step=1, limit=6
    $region2: #{tpu_custom_call.1} parent=1 // loop_pre_header
      _
    $region3: #{tpu_custom_call.1} parent=1 // loop_header
      %s18 = sphi 0, %s22
      %p19 = scmp.ge.s32.totalorder %s18, 6
      %s28 = sphi 0, %s30
      %s31 = sphi 0, %s28
      %s32 = sphi 0, %s31
      %s48 = sphi 0, %s32
      %s52 = sphi 0, %s52
      %s54 = sphi 0, %s52
      %s55 = sphi 0, %s54
      %s69 = sphi 0, %s55
      %s73 = sphi 0, %s73
      %s75 = sphi 0, %s73
      %s76 = sphi 0, %s75
      %s90 = sphi 0, %s76
      %s94 = sphi 0, %s94
      %s96 = sphi 0, %s94
      %s97 = sphi 0, %s96
      %s111 = sphi 0, %s97
      %s115 = sphi 0, %s115
      %s117 = sphi 0, %s115
      %s118 = sphi 0, %s117
      %s132 = sphi 0, %s118
      %s138 = sphi 0, %s140
      %s141 = sphi 0, %s138
      %s142 = sphi 0, %s141
      %s158 = sphi 0, %s142
    $region4: #{tpu_custom_call.1} parent=1 // loop_header_branch
      %21 = sbr.rel (%p19) target = $region8
    $region5: #{tpu_custom_call.1} parent=1 // loop_body
      %s23 = ssub.s32 %s18, 1
      %s24 = ssub.s32 %s18, 2
      %s25 = sadd.s32 %s18, 1
      %s26 = ssub.s32 %s18, %s25
      %p27 = scmp.eq.s32.totalorder %s26, 0
      %s29 = sadd.s32 %s28, 1
      %s30 = scalar_select %p27, %s28, %s29
      %p33 = pneg %p27
      %p34 = scmp.eq.s32.totalorder %s18, 3
      %p35 = por %p33, %p34
      %p36 = scmp.ne.s32.totalorder %s28, %s31
      %p37 = scmp.eq.s32.totalorder %s18, 0
      %p38 = por %p36, %p37
      %p39 = scmp.ne.s32.totalorder %s28, %s31
      %p40 = scmp.eq.s32.totalorder %s23, 3
      %p41 = por %p39, %p40
      %p42 = scmp.ne.s32.totalorder %s31, %s32
      %p43 = scmp.eq.s32.totalorder %s23, 0
      %p44 = por %p42, %p43
      %p45 = scmp.ne.s32.totalorder %s31, %s32
      %p46 = scmp.eq.s32.totalorder %s24, 3
      %p47 = por %p45, %p46
      %p49 = scmp.ne.s32.totalorder %s32, %s48
      %p50 = scmp.eq.s32.totalorder %s24, 0
      %p51 = por %p49, %p50
      %s53 = sadd.s32 %s52, 1
      %p56 = scmp.eq.s32.totalorder %s18, 3
      %p57 = scmp.ne.s32.totalorder %s52, %s54
      %p58 = scmp.eq.s32.totalorder %s18, 0
      %p59 = por %p57, %p58
      %p60 = scmp.ne.s32.totalorder %s52, %s54
      %p61 = scmp.eq.s32.totalorder %s23, 3
      %p62 = por %p60, %p61
      %p63 = scmp.ne.s32.totalorder %s54, %s55
      %p64 = scmp.eq.s32.totalorder %s23, 0
      %p65 = por %p63, %p64
      %p66 = scmp.ne.s32.totalorder %s54, %s55
      %p67 = scmp.eq.s32.totalorder %s24, 3
      %p68 = por %p66, %p67
      %p70 = scmp.ne.s32.totalorder %s55, %s69
      %p71 = scmp.eq.s32.totalorder %s24, 0
      %p72 = por %p70, %p71
      %s74 = sadd.s32 %s73, 1
      %p77 = scmp.eq.s32.totalorder %s18, 3
      %p78 = scmp.ne.s32.totalorder %s73, %s75
      %p79 = scmp.eq.s32.totalorder %s18, 0
      %p80 = por %p78, %p79
      %p81 = scmp.ne.s32.totalorder %s73, %s75
      %p82 = scmp.eq.s32.totalorder %s23, 3
      %p83 = por %p81, %p82
      %p84 = scmp.ne.s32.totalorder %s75, %s76
      %p85 = scmp.eq.s32.totalorder %s23, 0
      %p86 = por %p84, %p85
      %p87 = scmp.ne.s32.totalorder %s75, %s76
      %p88 = scmp.eq.s32.totalorder %s24, 3
      %p89 = por %p87, %p88
      %p91 = scmp.ne.s32.totalorder %s76, %s90
      %p92 = scmp.eq.s32.totalorder %s24, 0
      %p93 = por %p91, %p92
      %s95 = sadd.s32 %s94, 1
      %p98 = scmp.eq.s32.totalorder %s18, 3
      %p99 = scmp.ne.s32.totalorder %s94, %s96
      %p100 = scmp.eq.s32.totalorder %s18, 0
      %p101 = por %p99, %p100
      %p102 = scmp.ne.s32.totalorder %s94, %s96
      %p103 = scmp.eq.s32.totalorder %s23, 3
      %p104 = por %p102, %p103
      %p105 = scmp.ne.s32.totalorder %s96, %s97
      %p106 = scmp.eq.s32.totalorder %s23, 0
      %p107 = por %p105, %p106
      %p108 = scmp.ne.s32.totalorder %s96, %s97
      %p109 = scmp.eq.s32.totalorder %s24, 3
      %p110 = por %p108, %p109
      %p112 = scmp.ne.s32.totalorder %s97, %s111
      %p113 = scmp.eq.s32.totalorder %s24, 0
      %p114 = por %p112, %p113
      %s116 = sadd.s32 %s115, 1
      %p119 = scmp.eq.s32.totalorder %s18, 3
      %p120 = scmp.ne.s32.totalorder %s115, %s117
      %p121 = scmp.eq.s32.totalorder %s18, 0
      %p122 = por %p120, %p121
      %p123 = scmp.ne.s32.totalorder %s115, %s117
      %p124 = scmp.eq.s32.totalorder %s23, 3
      %p125 = por %p123, %p124
      %p126 = scmp.ne.s32.totalorder %s117, %s118
      %p127 = scmp.eq.s32.totalorder %s23, 0
      %p128 = por %p126, %p127
      %p129 = scmp.ne.s32.totalorder %s117, %s118
      %p130 = scmp.eq.s32.totalorder %s24, 3
      %p131 = por %p129, %p130
      %p133 = scmp.ne.s32.totalorder %s118, %s132
      %p134 = scmp.eq.s32.totalorder %s24, 0
      %p135 = por %p133, %p134
      %s136 = ssub.s32 %s18, %s25
      %p137 = scmp.eq.s32.totalorder %s136, 0
      %s139 = sadd.s32 %s138, 1
      %s140 = scalar_select %p137, %s138, %s139
      %p143 = pneg %p137
      %p144 = scmp.eq.s32.totalorder %s18, 3
      %p145 = por %p143, %p144
      %p146 = scmp.ne.s32.totalorder %s138, %s141
      %p147 = scmp.eq.s32.totalorder %s18, 0
      %p148 = por %p146, %p147
      %p149 = scmp.ne.s32.totalorder %s138, %s141
      %p150 = scmp.eq.s32.totalorder %s23, 3
      %p151 = por %p149, %p150
      %p152 = scmp.ne.s32.totalorder %s141, %s142
      %p153 = scmp.eq.s32.totalorder %s23, 0
      %p154 = por %p152, %p153
      %p155 = scmp.ne.s32.totalorder %s141, %s142
      %p156 = scmp.eq.s32.totalorder %s24, 3
      %p157 = por %p155, %p156
      %p159 = scmp.ne.s32.totalorder %s142, %s158
      %p160 = scmp.eq.s32.totalorder %s24, 0
      %p161 = por %p159, %p160
      %p162 = scmp.le.s32.totalorder 1, %s18
      %p163 = scmp.lt.s32.totalorder %s18, 5
      %p164 = pnand %p162, %p163
      %p165 = pneg %p164
      // Predicated region
      $region9: #{tpu_custom_call.1} parent=5 // pred_check
        _
      $region10: #{tpu_custom_call.1} parent=5 // pred_check_branch
        %167 = sbr.rel (%p164) target = $region12
      $region11: #{tpu_custom_call.1} parent=5 // pred_region
        %s168 = ssub.s32 %s18, 1
        // Predicated region
        $region13: #{tpu_custom_call.1} parent=11 // pred_check
          %p169 = pneg %p65
        $region14: #{tpu_custom_call.1} parent=11 // pred_check_branch
          %171 = sbr.rel (%p169) target = $region16
        $region15: #{tpu_custom_call.1} parent=11 // pred_region
          %s173 = ssub.s32 16384, 16384
          %174 = vsyncadd [#allocation6], %s173
          %s175 = sshll.u32 [#allocation5], 4
          %s176 = int_to_ptr.vmem [resolvable:$true] %s175
          %181 = dma.hbm_to_vmem [thread:$0]  %s1, 16384, %s176, [#allocation6], 1024, 1024, 64
        $region16: #{tpu_custom_call.1} parent=11 // pred_fallthru
          _
        // Predicated region
        $region17: #{tpu_custom_call.1} parent=11 // pred_check
          %p182 = pneg %p86
        $region18: #{tpu_custom_call.1} parent=11 // pred_check_branch
          %184 = sbr.rel (%p182) target = $region20
        $region19: #{tpu_custom_call.1} parent=11 // pred_region
          %s186 = ssub.s32 128, 128
          %187 = vsyncadd [#allocation6], %s186
          %s189 = sshll.u32 [#allocation7], 4
          %s190 = int_to_ptr.vmem [resolvable:$true] %s189
          %192 = dma.hbm_to_vmem [thread:$0]  %s2, 128, %s190, [#allocation6]
        $region20: #{tpu_custom_call.1} parent=11 // pred_fallthru
          _
        // Predicated region
        $region21: #{tpu_custom_call.1} parent=11 // pred_check
          %p193 = pneg %p107
        $region22: #{tpu_custom_call.1} parent=11 // pred_check_branch
          %195 = sbr.rel (%p193) target = $region24
        $region23: #{tpu_custom_call.1} parent=11 // pred_region
          _
        $region24: #{tpu_custom_call.1} parent=11 // pred_fallthru
          _
        // Predicated region
        $region25: #{tpu_custom_call.1} parent=11 // pred_check
          %p196 = pneg %p128
        $region26: #{tpu_custom_call.1} parent=11 // pred_check_branch
          %198 = sbr.rel (%p196) target = $region28
        $region27: #{tpu_custom_call.1} parent=11 // pred_region
          _
        $region28: #{tpu_custom_call.1} parent=11 // pred_fallthru
          _
      $region12: #{tpu_custom_call.1} parent=5 // pred_fallthru
        _
      %p199 = scmp.lt.s32.totalorder %s18, 4
      // Predicated region
      $region29: #{tpu_custom_call.1} parent=5 // pred_check
        %p200 = pneg %p199
      $region30: #{tpu_custom_call.1} parent=5 // pred_check_branch
        %202 = sbr.rel (%p200) target = $region32
      $region31: #{tpu_custom_call.1} parent=5 // pred_region
        // Predicated region
        $region33: #{tpu_custom_call.1} parent=31 // pred_check
          %p203 = pneg %p38
        $region34: #{tpu_custom_call.1} parent=31 // pred_check_branch
          %205 = sbr.rel (%p203) target = $region36
        $region35: #{tpu_custom_call.1} parent=31 // pred_region
          %s206 = sand.u32 %s28, 1
          %s207 = scalar_lea.sflag [#allocation3], %s206
          %s208 = sand.u32 %s28, 1
          %s209 = smul.addr %s208, 64
          %s210 = scalar_lea.vmem [#allocation2], %s209
          %s211 = smul.u32 8, %s18
          %s213 = ssub.s32 1024, 1024
          %214 = vsyncadd %s207, %s213
          %s215 = smul.addr %s211, 128
          %s216 = scalar_lea.hbm %s0, %s215
          %s217 = sshll.u32 %s210, 4
          %s218 = int_to_ptr.vmem [resolvable:$true] %s217
          %223 = dma.hbm_to_vmem [thread:$0]  %s216, 1024, %s218, %s207, 128, 128, 8
        $region36: #{tpu_custom_call.1} parent=31 // pred_fallthru
          _
      $region32: #{tpu_custom_call.1} parent=5 // pred_fallthru
        _
      %p224 = scmp.le.s32.totalorder 1, %s18
      %p225 = scmp.lt.s32.totalorder %s18, 5
      %p226 = pnand %p224, %p225
      %p227 = pneg %p226
      // Predicated region
      $region37: #{tpu_custom_call.1} parent=5 // pred_check
        _
      $region38: #{tpu_custom_call.1} parent=5 // pred_check_branch
        %229 = sbr.rel (%p226) target = $region40
      $region39: #{tpu_custom_call.1} parent=5 // pred_region
        %s230 = ssub.s32 %s18, 1
        %s231 = sand.u32 %s31, 1
        %s232 = scalar_lea.sflag [#allocation3], %s231
        %s233 = sand.u32 %s31, 1
        %s234 = smul.addr %s233, 64
        %s235 = scalar_lea.vmem [#allocation2], %s234
        // Predicated region
        $region41: #{tpu_custom_call.1} parent=39 // pred_check
          %p236 = pneg %p44
        $region42: #{tpu_custom_call.1} parent=39 // pred_check_branch
          %238 = sbr.rel (%p236) target = $region44
        $region43: #{tpu_custom_call.1} parent=39 // pred_region
          %239 = dma.done %s232, 1024
        $region44: #{tpu_custom_call.1} parent=39 // pred_fallthru
          _
        // Predicated region
        $region45: #{tpu_custom_call.1} parent=39 // pred_check
          %p240 = pneg %p65
        $region46: #{tpu_custom_call.1} parent=39 // pred_check_branch
          %242 = sbr.rel (%p240) target = $region48
        $region47: #{tpu_custom_call.1} parent=39 // pred_region
          %243 = dma.done [#allocation6], 16384
        $region48: #{tpu_custom_call.1} parent=39 // pred_fallthru
          _
        // Predicated region
        $region49: #{tpu_custom_call.1} parent=39 // pred_check
          %p244 = pneg %p86
        $region50: #{tpu_custom_call.1} parent=39 // pred_check_branch
          %246 = sbr.rel (%p244) target = $region52
        $region51: #{tpu_custom_call.1} parent=39 // pred_region
          %247 = dma.done [#allocation6], 128
        $region52: #{tpu_custom_call.1} parent=39 // pred_fallthru
          _
        %s248 = sand.u32 %s31, 1
        %s249 = scalar_lea.sflag [#allocation3], %s248
        %s250 = sand.u32 %s31, 1
        %s251 = smul.addr %s250, 64
        %s252 = scalar_lea.vmem [#allocation2], %s251
        %p253 = pneg %p44
        %p254 = pneg %p41
        %p255 = pneg %p65
        %p256 = pneg %p62
        %p257 = pneg %p86
        %p258 = pneg %p83
        %p259 = pneg %p107
        %p260 = pneg %p104
        %p261 = pneg %p128
        %p262 = pneg %p125
        %p263 = pneg %p154
        %p264 = pneg %p151
        %s265 = sand.u32 %s141, 1
        %s266 = scalar_lea.sflag [#allocation4], %s265
        %s267 = sand.u32 %s141, 1
        %s268 = smul.addr %s267, 64
        %s269 = scalar_lea.vmem [#allocation8], %s268
        %s270 = smul.u32 8, %s23
        %s271 = smul.u32 8, %s23
        %v272 = vld [vmem:[%s235] sm:$0xff]
        %v273 = vld [vmem:[%s235 + $0x8] sm:$0xff]
        %v274 = vld [vmem:[%s235 + $0x10] sm:$0xff]
        %v275 = vld [vmem:[%s235 + $0x18] sm:$0xff]
        %v276 = vld [vmem:[%s235 + $0x20] sm:$0xff]
        %v277 = vld [vmem:[%s235 + $0x28] sm:$0xff]
        %v278 = vld [vmem:[%s235 + $0x30] sm:$0xff]
        %v279 = vld [vmem:[%s235 + $0x38] sm:$0xff]
        %v280 = vld [vmem:[#allocation5] sm:$0xff]
        %v281 = vld [vmem:[#allocation5 + $0x8] sm:$0xff]
        %v282 = vld [vmem:[#allocation5 + $0x10] sm:$0xff]
        %v283 = vld [vmem:[#allocation5 + $0x18] sm:$0xff]
        %v284 = vld [vmem:[#allocation5 + $0x20] sm:$0xff]
        %v285 = vld [vmem:[#allocation5 + $0x28] sm:$0xff]
        %v286 = vld [vmem:[#allocation5 + $0x30] sm:$0xff]
        %v287 = vld [vmem:[#allocation5 + $0x38] sm:$0xff]
        %v288 = vld [vmem:[#allocation5 + $0x40] sm:$0xff]
        %v289 = vld [vmem:[#allocation5 + $0x48] sm:$0xff]
        %v290 = vld [vmem:[#allocation5 + $0x50] sm:$0xff]
        %v291 = vld [vmem:[#allocation5 + $0x58] sm:$0xff]
        %v292 = vld [vmem:[#allocation5 + $0x60] sm:$0xff]
        %v293 = vld [vmem:[#allocation5 + $0x68] sm:$0xff]
        %v294 = vld [vmem:[#allocation5 + $0x70] sm:$0xff]
        %v295 = vld [vmem:[#allocation5 + $0x78] sm:$0xff]
        %v296 = vld [vmem:[#allocation5 + $0x80] sm:$0xff]
        %v297 = vld [vmem:[#allocation5 + $0x88] sm:$0xff]
        %v298 = vld [vmem:[#allocation5 + $0x90] sm:$0xff]
        %v299 = vld [vmem:[#allocation5 + $0x98] sm:$0xff]
        %v300 = vld [vmem:[#allocation5 + $0xa0] sm:$0xff]
        %v301 = vld [vmem:[#allocation5 + $0xa8] sm:$0xff]
        %v302 = vld [vmem:[#allocation5 + $0xb0] sm:$0xff]
        %v303 = vld [vmem:[#allocation5 + $0xb8] sm:$0xff]
        %v304 = vld [vmem:[#allocation5 + $0xc0] sm:$0xff]
        %v305 = vld [vmem:[#allocation5 + $0xc8] sm:$0xff]
        %v306 = vld [vmem:[#allocation5 + $0xd0] sm:$0xff]
        %v307 = vld [vmem:[#allocation5 + $0xd8] sm:$0xff]
        %v308 = vld [vmem:[#allocation5 + $0xe0] sm:$0xff]
        %v309 = vld [vmem:[#allocation5 + $0xe8] sm:$0xff]
        %v310 = vld [vmem:[#allocation5 + $0xf0] sm:$0xff]
        %v311 = vld [vmem:[#allocation5 + $0xf8] sm:$0xff]
        %v312 = vld [vmem:[#allocation5 + $0x100] sm:$0xff]
        %v313 = vld [vmem:[#allocation5 + $0x108] sm:$0xff]
        %v314 = vld [vmem:[#allocation5 + $0x110] sm:$0xff]
        %v315 = vld [vmem:[#allocation5 + $0x118] sm:$0xff]
        %v316 = vld [vmem:[#allocation5 + $0x120] sm:$0xff]
        %v317 = vld [vmem:[#allocation5 + $0x128] sm:$0xff]
        %v318 = vld [vmem:[#allocation5 + $0x130] sm:$0xff]
        %v319 = vld [vmem:[#allocation5 + $0x138] sm:$0xff]
        %v320 = vld [vmem:[#allocation5 + $0x140] sm:$0xff]
        %v321 = vld [vmem:[#allocation5 + $0x148] sm:$0xff]
        %v322 = vld [vmem:[#allocation5 + $0x150] sm:$0xff]
        %v323 = vld [vmem:[#allocation5 + $0x158] sm:$0xff]
        %v324 = vld [vmem:[#allocation5 + $0x160] sm:$0xff]
        %v325 = vld [vmem:[#allocation5 + $0x168] sm:$0xff]
        %v326 = vld [vmem:[#allocation5 + $0x170] sm:$0xff]
        %v327 = vld [vmem:[#allocation5 + $0x178] sm:$0xff]
        %v328 = vld [vmem:[#allocation5 + $0x180] sm:$0xff]
        %v329 = vld [vmem:[#allocation5 + $0x188] sm:$0xff]
        %v330 = vld [vmem:[#allocation5 + $0x190] sm:$0xff]
        %v331 = vld [vmem:[#allocation5 + $0x198] sm:$0xff]
        %v332 = vld [vmem:[#allocation5 + $0x1a0] sm:$0xff]
        %v333 = vld [vmem:[#allocation5 + $0x1a8] sm:$0xff]
        %v334 = vld [vmem:[#allocation5 + $0x1b0] sm:$0xff]
        %v335 = vld [vmem:[#allocation5 + $0x1b8] sm:$0xff]
        %v336 = vld [vmem:[#allocation5 + $0x1c0] sm:$0xff]
        %v337 = vld [vmem:[#allocation5 + $0x1c8] sm:$0xff]
        %v338 = vld [vmem:[#allocation5 + $0x1d0] sm:$0xff]
        %v339 = vld [vmem:[#allocation5 + $0x1d8] sm:$0xff]
        %v340 = vld [vmem:[#allocation5 + $0x1e0] sm:$0xff]
        %v341 = vld [vmem:[#allocation5 + $0x1e8] sm:$0xff]
        %v342 = vld [vmem:[#allocation5 + $0x1f0] sm:$0xff]
        %v343 = vld [vmem:[#allocation5 + $0x1f8] sm:$0xff]
        %v344 = vld [vmem:[#allocation5 + $0x200] sm:$0xff]
        %v345 = vld [vmem:[#allocation5 + $0x208] sm:$0xff]
        %v346 = vld [vmem:[#allocation5 + $0x210] sm:$0xff]
        %v347 = vld [vmem:[#allocation5 + $0x218] sm:$0xff]
        %v348 = vld [vmem:[#allocation5 + $0x220] sm:$0xff]
        %v349 = vld [vmem:[#allocation5 + $0x228] sm:$0xff]
        %v350 = vld [vmem:[#allocation5 + $0x230] sm:$0xff]
        %v351 = vld [vmem:[#allocation5 + $0x238] sm:$0xff]
        %v352 = vld [vmem:[#allocation5 + $0x240] sm:$0xff]
        %v353 = vld [vmem:[#allocation5 + $0x248] sm:$0xff]
        %v354 = vld [vmem:[#allocation5 + $0x250] sm:$0xff]
        %v355 = vld [vmem:[#allocation5 + $0x258] sm:$0xff]
        %v356 = vld [vmem:[#allocation5 + $0x260] sm:$0xff]
        %v357 = vld [vmem:[#allocation5 + $0x268] sm:$0xff]
        %v358 = vld [vmem:[#allocation5 + $0x270] sm:$0xff]
        %v359 = vld [vmem:[#allocation5 + $0x278] sm:$0xff]
        %v360 = vld [vmem:[#allocation5 + $0x280] sm:$0xff]
        %v361 = vld [vmem:[#allocation5 + $0x288] sm:$0xff]
        %v362 = vld [vmem:[#allocation5 + $0x290] sm:$0xff]
        %v363 = vld [vmem:[#allocation5 + $0x298] sm:$0xff]
        %v364 = vld [vmem:[#allocation5 + $0x2a0] sm:$0xff]
        %v365 = vld [vmem:[#allocation5 + $0x2a8] sm:$0xff]
        %v366 = vld [vmem:[#allocation5 + $0x2b0] sm:$0xff]
        %v367 = vld [vmem:[#allocation5 + $0x2b8] sm:$0xff]
        %v368 = vld [vmem:[#allocation5 + $0x2c0] sm:$0xff]
        %v369 = vld [vmem:[#allocation5 + $0x2c8] sm:$0xff]
        %v370 = vld [vmem:[#allocation5 + $0x2d0] sm:$0xff]
        %v371 = vld [vmem:[#allocation5 + $0x2d8] sm:$0xff]
        %v372 = vld [vmem:[#allocation5 + $0x2e0] sm:$0xff]
        %v373 = vld [vmem:[#allocation5 + $0x2e8] sm:$0xff]
        %v374 = vld [vmem:[#allocation5 + $0x2f0] sm:$0xff]
        %v375 = vld [vmem:[#allocation5 + $0x2f8] sm:$0xff]
        %v376 = vld [vmem:[#allocation5 + $0x300] sm:$0xff]
        %v377 = vld [vmem:[#allocation5 + $0x308] sm:$0xff]
        %v378 = vld [vmem:[#allocation5 + $0x310] sm:$0xff]
        %v379 = vld [vmem:[#allocation5 + $0x318] sm:$0xff]
        %v380 = vld [vmem:[#allocation5 + $0x320] sm:$0xff]
        %v381 = vld [vmem:[#allocation5 + $0x328] sm:$0xff]
        %v382 = vld [vmem:[#allocation5 + $0x330] sm:$0xff]
        %v383 = vld [vmem:[#allocation5 + $0x338] sm:$0xff]
        %v384 = vld [vmem:[#allocation5 + $0x340] sm:$0xff]
        %v385 = vld [vmem:[#allocation5 + $0x348] sm:$0xff]
        %v386 = vld [vmem:[#allocation5 + $0x350] sm:$0xff]
        %v387 = vld [vmem:[#allocation5 + $0x358] sm:$0xff]
        %v388 = vld [vmem:[#allocation5 + $0x360] sm:$0xff]
        %v389 = vld [vmem:[#allocation5 + $0x368] sm:$0xff]
        %v390 = vld [vmem:[#allocation5 + $0x370] sm:$0xff]
        %v391 = vld [vmem:[#allocation5 + $0x378] sm:$0xff]
        %v392 = vld [vmem:[#allocation5 + $0x380] sm:$0xff]
        %v393 = vld [vmem:[#allocation5 + $0x388] sm:$0xff]
        %v394 = vld [vmem:[#allocation5 + $0x390] sm:$0xff]
        %v395 = vld [vmem:[#allocation5 + $0x398] sm:$0xff]
        %v396 = vld [vmem:[#allocation5 + $0x3a0] sm:$0xff]
        %v397 = vld [vmem:[#allocation5 + $0x3a8] sm:$0xff]
        %v398 = vld [vmem:[#allocation5 + $0x3b0] sm:$0xff]
        %v399 = vld [vmem:[#allocation5 + $0x3b8] sm:$0xff]
        %v400 = vld [vmem:[#allocation5 + $0x3c0] sm:$0xff]
        %v401 = vld [vmem:[#allocation5 + $0x3c8] sm:$0xff]
        %v402 = vld [vmem:[#allocation5 + $0x3d0] sm:$0xff]
        %v403 = vld [vmem:[#allocation5 + $0x3d8] sm:$0xff]
        %v404 = vld [vmem:[#allocation5 + $0x3e0] sm:$0xff]
        %v405 = vld [vmem:[#allocation5 + $0x3e8] sm:$0xff]
        %v406 = vld [vmem:[#allocation5 + $0x3f0] sm:$0xff]
        %v407 = vld [vmem:[#allocation5 + $0x3f8] sm:$0xff]
        %v408 = vld [vmem:[#allocation7] sm:$0xff]
        %v410 = vlaneseq
        %v411 = vshrl.u32 %v410, 7
        %v412 = vsub.s32 0, %v411
        %v413 = vrot.slane %v408, %v412
        %v414 = vlaneseq
        %v415 = vshrl.u32 %v414, 7
        %v416 = vsub.s32 1, %v415
        %v417 = vrot.slane %v408, %v416
        %v418 = vlaneseq
        %v419 = vshrl.u32 %v418, 7
        %v420 = vsub.s32 2, %v419
        %v421 = vrot.slane %v408, %v420
        %v422 = vlaneseq
        %v423 = vshrl.u32 %v422, 7
        %v424 = vsub.s32 3, %v423
        %v425 = vrot.slane %v408, %v424
        %v426 = vlaneseq
        %v427 = vshrl.u32 %v426, 7
        %v428 = vsub.s32 4, %v427
        %v429 = vrot.slane %v408, %v428
        %v430 = vlaneseq
        %v431 = vshrl.u32 %v430, 7
        %v432 = vsub.s32 5, %v431
        %v433 = vrot.slane %v408, %v432
        %v434 = vlaneseq
        %v435 = vshrl.u32 %v434, 7
        %v436 = vsub.s32 6, %v435
        %v437 = vrot.slane %v408, %v436
        %v438 = vlaneseq
        %v439 = vshrl.u32 %v438, 7
        %v440 = vsub.s32 7, %v439
        %v441 = vrot.slane %v408, %v440
        %450 = vmatprep.subr.mxu0 %v281
        %451 = vmatpush1.msra.mxu0 %v280
        %452 = vmatprep.subr.mxu0 %v289
        %453 = vmatpush1.msra.mxu0 %v288
        %454 = vmatprep.subr.mxu0 %v297
        %455 = vmatpush1.msra.mxu0 %v296
        %456 = vmatprep.subr.mxu0 %v305
        %457 = vmatpush1.msra.mxu0 %v304
        %458 = vmatprep.subr.mxu0 %v313
        %459 = vmatpush1.msra.mxu0 %v312
        %460 = vmatprep.subr.mxu0 %v321
        %461 = vmatpush1.msra.mxu0 %v320
        %462 = vmatprep.subr.mxu0 %v329
        %463 = vmatpush1.msra.mxu0 %v328
        %464 = vmatprep.subr.mxu0 %v337
        %465 = vmatpush1.msra.mxu0 %v336
        %466 = vmatprep.subr.mxu0 %v345
        %467 = vmatpush1.msra.mxu0 %v344
        %468 = vmatprep.subr.mxu0 %v353
        %469 = vmatpush1.msra.mxu0 %v352
        %470 = vmatprep.subr.mxu0 %v361
        %471 = vmatpush1.msra.mxu0 %v360
        %472 = vmatprep.subr.mxu0 %v369
        %473 = vmatpush1.msra.mxu0 %v368
        %474 = vmatprep.subr.mxu0 %v377
        %475 = vmatpush1.msra.mxu0 %v376
        %476 = vmatprep.subr.mxu0 %v385
        %477 = vmatpush1.msra.mxu0 %v384
        %478 = vmatprep.subr.mxu0 %v393
        %479 = vmatpush1.msra.mxu0 %v392
        %480 = vmatprep.subr.mxu0 %v401
        %481 = vmatpush1.msra.mxu0 %v400
        %482 = vmatprep.subr.mxu0 0.0
        %483 = vmatpush1.msra.mxu0 0.0
        %484 = vmatprep.subr.mxu0 0.0
        %485 = vmatpush1.msra.mxu0 0.0
        %486 = vmatprep.subr.mxu0 0.0
        %487 = vmatpush1.msra.mxu0 0.0
        %488 = vmatprep.subr.mxu0 0.0
        %489 = vmatpush1.msra.mxu0 0.0
        %490 = vmatprep.subr.mxu0 0.0
        %491 = vmatpush1.msra.mxu0 0.0
        %492 = vmatprep.subr.mxu0 0.0
        %493 = vmatpush1.msra.mxu0 0.0
        %494 = vmatprep.subr.mxu0 0.0
        %495 = vmatpush1.msra.mxu0 0.0
        %496 = vmatprep.subr.mxu0 0.0
        %497 = vmatpush1.msra.mxu0 0.0
        %498 = vmatprep.subr.mxu0 0.0
        %499 = vmatpush1.msra.mxu0 0.0
        %500 = vmatprep.subr.mxu0 0.0
        %501 = vmatpush1.msra.mxu0 0.0
        %502 = vmatprep.subr.mxu0 0.0
        %503 = vmatpush1.msra.mxu0 0.0
        %504 = vmatprep.subr.mxu0 0.0
        %505 = vmatpush1.msra.mxu0 0.0
        %506 = vmatprep.subr.mxu0 0.0
        %507 = vmatpush1.msra.mxu0 0.0
        %508 = vmatprep.subr.mxu0 0.0
        %509 = vmatpush1.msra.mxu0 0.0
        %510 = vmatprep.subr.mxu0 0.0
        %511 = vmatpush1.msra.mxu0 0.0
        %512 = vmatprep.subr.mxu0 0.0
        %513 = vmatpush1.msra.mxu0 0.0
        %514 = vmatprep.mubr.f32.mxu0 0.0
        %515 = vmatmul.mubr.f32.gmra.mrb[0].mxu0 %v272
        %v516 = vpop.f32.mrb[0].mxu0
        %v517 = vadd.f32 %v413, %v516
        %v518 = vpop.f32.mrb[0].mxu0
        %v519 = vadd.f32 %v417, %v518
        %520 = vmatprep.mubr.f32.mxu0 0.0
        %521 = vmatmul.mubr.f32.gmra.mrb[0].mxu0 %v273
        %v522 = vpop.f32.mrb[0].mxu0
        %v523 = vadd.f32 %v413, %v522
        %v524 = vpop.f32.mrb[0].mxu0
        %v525 = vadd.f32 %v417, %v524
        %526 = vmatprep.mubr.f32.mxu0 0.0
        %527 = vmatmul.mubr.f32.gmra.mrb[0].mxu0 %v274
        %v528 = vpop.f32.mrb[0].mxu0
        %v529 = vadd.f32 %v413, %v528
        %v530 = vpop.f32.mrb[0].mxu0
        %v531 = vadd.f32 %v417, %v530
        %532 = vmatprep.mubr.f32.mxu0 0.0
        %533 = vmatmul.mubr.f32.gmra.mrb[0].mxu0 %v275
        %v534 = vpop.f32.mrb[0].mxu0
        %v535 = vadd.f32 %v413, %v534
        %v536 = vpop.f32.mrb[0].mxu0
        %v537 = vadd.f32 %v417, %v536
        %538 = vmatprep.mubr.f32.mxu0 0.0
        %539 = vmatmul.mubr.f32.gmra.mrb[0].mxu0 %v276
        %v540 = vpop.f32.mrb[0].mxu0
        %v541 = vadd.f32 %v413, %v540
        %v542 = vpop.f32.mrb[0].mxu0
        %v543 = vadd.f32 %v417, %v542
        %544 = vmatprep.mubr.f32.mxu0 0.0
        %545 = vmatmul.mubr.f32.gmra.mrb[0].mxu0 %v277
        %v546 = vpop.f32.mrb[0].mxu0
        %v547 = vadd.f32 %v413, %v546
        %v548 = vpop.f32.mrb[0].mxu0
        %v549 = vadd.f32 %v417, %v548
        %550 = vmatprep.mubr.f32.mxu0 0.0
        %551 = vmatmul.mubr.f32.gmra.mrb[0].mxu0 %v278
        %v552 = vpop.f32.mrb[0].mxu0
        %v553 = vadd.f32 %v413, %v552
        %v554 = vpop.f32.mrb[0].mxu0
        %v555 = vadd.f32 %v417, %v554
        %556 = vmatprep.mubr.f32.mxu0 0.0
        %557 = vmatmul.mubr.f32.gmra.mrb[0].mxu0 %v279
        %v558 = vpop.f32.mrb[0].mxu0
        %v559 = vadd.f32 %v413, %v558
        %v560 = vpop.f32.mrb[0].mxu0
        %v561 = vadd.f32 %v417, %v560
        %562 = vdwg.mxu0
        %563 = vmatprep.subr.mxu0 %v283
        %564 = vmatpush1.msra.mxu0 %v282
        %565 = vmatprep.subr.mxu0 %v291
        %566 = vmatpush1.msra.mxu0 %v290
        %567 = vmatprep.subr.mxu0 %v299
        %568 = vmatpush1.msra.mxu0 %v298
        %569 = vmatprep.subr.mxu0 %v307
        %570 = vmatpush1.msra.mxu0 %v306
        %571 = vmatprep.subr.mxu0 %v315
        %572 = vmatpush1.msra.mxu0 %v314
        %573 = vmatprep.subr.mxu0 %v323
        %574 = vmatpush1.msra.mxu0 %v322
        %575 = vmatprep.subr.mxu0 %v331
        %576 = vmatpush1.msra.mxu0 %v330
        %577 = vmatprep.subr.mxu0 %v339
        %578 = vmatpush1.msra.mxu0 %v338
        %579 = vmatprep.subr.mxu0 %v347
        %580 = vmatpush1.msra.mxu0 %v346
        %581 = vmatprep.subr.mxu0 %v355
        %582 = vmatpush1.msra.mxu0 %v354
        %583 = vmatprep.subr.mxu0 %v363
        %584 = vmatpush1.msra.mxu0 %v362
        %585 = vmatprep.subr.mxu0 %v371
        %586 = vmatpush1.msra.mxu0 %v370
        %587 = vmatprep.subr.mxu0 %v379
        %588 = vmatpush1.msra.mxu0 %v378
        %589 = vmatprep.subr.mxu0 %v387
        %590 = vmatpush1.msra.mxu0 %v386
        %591 = vmatprep.subr.mxu0 %v395
        %592 = vmatpush1.msra.mxu0 %v394
        %593 = vmatprep.subr.mxu0 %v403
        %594 = vmatpush1.msra.mxu0 %v402
        %595 = vmatprep.subr.mxu0 0.0
        %596 = vmatpush1.msra.mxu0 0.0
        %597 = vmatprep.subr.mxu0 0.0
        %598 = vmatpush1.msra.mxu0 0.0
        %599 = vmatprep.subr.mxu0 0.0
        %600 = vmatpush1.msra.mxu0 0.0
        %601 = vmatprep.subr.mxu0 0.0
        %602 = vmatpush1.msra.mxu0 0.0
        %603 = vmatprep.subr.mxu0 0.0
        %604 = vmatpush1.msra.mxu0 0.0
        %605 = vmatprep.subr.mxu0 0.0
        %606 = vmatpush1.msra.mxu0 0.0
        %607 = vmatprep.subr.mxu0 0.0
        %608 = vmatpush1.msra.mxu0 0.0
        %609 = vmatprep.subr.mxu0 0.0
        %610 = vmatpush1.msra.mxu0 0.0
        %611 = vmatprep.subr.mxu0 0.0
        %612 = vmatpush1.msra.mxu0 0.0
        %613 = vmatprep.subr.mxu0 0.0
        %614 = vmatpush1.msra.mxu0 0.0
        %615 = vmatprep.subr.mxu0 0.0
        %616 = vmatpush1.msra.mxu0 0.0
        %617 = vmatprep.subr.mxu0 0.0
        %618 = vmatpush1.msra.mxu0 0.0
        %619 = vmatprep.subr.mxu0 0.0
        %620 = vmatpush1.msra.mxu0 0.0
        %621 = vmatprep.subr.mxu0 0.0
        %622 = vmatpush1.msra.mxu0 0.0
        %623 = vmatprep.subr.mxu0 0.0
        %624 = vmatpush1.msra.mxu0 0.0
        %625 = vmatprep.subr.mxu0 0.0
        %626 = vmatpush1.msra.mxu0 0.0
        %627 = vmatprep.mubr.f32.mxu0 0.0
        %628 = vmatmul.mubr.f32.gmra.mrb[0].mxu0 %v272
        %v629 = vpop.f32.mrb[0].mxu0
        %v630 = vadd.f32 %v421, %v629
        %v631 = vpop.f32.mrb[0].mxu0
        %v632 = vadd.f32 %v425, %v631
        %633 = vmatprep.mubr.f32.mxu0 0.0
        %634 = vmatmul.mubr.f32.gmra.mrb[0].mxu0 %v273
        %v635 = vpop.f32.mrb[0].mxu0
        %v636 = vadd.f32 %v421, %v635
        %v637 = vpop.f32.mrb[0].mxu0
        %v638 = vadd.f32 %v425, %v637
        %639 = vmatprep.mubr.f32.mxu0 0.0
        %640 = vmatmul.mubr.f32.gmra.mrb[0].mxu0 %v274
        %v641 = vpop.f32.mrb[0].mxu0
        %v642 = vadd.f32 %v421, %v641
        %v643 = vpop.f32.mrb[0].mxu0
        %v644 = vadd.f32 %v425, %v643
        %645 = vmatprep.mubr.f32.mxu0 0.0
        %646 = vmatmul.mubr.f32.gmra.mrb[0].mxu0 %v275
        %v647 = vpop.f32.mrb[0].mxu0
        %v648 = vadd.f32 %v421, %v647
        %v649 = vpop.f32.mrb[0].mxu0
        %v650 = vadd.f32 %v425, %v649
        %651 = vmatprep.mubr.f32.mxu0 0.0
        %652 = vmatmul.mubr.f32.gmra.mrb[0].mxu0 %v276
        %v653 = vpop.f32.mrb[0].mxu0
        %v654 = vadd.f32 %v421, %v653
        %v655 = vpop.f32.mrb[0].mxu0
        %v656 = vadd.f32 %v425, %v655
        %657 = vmatprep.mubr.f32.mxu0 0.0
        %658 = vmatmul.mubr.f32.gmra.mrb[0].mxu0 %v277
        %v659 = vpop.f32.mrb[0].mxu0
        %v660 = vadd.f32 %v421, %v659
        %v661 = vpop.f32.mrb[0].mxu0
        %v662 = vadd.f32 %v425, %v661
        %663 = vmatprep.mubr.f32.mxu0 0.0
        %664 = vmatmul.mubr.f32.gmra.mrb[0].mxu0 %v278
        %v665 = vpop.f32.mrb[0].mxu0
        %v666 = vadd.f32 %v421, %v665
        %v667 = vpop.f32.mrb[0].mxu0
        %v668 = vadd.f32 %v425, %v667
        %669 = vmatprep.mubr.f32.mxu0 0.0
        %670 = vmatmul.mubr.f32.gmra.mrb[0].mxu0 %v279
        %v671 = vpop.f32.mrb[0].mxu0
        %v672 = vadd.f32 %v421, %v671
        %v673 = vpop.f32.mrb[0].mxu0
        %v674 = vadd.f32 %v425, %v673
        %675 = vdwg.mxu0
        %676 = vmatprep.subr.mxu0 %v285
        %677 = vmatpush1.msra.mxu0 %v284
        %678 = vmatprep.subr.mxu0 %v293
        %679 = vmatpush1.msra.mxu0 %v292
        %680 = vmatprep.subr.mxu0 %v301
        %681 = vmatpush1.msra.mxu0 %v300
        %682 = vmatprep.subr.mxu0 %v309
        %683 = vmatpush1.msra.mxu0 %v308
        %684 = vmatprep.subr.mxu0 %v317
        %685 = vmatpush1.msra.mxu0 %v316
        %686 = vmatprep.subr.mxu0 %v325
        %687 = vmatpush1.msra.mxu0 %v324
        %688 = vmatprep.subr.mxu0 %v333
        %689 = vmatpush1.msra.mxu0 %v332
        %690 = vmatprep.subr.mxu0 %v341
        %691 = vmatpush1.msra.mxu0 %v340
        %692 = vmatprep.subr.mxu0 %v349
        %693 = vmatpush1.msra.mxu0 %v348
        %694 = vmatprep.subr.mxu0 %v357
        %695 = vmatpush1.msra.mxu0 %v356
        %696 = vmatprep.subr.mxu0 %v365
        %697 = vmatpush1.msra.mxu0 %v364
        %698 = vmatprep.subr.mxu0 %v373
        %699 = vmatpush1.msra.mxu0 %v372
        %700 = vmatprep.subr.mxu0 %v381
        %701 = vmatpush1.msra.mxu0 %v380
        %702 = vmatprep.subr.mxu0 %v389
        %703 = vmatpush1.msra.mxu0 %v388
        %704 = vmatprep.subr.mxu0 %v397
        %705 = vmatpush1.msra.mxu0 %v396
        %706 = vmatprep.subr.mxu0 %v405
        %707 = vmatpush1.msra.mxu0 %v404
        %708 = vmatprep.subr.mxu0 0.0
        %709 = vmatpush1.msra.mxu0 0.0
        %710 = vmatprep.subr.mxu0 0.0
        %711 = vmatpush1.msra.mxu0 0.0
        %712 = vmatprep.subr.mxu0 0.0
        %713 = vmatpush1.msra.mxu0 0.0
        %714 = vmatprep.subr.mxu0 0.0
        %715 = vmatpush1.msra.mxu0 0.0
        %716 = vmatprep.subr.mxu0 0.0
        %717 = vmatpush1.msra.mxu0 0.0
        %718 = vmatprep.subr.mxu0 0.0
        %719 = vmatpush1.msra.mxu0 0.0
        %720 = vmatprep.subr.mxu0 0.0
        %721 = vmatpush1.msra.mxu0 0.0
        %722 = vmatprep.subr.mxu0 0.0
        %723 = vmatpush1.msra.mxu0 0.0
        %724 = vmatprep.subr.mxu0 0.0
        %725 = vmatpush1.msra.mxu0 0.0
        %726 = vmatprep.subr.mxu0 0.0
        %727 = vmatpush1.msra.mxu0 0.0
        %728 = vmatprep.subr.mxu0 0.0
        %729 = vmatpush1.msra.mxu0 0.0
        %730 = vmatprep.subr.mxu0 0.0
        %731 = vmatpush1.msra.mxu0 0.0
        %732 = vmatprep.subr.mxu0 0.0
        %733 = vmatpush1.msra.mxu0 0.0
        %734 = vmatprep.subr.mxu0 0.0
        %735 = vmatpush1.msra.mxu0 0.0
        %736 = vmatprep.subr.mxu0 0.0
        %737 = vmatpush1.msra.mxu0 0.0
        %738 = vmatprep.subr.mxu0 0.0
        %739 = vmatpush1.msra.mxu0 0.0
        %740 = vmatprep.mubr.f32.mxu0 0.0
        %741 = vmatmul.mubr.f32.gmra.mrb[0].mxu0 %v272
        %v742 = vpop.f32.mrb[0].mxu0
        %v743 = vadd.f32 %v429, %v742
        %v744 = vpop.f32.mrb[0].mxu0
        %v745 = vadd.f32 %v433, %v744
        %746 = vmatprep.mubr.f32.mxu0 0.0
        %747 = vmatmul.mubr.f32.gmra.mrb[0].mxu0 %v273
        %v748 = vpop.f32.mrb[0].mxu0
        %v749 = vadd.f32 %v429, %v748
        %v750 = vpop.f32.mrb[0].mxu0
        %v751 = vadd.f32 %v433, %v750
        %752 = vmatprep.mubr.f32.mxu0 0.0
        %753 = vmatmul.mubr.f32.gmra.mrb[0].mxu0 %v274
        %v754 = vpop.f32.mrb[0].mxu0
        %v755 = vadd.f32 %v429, %v754
        %v756 = vpop.f32.mrb[0].mxu0
        %v757 = vadd.f32 %v433, %v756
        %758 = vmatprep.mubr.f32.mxu0 0.0
        %759 = vmatmul.mubr.f32.gmra.mrb[0].mxu0 %v275
        %v760 = vpop.f32.mrb[0].mxu0
        %v761 = vadd.f32 %v429, %v760
        %v762 = vpop.f32.mrb[0].mxu0
        %v763 = vadd.f32 %v433, %v762
        %764 = vmatprep.mubr.f32.mxu0 0.0
        %765 = vmatmul.mubr.f32.gmra.mrb[0].mxu0 %v276
        %v766 = vpop.f32.mrb[0].mxu0
        %v767 = vadd.f32 %v429, %v766
        %v768 = vpop.f32.mrb[0].mxu0
        %v769 = vadd.f32 %v433, %v768
        %770 = vmatprep.mubr.f32.mxu0 0.0
        %771 = vmatmul.mubr.f32.gmra.mrb[0].mxu0 %v277
        %v772 = vpop.f32.mrb[0].mxu0
        %v773 = vadd.f32 %v429, %v772
        %v774 = vpop.f32.mrb[0].mxu0
        %v775 = vadd.f32 %v433, %v774
        %776 = vmatprep.mubr.f32.mxu0 0.0
        %777 = vmatmul.mubr.f32.gmra.mrb[0].mxu0 %v278
        %v778 = vpop.f32.mrb[0].mxu0
        %v779 = vadd.f32 %v429, %v778
        %v780 = vpop.f32.mrb[0].mxu0
        %v781 = vadd.f32 %v433, %v780
        %782 = vmatprep.mubr.f32.mxu0 0.0
        %783 = vmatmul.mubr.f32.gmra.mrb[0].mxu0 %v279
        %v784 = vpop.f32.mrb[0].mxu0
        %v785 = vadd.f32 %v429, %v784
        %v786 = vpop.f32.mrb[0].mxu0
        %v787 = vadd.f32 %v433, %v786
        %788 = vdwg.mxu0
        %789 = vmatprep.subr.mxu0 %v287
        %790 = vmatpush1.msra.mxu0 %v286
        %791 = vmatprep.subr.mxu0 %v295
        %792 = vmatpush1.msra.mxu0 %v294
        %793 = vmatprep.subr.mxu0 %v303
        %794 = vmatpush1.msra.mxu0 %v302
        %795 = vmatprep.subr.mxu0 %v311
        %796 = vmatpush1.msra.mxu0 %v310
        %797 = vmatprep.subr.mxu0 %v319
        %798 = vmatpush1.msra.mxu0 %v318
        %799 = vmatprep.subr.mxu0 %v327
        %800 = vmatpush1.msra.mxu0 %v326
        %801 = vmatprep.subr.mxu0 %v335
        %802 = vmatpush1.msra.mxu0 %v334
        %803 = vmatprep.subr.mxu0 %v343
        %804 = vmatpush1.msra.mxu0 %v342
        %805 = vmatprep.subr.mxu0 %v351
        %806 = vmatpush1.msra.mxu0 %v350
        %807 = vmatprep.subr.mxu0 %v359
        %808 = vmatpush1.msra.mxu0 %v358
        %809 = vmatprep.subr.mxu0 %v367
        %810 = vmatpush1.msra.mxu0 %v366
        %811 = vmatprep.subr.mxu0 %v375
        %812 = vmatpush1.msra.mxu0 %v374
        %813 = vmatprep.subr.mxu0 %v383
        %814 = vmatpush1.msra.mxu0 %v382
        %815 = vmatprep.subr.mxu0 %v391
        %816 = vmatpush1.msra.mxu0 %v390
        %817 = vmatprep.subr.mxu0 %v399
        %818 = vmatpush1.msra.mxu0 %v398
        %819 = vmatprep.subr.mxu0 %v407
        %820 = vmatpush1.msra.mxu0 %v406
        %821 = vmatprep.subr.mxu0 0.0
        %822 = vmatpush1.msra.mxu0 0.0
        %823 = vmatprep.subr.mxu0 0.0
        %824 = vmatpush1.msra.mxu0 0.0
        %825 = vmatprep.subr.mxu0 0.0
        %826 = vmatpush1.msra.mxu0 0.0
        %827 = vmatprep.subr.mxu0 0.0
        %828 = vmatpush1.msra.mxu0 0.0
        %829 = vmatprep.subr.mxu0 0.0
        %830 = vmatpush1.msra.mxu0 0.0
        %831 = vmatprep.subr.mxu0 0.0
        %832 = vmatpush1.msra.mxu0 0.0
        %833 = vmatprep.subr.mxu0 0.0
        %834 = vmatpush1.msra.mxu0 0.0
        %835 = vmatprep.subr.mxu0 0.0
        %836 = vmatpush1.msra.mxu0 0.0
        %837 = vmatprep.subr.mxu0 0.0
        %838 = vmatpush1.msra.mxu0 0.0
        %839 = vmatprep.subr.mxu0 0.0
        %840 = vmatpush1.msra.mxu0 0.0
        %841 = vmatprep.subr.mxu0 0.0
        %842 = vmatpush1.msra.mxu0 0.0
        %843 = vmatprep.subr.mxu0 0.0
        %844 = vmatpush1.msra.mxu0 0.0
        %845 = vmatprep.subr.mxu0 0.0
        %846 = vmatpush1.msra.mxu0 0.0
        %847 = vmatprep.subr.mxu0 0.0
        %848 = vmatpush1.msra.mxu0 0.0
        %849 = vmatprep.subr.mxu0 0.0
        %850 = vmatpush1.msra.mxu0 0.0
        %851 = vmatprep.subr.mxu0 0.0
        %852 = vmatpush1.msra.mxu0 0.0
        %853 = vmatprep.mubr.f32.mxu0 0.0
        %854 = vmatmul.mubr.f32.gmra.mrb[0].mxu0 %v272
        %v855 = vpop.f32.mrb[0].mxu0
        %v856 = vadd.f32 %v437, %v855
        %v857 = vpop.f32.mrb[0].mxu0
        %v858 = vadd.f32 %v441, %v857
        %859 = vmatprep.mubr.f32.mxu0 0.0
        %860 = vmatmul.mubr.f32.gmra.mrb[0].mxu0 %v273
        %v861 = vpop.f32.mrb[0].mxu0
        %v862 = vadd.f32 %v437, %v861
        %v863 = vpop.f32.mrb[0].mxu0
        %v864 = vadd.f32 %v441, %v863
        %865 = vmatprep.mubr.f32.mxu0 0.0
        %866 = vmatmul.mubr.f32.gmra.mrb[0].mxu0 %v274
        %v867 = vpop.f32.mrb[0].mxu0
        %v868 = vadd.f32 %v437, %v867
        %v869 = vpop.f32.mrb[0].mxu0
        %v870 = vadd.f32 %v441, %v869
        %871 = vmatprep.mubr.f32.mxu0 0.0
        %872 = vmatmul.mubr.f32.gmra.mrb[0].mxu0 %v275
        %v873 = vpop.f32.mrb[0].mxu0
        %v874 = vadd.f32 %v437, %v873
        %v875 = vpop.f32.mrb[0].mxu0
        %v876 = vadd.f32 %v441, %v875
        %877 = vmatprep.mubr.f32.mxu0 0.0
        %878 = vmatmul.mubr.f32.gmra.mrb[0].mxu0 %v276
        %v879 = vpop.f32.mrb[0].mxu0
        %v880 = vadd.f32 %v437, %v879
        %v881 = vpop.f32.mrb[0].mxu0
        %v882 = vadd.f32 %v441, %v881
        %883 = vmatprep.mubr.f32.mxu0 0.0
        %884 = vmatmul.mubr.f32.gmra.mrb[0].mxu0 %v277
        %v885 = vpop.f32.mrb[0].mxu0
        %v886 = vadd.f32 %v437, %v885
        %v887 = vpop.f32.mrb[0].mxu0
        %v888 = vadd.f32 %v441, %v887
        %889 = vmatprep.mubr.f32.mxu0 0.0
        %890 = vmatmul.mubr.f32.gmra.mrb[0].mxu0 %v278
        %v891 = vpop.f32.mrb[0].mxu0
        %v892 = vadd.f32 %v437, %v891
        %v893 = vpop.f32.mrb[0].mxu0
        %v894 = vadd.f32 %v441, %v893
        %895 = vmatprep.mubr.f32.mxu0 0.0
        %896 = vmatmul.mubr.f32.gmra.mrb[0].mxu0 %v279
        %v897 = vpop.f32.mrb[0].mxu0
        %v898 = vadd.f32 %v437, %v897
        %v899 = vpop.f32.mrb[0].mxu0
        %v900 = vadd.f32 %v441, %v899
        %901 = vdwg.mxu0
        %v902 = vxor.u32 %v517, 2147483648
        %v903 = vxor.u32 %v519, 2147483648
        %v904 = vxor.u32 %v630, 2147483648
        %v905 = vxor.u32 %v632, 2147483648
        %v906 = vxor.u32 %v743, 2147483648
        %v907 = vxor.u32 %v745, 2147483648
        %v908 = vxor.u32 %v856, 2147483648
        %v909 = vxor.u32 %v858, 2147483648
        %v910 = vxor.u32 %v523, 2147483648
        %v911 = vxor.u32 %v525, 2147483648
        %v912 = vxor.u32 %v636, 2147483648
        %v913 = vxor.u32 %v638, 2147483648
        %v914 = vxor.u32 %v749, 2147483648
        %v915 = vxor.u32 %v751, 2147483648
        %v916 = vxor.u32 %v862, 2147483648
        %v917 = vxor.u32 %v864, 2147483648
        %v918 = vxor.u32 %v529, 2147483648
        %v919 = vxor.u32 %v531, 2147483648
        %v920 = vxor.u32 %v642, 2147483648
        %v921 = vxor.u32 %v644, 2147483648
        %v922 = vxor.u32 %v755, 2147483648
        %v923 = vxor.u32 %v757, 2147483648
        %v924 = vxor.u32 %v868, 2147483648
        %v925 = vxor.u32 %v870, 2147483648
        %v926 = vxor.u32 %v535, 2147483648
        %v927 = vxor.u32 %v537, 2147483648
        %v928 = vxor.u32 %v648, 2147483648
        %v929 = vxor.u32 %v650, 2147483648
        %v930 = vxor.u32 %v761, 2147483648
        %v931 = vxor.u32 %v763, 2147483648
        %v932 = vxor.u32 %v874, 2147483648
        %v933 = vxor.u32 %v876, 2147483648
        %v934 = vxor.u32 %v541, 2147483648
        %v935 = vxor.u32 %v543, 2147483648
        %v936 = vxor.u32 %v654, 2147483648
        %v937 = vxor.u32 %v656, 2147483648
        %v938 = vxor.u32 %v767, 2147483648
        %v939 = vxor.u32 %v769, 2147483648
        %v940 = vxor.u32 %v880, 2147483648
        %v941 = vxor.u32 %v882, 2147483648
        %v942 = vxor.u32 %v547, 2147483648
        %v943 = vxor.u32 %v549, 2147483648
        %v944 = vxor.u32 %v660, 2147483648
        %v945 = vxor.u32 %v662, 2147483648
        %v946 = vxor.u32 %v773, 2147483648
        %v947 = vxor.u32 %v775, 2147483648
        %v948 = vxor.u32 %v886, 2147483648
        %v949 = vxor.u32 %v888, 2147483648
        %v950 = vxor.u32 %v553, 2147483648
        %v951 = vxor.u32 %v555, 2147483648
        %v952 = vxor.u32 %v666, 2147483648
        %v953 = vxor.u32 %v668, 2147483648
        %v954 = vxor.u32 %v779, 2147483648
        %v955 = vxor.u32 %v781, 2147483648
        %v956 = vxor.u32 %v892, 2147483648
        %v957 = vxor.u32 %v894, 2147483648
        %v958 = vxor.u32 %v559, 2147483648
        %v959 = vxor.u32 %v561, 2147483648
        %v960 = vxor.u32 %v672, 2147483648
        %v961 = vxor.u32 %v674, 2147483648
        %v962 = vxor.u32 %v785, 2147483648
        %v963 = vxor.u32 %v787, 2147483648
        %v964 = vxor.u32 %v898, 2147483648
        %v965 = vxor.u32 %v900, 2147483648
        %v966 = vmul.f32 %v902, 1.442695
        %v967 = vpow.pop %v966
        %v968 = vmul.f32 %v903, 1.442695
        %v969 = vpow.pop %v968
        %v970 = vmul.f32 %v904, 1.442695
        %v971 = vpow.pop %v970
        %v972 = vmul.f32 %v905, 1.442695
        %v973 = vpow.pop %v972
        %v974 = vmul.f32 %v906, 1.442695
        %v975 = vpow.pop %v974
        %v976 = vmul.f32 %v907, 1.442695
        %v977 = vpow.pop %v976
        %v978 = vmul.f32 %v908, 1.442695
        %v979 = vpow.pop %v978
        %v980 = vmul.f32 %v909, 1.442695
        %v981 = vpow.pop %v980
        %v982 = vmul.f32 %v910, 1.442695
        %v983 = vpow.pop %v982
        %v984 = vmul.f32 %v911, 1.442695
        %v985 = vpow.pop %v984
        %v986 = vmul.f32 %v912, 1.442695
        %v987 = vpow.pop %v986
        %v988 = vmul.f32 %v913, 1.442695
        %v989 = vpow.pop %v988
        %v990 = vmul.f32 %v914, 1.442695
        %v991 = vpow.pop %v990
        %v992 = vmul.f32 %v915, 1.442695
        %v993 = vpow.pop %v992
        %v994 = vmul.f32 %v916, 1.442695
        %v995 = vpow.pop %v994
        %v996 = vmul.f32 %v917, 1.442695
        %v997 = vpow.pop %v996
        %v998 = vmul.f32 %v918, 1.442695
        %v999 = vpow.pop %v998
        %v1000 = vmul.f32 %v919, 1.442695
        %v1001 = vpow.pop %v1000
        %v1002 = vmul.f32 %v920, 1.442695
        %v1003 = vpow.pop %v1002
        %v1004 = vmul.f32 %v921, 1.442695
        %v1005 = vpow.pop %v1004
        %v1006 = vmul.f32 %v922, 1.442695
        %v1007 = vpow.pop %v1006
        %v1008 = vmul.f32 %v923, 1.442695
        %v1009 = vpow.pop %v1008
        %v1010 = vmul.f32 %v924, 1.442695
        %v1011 = vpow.pop %v1010
        %v1012 = vmul.f32 %v925, 1.442695
        %v1013 = vpow.pop %v1012
        %v1014 = vmul.f32 %v926, 1.442695
        %v1015 = vpow.pop %v1014
        %v1016 = vmul.f32 %v927, 1.442695
        %v1017 = vpow.pop %v1016
        %v1018 = vmul.f32 %v928, 1.442695
        %v1019 = vpow.pop %v1018
        %v1020 = vmul.f32 %v929, 1.442695
        %v1021 = vpow.pop %v1020
        %v1022 = vmul.f32 %v930, 1.442695
        %v1023 = vpow.pop %v1022
        %v1024 = vmul.f32 %v931, 1.442695
        %v1025 = vpow.pop %v1024
        %v1026 = vmul.f32 %v932, 1.442695
        %v1027 = vpow.pop %v1026
        %v1028 = vmul.f32 %v933, 1.442695
        %v1029 = vpow.pop %v1028
        %v1030 = vmul.f32 %v934, 1.442695
        %v1031 = vpow.pop %v1030
        %v1032 = vmul.f32 %v935, 1.442695
        %v1033 = vpow.pop %v1032
        %v1034 = vmul.f32 %v936, 1.442695
        %v1035 = vpow.pop %v1034
        %v1036 = vmul.f32 %v937, 1.442695
        %v1037 = vpow.pop %v1036
        %v1038 = vmul.f32 %v938, 1.442695
        %v1039 = vpow.pop %v1038
        %v1040 = vmul.f32 %v939, 1.442695
        %v1041 = vpow.pop %v1040
        %v1042 = vmul.f32 %v940, 1.442695
        %v1043 = vpow.pop %v1042
        %v1044 = vmul.f32 %v941, 1.442695
        %v1045 = vpow.pop %v1044
        %v1046 = vmul.f32 %v942, 1.442695
        %v1047 = vpow.pop %v1046
        %v1048 = vmul.f32 %v943, 1.442695
        %v1049 = vpow.pop %v1048
        %v1050 = vmul.f32 %v944, 1.442695
        %v1051 = vpow.pop %v1050
        %v1052 = vmul.f32 %v945, 1.442695
        %v1053 = vpow.pop %v1052
        %v1054 = vmul.f32 %v946, 1.442695
        %v1055 = vpow.pop %v1054
        %v1056 = vmul.f32 %v947, 1.442695
        %v1057 = vpow.pop %v1056
        %v1058 = vmul.f32 %v948, 1.442695
        %v1059 = vpow.pop %v1058
        %v1060 = vmul.f32 %v949, 1.442695
        %v1061 = vpow.pop %v1060
        %v1062 = vmul.f32 %v950, 1.442695
        %v1063 = vpow.pop %v1062
        %v1064 = vmul.f32 %v951, 1.442695
        %v1065 = vpow.pop %v1064
        %v1066 = vmul.f32 %v952, 1.442695
        %v1067 = vpow.pop %v1066
        %v1068 = vmul.f32 %v953, 1.442695
        %v1069 = vpow.pop %v1068
        %v1070 = vmul.f32 %v954, 1.442695
        %v1071 = vpow.pop %v1070
        %v1072 = vmul.f32 %v955, 1.442695
        %v1073 = vpow.pop %v1072
        %v1074 = vmul.f32 %v956, 1.442695
        %v1075 = vpow.pop %v1074
        %v1076 = vmul.f32 %v957, 1.442695
        %v1077 = vpow.pop %v1076
        %v1078 = vmul.f32 %v958, 1.442695
        %v1079 = vpow.pop %v1078
        %v1080 = vmul.f32 %v959, 1.442695
        %v1081 = vpow.pop %v1080
        %v1082 = vmul.f32 %v960, 1.442695
        %v1083 = vpow.pop %v1082
        %v1084 = vmul.f32 %v961, 1.442695
        %v1085 = vpow.pop %v1084
        %v1086 = vmul.f32 %v962, 1.442695
        %v1087 = vpow.pop %v1086
        %v1088 = vmul.f32 %v963, 1.442695
        %v1089 = vpow.pop %v1088
        %v1090 = vmul.f32 %v964, 1.442695
        %v1091 = vpow.pop %v1090
        %v1092 = vmul.f32 %v965, 1.442695
        %v1093 = vpow.pop %v1092
        %v1094 = vadd.f32 %v967, 1.0
        %v1095 = vadd.f32 %v969, 1.0
        %v1096 = vadd.f32 %v971, 1.0
        %v1097 = vadd.f32 %v973, 1.0
        %v1098 = vadd.f32 %v975, 1.0
        %v1099 = vadd.f32 %v977, 1.0
        %v1100 = vadd.f32 %v979, 1.0
        %v1101 = vadd.f32 %v981, 1.0
        %v1102 = vadd.f32 %v983, 1.0
        %v1103 = vadd.f32 %v985, 1.0
        %v1104 = vadd.f32 %v987, 1.0
        %v1105 = vadd.f32 %v989, 1.0
        %v1106 = vadd.f32 %v991, 1.0
        %v1107 = vadd.f32 %v993, 1.0
        %v1108 = vadd.f32 %v995, 1.0
        %v1109 = vadd.f32 %v997, 1.0
        %v1110 = vadd.f32 %v999, 1.0
        %v1111 = vadd.f32 %v1001, 1.0
        %v1112 = vadd.f32 %v1003, 1.0
        %v1113 = vadd.f32 %v1005, 1.0
        %v1114 = vadd.f32 %v1007, 1.0
        %v1115 = vadd.f32 %v1009, 1.0
        %v1116 = vadd.f32 %v1011, 1.0
        %v1117 = vadd.f32 %v1013, 1.0
        %v1118 = vadd.f32 %v1015, 1.0
        %v1119 = vadd.f32 %v1017, 1.0
        %v1120 = vadd.f32 %v1019, 1.0
        %v1121 = vadd.f32 %v1021, 1.0
        %v1122 = vadd.f32 %v1023, 1.0
        %v1123 = vadd.f32 %v1025, 1.0
        %v1124 = vadd.f32 %v1027, 1.0
        %v1125 = vadd.f32 %v1029, 1.0
        %v1126 = vadd.f32 %v1031, 1.0
        %v1127 = vadd.f32 %v1033, 1.0
        %v1128 = vadd.f32 %v1035, 1.0
        %v1129 = vadd.f32 %v1037, 1.0
        %v1130 = vadd.f32 %v1039, 1.0
        %v1131 = vadd.f32 %v1041, 1.0
        %v1132 = vadd.f32 %v1043, 1.0
        %v1133 = vadd.f32 %v1045, 1.0
        %v1134 = vadd.f32 %v1047, 1.0
        %v1135 = vadd.f32 %v1049, 1.0
        %v1136 = vadd.f32 %v1051, 1.0
        %v1137 = vadd.f32 %v1053, 1.0
        %v1138 = vadd.f32 %v1055, 1.0
        %v1139 = vadd.f32 %v1057, 1.0
        %v1140 = vadd.f32 %v1059, 1.0
        %v1141 = vadd.f32 %v1061, 1.0
        %v1142 = vadd.f32 %v1063, 1.0
        %v1143 = vadd.f32 %v1065, 1.0
        %v1144 = vadd.f32 %v1067, 1.0
        %v1145 = vadd.f32 %v1069, 1.0
        %v1146 = vadd.f32 %v1071, 1.0
        %v1147 = vadd.f32 %v1073, 1.0
        %v1148 = vadd.f32 %v1075, 1.0
        %v1149 = vadd.f32 %v1077, 1.0
        %v1150 = vadd.f32 %v1079, 1.0
        %v1151 = vadd.f32 %v1081, 1.0
        %v1152 = vadd.f32 %v1083, 1.0
        %v1153 = vadd.f32 %v1085, 1.0
        %v1154 = vadd.f32 %v1087, 1.0
        %v1155 = vadd.f32 %v1089, 1.0
        %v1156 = vadd.f32 %v1091, 1.0
        %v1157 = vadd.f32 %v1093, 1.0
        %v1158 = vrcp.pop %v1094
        %v1159 = vmul.f32 1.0, %v1158
        %v1160 = vrcp.pop %v1095
        %v1161 = vmul.f32 1.0, %v1160
        %v1162 = vrcp.pop %v1096
        %v1163 = vmul.f32 1.0, %v1162
        %v1164 = vrcp.pop %v1097
        %v1165 = vmul.f32 1.0, %v1164
        %v1166 = vrcp.pop %v1098
        %v1167 = vmul.f32 1.0, %v1166
        %v1168 = vrcp.pop %v1099
        %v1169 = vmul.f32 1.0, %v1168
        %v1170 = vrcp.pop %v1100
        %v1171 = vmul.f32 1.0, %v1170
        %v1172 = vrcp.pop %v1101
        %v1173 = vmul.f32 1.0, %v1172
        %v1174 = vrcp.pop %v1102
        %v1175 = vmul.f32 1.0, %v1174
        %v1176 = vrcp.pop %v1103
        %v1177 = vmul.f32 1.0, %v1176
        %v1178 = vrcp.pop %v1104
        %v1179 = vmul.f32 1.0, %v1178
        %v1180 = vrcp.pop %v1105
        %v1181 = vmul.f32 1.0, %v1180
        %v1182 = vrcp.pop %v1106
        %v1183 = vmul.f32 1.0, %v1182
        %v1184 = vrcp.pop %v1107
        %v1185 = vmul.f32 1.0, %v1184
        %v1186 = vrcp.pop %v1108
        %v1187 = vmul.f32 1.0, %v1186
        %v1188 = vrcp.pop %v1109
        %v1189 = vmul.f32 1.0, %v1188
        %v1190 = vrcp.pop %v1110
        %v1191 = vmul.f32 1.0, %v1190
        %v1192 = vrcp.pop %v1111
        %v1193 = vmul.f32 1.0, %v1192
        %v1194 = vrcp.pop %v1112
        %v1195 = vmul.f32 1.0, %v1194
        %v1196 = vrcp.pop %v1113
        %v1197 = vmul.f32 1.0, %v1196
        %v1198 = vrcp.pop %v1114
        %v1199 = vmul.f32 1.0, %v1198
        %v1200 = vrcp.pop %v1115
        %v1201 = vmul.f32 1.0, %v1200
        %v1202 = vrcp.pop %v1116
        %v1203 = vmul.f32 1.0, %v1202
        %v1204 = vrcp.pop %v1117
        %v1205 = vmul.f32 1.0, %v1204
        %v1206 = vrcp.pop %v1118
        %v1207 = vmul.f32 1.0, %v1206
        %v1208 = vrcp.pop %v1119
        %v1209 = vmul.f32 1.0, %v1208
        %v1210 = vrcp.pop %v1120
        %v1211 = vmul.f32 1.0, %v1210
        %v1212 = vrcp.pop %v1121
        %v1213 = vmul.f32 1.0, %v1212
        %v1214 = vrcp.pop %v1122
        %v1215 = vmul.f32 1.0, %v1214
        %v1216 = vrcp.pop %v1123
        %v1217 = vmul.f32 1.0, %v1216
        %v1218 = vrcp.pop %v1124
        %v1219 = vmul.f32 1.0, %v1218
        %v1220 = vrcp.pop %v1125
        %v1221 = vmul.f32 1.0, %v1220
        %v1222 = vrcp.pop %v1126
        %v1223 = vmul.f32 1.0, %v1222
        %v1224 = vrcp.pop %v1127
        %v1225 = vmul.f32 1.0, %v1224
        %v1226 = vrcp.pop %v1128
        %v1227 = vmul.f32 1.0, %v1226
        %v1228 = vrcp.pop %v1129
        %v1229 = vmul.f32 1.0, %v1228
        %v1230 = vrcp.pop %v1130
        %v1231 = vmul.f32 1.0, %v1230
        %v1232 = vrcp.pop %v1131
        %v1233 = vmul.f32 1.0, %v1232
        %v1234 = vrcp.pop %v1132
        %v1235 = vmul.f32 1.0, %v1234
        %v1236 = vrcp.pop %v1133
        %v1237 = vmul.f32 1.0, %v1236
        %v1238 = vrcp.pop %v1134
        %v1239 = vmul.f32 1.0, %v1238
        %v1240 = vrcp.pop %v1135
        %v1241 = vmul.f32 1.0, %v1240
        %v1242 = vrcp.pop %v1136
        %v1243 = vmul.f32 1.0, %v1242
        %v1244 = vrcp.pop %v1137
        %v1245 = vmul.f32 1.0, %v1244
        %v1246 = vrcp.pop %v1138
        %v1247 = vmul.f32 1.0, %v1246
        %v1248 = vrcp.pop %v1139
        %v1249 = vmul.f32 1.0, %v1248
        %v1250 = vrcp.pop %v1140
        %v1251 = vmul.f32 1.0, %v1250
        %v1252 = vrcp.pop %v1141
        %v1253 = vmul.f32 1.0, %v1252
        %v1254 = vrcp.pop %v1142
        %v1255 = vmul.f32 1.0, %v1254
        %v1256 = vrcp.pop %v1143
        %v1257 = vmul.f32 1.0, %v1256
        %v1258 = vrcp.pop %v1144
        %v1259 = vmul.f32 1.0, %v1258
        %v1260 = vrcp.pop %v1145
        %v1261 = vmul.f32 1.0, %v1260
        %v1262 = vrcp.pop %v1146
        %v1263 = vmul.f32 1.0, %v1262
        %v1264 = vrcp.pop %v1147
        %v1265 = vmul.f32 1.0, %v1264
        %v1266 = vrcp.pop %v1148
        %v1267 = vmul.f32 1.0, %v1266
        %v1268 = vrcp.pop %v1149
        %v1269 = vmul.f32 1.0, %v1268
        %v1270 = vrcp.pop %v1150
        %v1271 = vmul.f32 1.0, %v1270
        %v1272 = vrcp.pop %v1151
        %v1273 = vmul.f32 1.0, %v1272
        %v1274 = vrcp.pop %v1152
        %v1275 = vmul.f32 1.0, %v1274
        %v1276 = vrcp.pop %v1153
        %v1277 = vmul.f32 1.0, %v1276
        %v1278 = vrcp.pop %v1154
        %v1279 = vmul.f32 1.0, %v1278
        %v1280 = vrcp.pop %v1155
        %v1281 = vmul.f32 1.0, %v1280
        %v1282 = vrcp.pop %v1156
        %v1283 = vmul.f32 1.0, %v1282
        %v1284 = vrcp.pop %v1157
        %v1285 = vmul.f32 1.0, %v1284
        %v1286 = vld [vmem:[%s3] sm:$0xff]
        %v1288 = vlaneseq
        %v1289 = vshrl.u32 %v1288, 7
        %v1290 = vsub.s32 0, %v1289
        %v1291 = vrot.slane %v1286, %v1290
        %v1292 = vlaneseq
        %v1293 = vshrl.u32 %v1292, 7
        %v1294 = vsub.s32 1, %v1293
        %v1295 = vrot.slane %v1286, %v1294
        %v1296 = vlaneseq
        %v1297 = vshrl.u32 %v1296, 7
        %v1298 = vsub.s32 2, %v1297
        %v1299 = vrot.slane %v1286, %v1298
        %v1300 = vlaneseq
        %v1301 = vshrl.u32 %v1300, 7
        %v1302 = vsub.s32 3, %v1301
        %v1303 = vrot.slane %v1286, %v1302
        %v1304 = vlaneseq
        %v1305 = vshrl.u32 %v1304, 7
        %v1306 = vsub.s32 4, %v1305
        %v1307 = vrot.slane %v1286, %v1306
        %v1308 = vlaneseq
        %v1309 = vshrl.u32 %v1308, 7
        %v1310 = vsub.s32 5, %v1309
        %v1311 = vrot.slane %v1286, %v1310
        %v1312 = vlaneseq
        %v1313 = vshrl.u32 %v1312, 7
        %v1314 = vsub.s32 6, %v1313
        %v1315 = vrot.slane %v1286, %v1314
        %v1316 = vlaneseq
        %v1317 = vshrl.u32 %v1316, 7
        %v1318 = vsub.s32 7, %v1317
        %v1319 = vrot.slane %v1286, %v1318
        %v1328 = vmul.f32 %v1159, %v1291
        %v1329 = vmul.f32 %v1161, %v1295
        %v1330 = vmul.f32 %v1163, %v1299
        %v1331 = vmul.f32 %v1165, %v1303
        %v1332 = vmul.f32 %v1167, %v1307
        %v1333 = vmul.f32 %v1169, %v1311
        %v1334 = vmul.f32 %v1171, %v1315
        %v1335 = vmul.f32 %v1173, %v1319
        %v1336 = vmul.f32 %v1175, %v1291
        %v1337 = vmul.f32 %v1177, %v1295
        %v1338 = vmul.f32 %v1179, %v1299
        %v1339 = vmul.f32 %v1181, %v1303
        %v1340 = vmul.f32 %v1183, %v1307
        %v1341 = vmul.f32 %v1185, %v1311
        %v1342 = vmul.f32 %v1187, %v1315
        %v1343 = vmul.f32 %v1189, %v1319
        %v1344 = vmul.f32 %v1191, %v1291
        %v1345 = vmul.f32 %v1193, %v1295
        %v1346 = vmul.f32 %v1195, %v1299
        %v1347 = vmul.f32 %v1197, %v1303
        %v1348 = vmul.f32 %v1199, %v1307
        %v1349 = vmul.f32 %v1201, %v1311
        %v1350 = vmul.f32 %v1203, %v1315
        %v1351 = vmul.f32 %v1205, %v1319
        %v1352 = vmul.f32 %v1207, %v1291
        %v1353 = vmul.f32 %v1209, %v1295
        %v1354 = vmul.f32 %v1211, %v1299
        %v1355 = vmul.f32 %v1213, %v1303
        %v1356 = vmul.f32 %v1215, %v1307
        %v1357 = vmul.f32 %v1217, %v1311
        %v1358 = vmul.f32 %v1219, %v1315
        %v1359 = vmul.f32 %v1221, %v1319
        %v1360 = vmul.f32 %v1223, %v1291
        %v1361 = vmul.f32 %v1225, %v1295
        %v1362 = vmul.f32 %v1227, %v1299
        %v1363 = vmul.f32 %v1229, %v1303
        %v1364 = vmul.f32 %v1231, %v1307
        %v1365 = vmul.f32 %v1233, %v1311
        %v1366 = vmul.f32 %v1235, %v1315
        %v1367 = vmul.f32 %v1237, %v1319
        %v1368 = vmul.f32 %v1239, %v1291
        %v1369 = vmul.f32 %v1241, %v1295
        %v1370 = vmul.f32 %v1243, %v1299
        %v1371 = vmul.f32 %v1245, %v1303
        %v1372 = vmul.f32 %v1247, %v1307
        %v1373 = vmul.f32 %v1249, %v1311
        %v1374 = vmul.f32 %v1251, %v1315
        %v1375 = vmul.f32 %v1253, %v1319
        %v1376 = vmul.f32 %v1255, %v1291
        %v1377 = vmul.f32 %v1257, %v1295
        %v1378 = vmul.f32 %v1259, %v1299
        %v1379 = vmul.f32 %v1261, %v1303
        %v1380 = vmul.f32 %v1263, %v1307
        %v1381 = vmul.f32 %v1265, %v1311
        %v1382 = vmul.f32 %v1267, %v1315
        %v1383 = vmul.f32 %v1269, %v1319
        %v1384 = vmul.f32 %v1271, %v1291
        %v1385 = vmul.f32 %v1273, %v1295
        %v1386 = vmul.f32 %v1275, %v1299
        %v1387 = vmul.f32 %v1277, %v1303
        %v1388 = vmul.f32 %v1279, %v1307
        %v1389 = vmul.f32 %v1281, %v1311
        %v1390 = vmul.f32 %v1283, %v1315
        %v1391 = vmul.f32 %v1285, %v1319
        %v1392 = vadd.f32 %v1328, %v1329
        %v1393 = vadd.f32 %v1336, %v1337
        %v1394 = vadd.f32 %v1344, %v1345
        %v1395 = vadd.f32 %v1352, %v1353
        %v1396 = vadd.f32 %v1360, %v1361
        %v1397 = vadd.f32 %v1368, %v1369
        %v1398 = vadd.f32 %v1376, %v1377
        %v1399 = vadd.f32 %v1384, %v1385
        %v1400 = vadd.f32 %v1330, %v1331
        %v1401 = vadd.f32 %v1338, %v1339
        %v1402 = vadd.f32 %v1346, %v1347
        %v1403 = vadd.f32 %v1354, %v1355
        %v1404 = vadd.f32 %v1362, %v1363
        %v1405 = vadd.f32 %v1370, %v1371
        %v1406 = vadd.f32 %v1378, %v1379
        %v1407 = vadd.f32 %v1386, %v1387
        %v1408 = vadd.f32 %v1332, %v1333
        %v1409 = vadd.f32 %v1340, %v1341
        %v1410 = vadd.f32 %v1348, %v1349
        %v1411 = vadd.f32 %v1356, %v1357
        %v1412 = vadd.f32 %v1364, %v1365
        %v1413 = vadd.f32 %v1372, %v1373
        %v1414 = vadd.f32 %v1380, %v1381
        %v1415 = vadd.f32 %v1388, %v1389
        %v1416 = vadd.f32 %v1334, %v1335
        %v1417 = vadd.f32 %v1342, %v1343
        %v1418 = vadd.f32 %v1350, %v1351
        %v1419 = vadd.f32 %v1358, %v1359
        %v1420 = vadd.f32 %v1366, %v1367
        %v1421 = vadd.f32 %v1374, %v1375
        %v1422 = vadd.f32 %v1382, %v1383
        %v1423 = vadd.f32 %v1390, %v1391
        %v1424 = vadd.f32 %v1392, %v1400
        %v1425 = vadd.f32 %v1393, %v1401
        %v1426 = vadd.f32 %v1394, %v1402
        %v1427 = vadd.f32 %v1395, %v1403
        %v1428 = vadd.f32 %v1396, %v1404
        %v1429 = vadd.f32 %v1397, %v1405
        %v1430 = vadd.f32 %v1398, %v1406
        %v1431 = vadd.f32 %v1399, %v1407
        %v1432 = vadd.f32 %v1408, %v1416
        %v1433 = vadd.f32 %v1409, %v1417
        %v1434 = vadd.f32 %v1410, %v1418
        %v1435 = vadd.f32 %v1411, %v1419
        %v1436 = vadd.f32 %v1412, %v1420
        %v1437 = vadd.f32 %v1413, %v1421
        %v1438 = vadd.f32 %v1414, %v1422
        %v1439 = vadd.f32 %v1415, %v1423
        %v1440 = vadd.f32 %v1424, %v1432
        %v1441 = vadd.f32 %v1425, %v1433
        %v1442 = vadd.f32 %v1426, %v1434
        %v1443 = vadd.f32 %v1427, %v1435
        %v1444 = vadd.f32 %v1428, %v1436
        %v1445 = vadd.f32 %v1429, %v1437
        %v1446 = vadd.f32 %v1430, %v1438
        %v1447 = vadd.f32 %v1431, %v1439
        %v1448 = vld [vmem:[%s4] sm:$0x1]
        %v1450 = vlaneseq
        %v1451 = vshrl.u32 %v1450, 7
        %v1452 = vsub.s32 0, %v1451
        %v1453 = vrot.slane %v1448, %v1452
        %v1455 = vadd.f32 %v1440, %v1453
        %v1456 = vadd.f32 %v1441, %v1453
        %v1457 = vadd.f32 %v1442, %v1453
        %v1458 = vadd.f32 %v1443, %v1453
        %v1459 = vadd.f32 %v1444, %v1453
        %v1460 = vadd.f32 %v1445, %v1453
        %v1461 = vadd.f32 %v1446, %v1453
        %v1462 = vadd.f32 %v1447, %v1453
        %1463 = vst [vmem:[%s269] sm:$0xff] %v1455
        %1464 = vst [vmem:[%s269 + $0x8] sm:$0xff] %v1456
        %1465 = vst [vmem:[%s269 + $0x10] sm:$0xff] %v1457
        %1466 = vst [vmem:[%s269 + $0x18] sm:$0xff] %v1458
        %1467 = vst [vmem:[%s269 + $0x20] sm:$0xff] %v1459
        %1468 = vst [vmem:[%s269 + $0x28] sm:$0xff] %v1460
        %1469 = vst [vmem:[%s269 + $0x30] sm:$0xff] %v1461
        %1470 = vst [vmem:[%s269 + $0x38] sm:$0xff] %v1462
        %s1471 = sand.u32 %s141, 1
        %s1472 = scalar_lea.sflag [#allocation4], %s1471
        %s1473 = sand.u32 %s141, 1
        %s1474 = smul.addr %s1473, 64
        %s1475 = scalar_lea.vmem [#allocation8], %s1474
        // Predicated region
        $region53: #{tpu_custom_call.1} parent=39 // pred_check
          %p1476 = pneg %p151
        $region54: #{tpu_custom_call.1} parent=39 // pred_check_branch
          %1478 = sbr.rel (%p1476) target = $region56
        $region55: #{tpu_custom_call.1} parent=39 // pred_region
          %s1479 = smul.u32 8, %s23
          %s1481 = ssub.s32 1024, 1024
          %1482 = vsyncadd %s1472, %s1481
          %s1483 = smul.addr %s1479, 128
          %s1484 = scalar_lea.hbm %s5, %s1483
          %s1485 = sshll.u32 %s1475, 4
          %s1486 = int_to_ptr.vmem [resolvable:$true] %s1485
          %1491 = dma.vmem_to_hbm [thread:$0]  %s1486, 1024, %s1484, %s1472, 128, 128, 8
        $region56: #{tpu_custom_call.1} parent=39 // pred_fallthru
          _
      $region40: #{tpu_custom_call.1} parent=5 // pred_fallthru
        _
      %p1492 = scmp.le.s32.totalorder 2, %s18
      // Predicated region
      $region57: #{tpu_custom_call.1} parent=5 // pred_check
        %p1493 = pneg %p1492
      $region58: #{tpu_custom_call.1} parent=5 // pred_check_branch
        %1495 = sbr.rel (%p1493) target = $region60
      $region59: #{tpu_custom_call.1} parent=5 // pred_region
        %s1496 = ssub.s32 %s18, 2
        // Predicated region
        $region61: #{tpu_custom_call.1} parent=59 // pred_check
          %p1497 = pneg %p157
        $region62: #{tpu_custom_call.1} parent=59 // pred_check_branch
          %1499 = sbr.rel (%p1497) target = $region64
        $region63: #{tpu_custom_call.1} parent=59 // pred_region
          %s1500 = sand.u32 %s142, 1
          %s1501 = scalar_lea.sflag [#allocation4], %s1500
          %s1502 = sand.u32 %s142, 1
          %s1503 = smul.addr %s1502, 64
          %s1504 = scalar_lea.vmem [#allocation8], %s1503
          %1505 = dma.done %s1501, 1024
        $region64: #{tpu_custom_call.1} parent=59 // pred_fallthru
          _
      $region60: #{tpu_custom_call.1} parent=5 // pred_fallthru
        _
    $region6: #{tpu_custom_call.1} parent=1 // loop_footer
      %s22 = sadd.s32 1, %s18
    $region7: #{tpu_custom_call.1} parent=1 // loop_footer_branch
      %17 = sbr.rel target = $region3
    $region8: #{tpu_custom_call.1} parent=1 // loop_exit
      _
    %1506 = vsyncpa [#allocation3], 1
    %s1507 = scalar_lea.sflag [#allocation3], 1
    %1508 = vsyncpa %s1507, 1
    %1509 = vsyncpa [#allocation6], 1
    %1510 = vsyncpa [#allocation4], 1
    %s1511 = scalar_lea.sflag [#allocation4], 1
    %1512 = vsyncpa %s1511, 1

// kernel: tpu_custom_call.1
$region0: #{tpu_custom_call.1}
  #allocation0 [shape = 'u32[]', space=smem, size = 0x4, offset = 0x4, fixed_abs, tag = 'smem constant byte address 0x4 - core index']
  #allocation1 [shape = 'u32[144,128]{1,0:T(1,128)}', space=vmem, size = 0x12000, scoped, tag = 'internal scratch']
  %s0 = inlined_call_operand.hbm [shape: f32[256,128], index: 0, kind: input, shape index: {}]
  %s1 = inlined_call_operand.hbm [shape: f32[128,1024], index: 1, kind: input, shape index: {}]
  %s2 = inlined_call_operand.hbm [shape: f32[1,1024], index: 2, kind: input, shape index: {}]
  %s3 = inlined_call_operand.vmem [shape: f32[1,1024], index: 3, kind: input, shape index: {}]
  %s4 = inlined_call_operand.vmem [shape: f32[1,128], index: 4, kind: input, shape index: {}]
  %s5 = inlined_call_operand.hbm [shape: f32[256,128], index: 5, kind: output, shape index: {}]
  %s6 = sld [smem:[#allocation0]]
  $region65: #{tpu_custom_call.1} parent=0
    _
  %s8 = ssub.s32 1, %s6
  %s9 = scalar_select 0, %s8, %s6
  $region1: #{tpu_custom_call.1} parent=0
    #allocation2 [shape = 'u8[65536]{0}', space=vmem, size = 0x10000, scoped, tag = 'input window, operand 0']
    #allocation3 [shape = 's32[2]{0}', space=sflag, size = 0x8, scoped, tag = 'scoped memory for tpu_custom_call.1']
    #allocation4 [shape = 's32[2]{0}', space=sflag, size = 0x8, scoped, tag = 'scoped memory for tpu_custom_call.1']
    #allocation5 [shape = 'u8[524288]{0}', space=vmem, size = 0x80000, scoped, tag = 'input window, operand 1, single buffered']
    #allocation6 [shape = 's32[1]{0}', space=sflag, size = 0x4, scoped, tag = 'scoped memory for tpu_custom_call.1']
    #allocation7 [shape = 'u8[4096]{0}', space=vmem, size = 0x1000, scoped, tag = 'input window, operand 2, single buffered']
    #allocation8 [shape = 'u8[65536]{0}', space=vmem, size = 0x10000, scoped, tag = 'output window, operand 0']
    %10 = vsyncpa [#allocation3], 0
    %s11 = scalar_lea.sflag [#allocation3], 1
    %12 = vsyncpa %s11, 0
    %13 = vsyncpa [#allocation6], 0
    %14 = vsyncpa [#allocation4], 0
    %s15 = scalar_lea.sflag [#allocation4], 1
    %16 = vsyncpa %s15, 0
    loop: start=0, step=1, limit=6
    $region2: #{tpu_custom_call.1} parent=1 // loop_pre_header
      _
    $region3: #{tpu_custom_call.1} parent=1 // loop_header
      %s18 = sphi 0, %s22
      %p19 = scmp.ge.s32.totalorder %s18, 6
      %s28 = sphi 0, %s30
      %s31 = sphi 0, %s28
      %s32 = sphi 0, %s31
      %s48 = sphi 0, %s32
      %s52 = sphi 0, %s52
      %s54 = sphi 0, %s52
      %s55 = sphi 0, %s54
      %s69 = sphi 0, %s55
      %s73 = sphi 0, %s73
      %s75 = sphi 0, %s73
      %s76 = sphi 0, %s75
      %s90 = sphi 0, %s76
      %s94 = sphi 0, %s94
      %s96 = sphi 0, %s94
      %s97 = sphi 0, %s96
      %s111 = sphi 0, %s97
      %s115 = sphi 0, %s115
      %s117 = sphi 0, %s115
      %s118 = sphi 0, %s117
      %s132 = sphi 0, %s118
      %s138 = sphi 0, %s140
      %s141 = sphi 0, %s138
      %s142 = sphi 0, %s141
      %s158 = sphi 0, %s142
    $region4: #{tpu_custom_call.1} parent=1 // loop_header_branch
      %21 = sbr.rel (%p19) target = $region8
    $region5: #{tpu_custom_call.1} parent=1 // loop_body
      %s23 = ssub.s32 %s18, 1
      %s24 = ssub.s32 %s18, 2
      %s25 = sadd.s32 %s18, 1
      %s26 = ssub.s32 %s18, %s25
      %p27 = scmp.eq.s32.totalorder %s26, 0
      %s29 = sadd.s32 %s28, 1
      %s30 = scalar_select %p27, %s28, %s29
      %p33 = pneg %p27
      %p34 = scmp.eq.s32.totalorder %s18, 3
      %p35 = por %p33, %p34
      %p36 = scmp.ne.s32.totalorder %s28, %s31
      %p37 = scmp.eq.s32.totalorder %s18, 0
      %p38 = por %p36, %p37
      %p39 = scmp.ne.s32.totalorder %s28, %s31
      %p40 = scmp.eq.s32.totalorder %s23, 3
      %p41 = por %p39, %p40
      %p42 = scmp.ne.s32.totalorder %s31, %s32
      %p43 = scmp.eq.s32.totalorder %s23, 0
      %p44 = por %p42, %p43
      %p45 = scmp.ne.s32.totalorder %s31, %s32
      %p46 = scmp.eq.s32.totalorder %s24, 3
      %p47 = por %p45, %p46
      %p49 = scmp.ne.s32.totalorder %s32, %s48
      %p50 = scmp.eq.s32.totalorder %s24, 0
      %p51 = por %p49, %p50
      %s53 = sadd.s32 %s52, 1
      %p56 = scmp.eq.s32.totalorder %s18, 3
      %p57 = scmp.ne.s32.totalorder %s52, %s54
      %p58 = scmp.eq.s32.totalorder %s18, 0
      %p59 = por %p57, %p58
      %p60 = scmp.ne.s32.totalorder %s52, %s54
      %p61 = scmp.eq.s32.totalorder %s23, 3
      %p62 = por %p60, %p61
      %p63 = scmp.ne.s32.totalorder %s54, %s55
      %p64 = scmp.eq.s32.totalorder %s23, 0
      %p65 = por %p63, %p64
      %p66 = scmp.ne.s32.totalorder %s54, %s55
      %p67 = scmp.eq.s32.totalorder %s24, 3
      %p68 = por %p66, %p67
      %p70 = scmp.ne.s32.totalorder %s55, %s69
      %p71 = scmp.eq.s32.totalorder %s24, 0
      %p72 = por %p70, %p71
      %s74 = sadd.s32 %s73, 1
      %p77 = scmp.eq.s32.totalorder %s18, 3
      %p78 = scmp.ne.s32.totalorder %s73, %s75
      %p79 = scmp.eq.s32.totalorder %s18, 0
      %p80 = por %p78, %p79
      %p81 = scmp.ne.s32.totalorder %s73, %s75
      %p82 = scmp.eq.s32.totalorder %s23, 3
      %p83 = por %p81, %p82
      %p84 = scmp.ne.s32.totalorder %s75, %s76
      %p85 = scmp.eq.s32.totalorder %s23, 0
      %p86 = por %p84, %p85
      %p87 = scmp.ne.s32.totalorder %s75, %s76
      %p88 = scmp.eq.s32.totalorder %s24, 3
      %p89 = por %p87, %p88
      %p91 = scmp.ne.s32.totalorder %s76, %s90
      %p92 = scmp.eq.s32.totalorder %s24, 0
      %p93 = por %p91, %p92
      %s95 = sadd.s32 %s94, 1
      %p98 = scmp.eq.s32.totalorder %s18, 3
      %p99 = scmp.ne.s32.totalorder %s94, %s96
      %p100 = scmp.eq.s32.totalorder %s18, 0
      %p101 = por %p99, %p100
      %p102 = scmp.ne.s32.totalorder %s94, %s96
      %p103 = scmp.eq.s32.totalorder %s23, 3
      %p104 = por %p102, %p103
      %p105 = scmp.ne.s32.totalorder %s96, %s97
      %p106 = scmp.eq.s32.totalorder %s23, 0
      %p107 = por %p105, %p106
      %p108 = scmp.ne.s32.totalorder %s96, %s97
      %p109 = scmp.eq.s32.totalorder %s24, 3
      %p110 = por %p108, %p109
      %p112 = scmp.ne.s32.totalorder %s97, %s111
      %p113 = scmp.eq.s32.totalorder %s24, 0
      %p114 = por %p112, %p113
      %s116 = sadd.s32 %s115, 1
      %p119 = scmp.eq.s32.totalorder %s18, 3
      %p120 = scmp.ne.s32.totalorder %s115, %s117
      %p121 = scmp.eq.s32.totalorder %s18, 0
      %p122 = por %p120, %p121
      %p123 = scmp.ne.s32.totalorder %s115, %s117
      %p124 = scmp.eq.s32.totalorder %s23, 3
      %p125 = por %p123, %p124
      %p126 = scmp.ne.s32.totalorder %s117, %s118
      %p127 = scmp.eq.s32.totalorder %s23, 0
      %p128 = por %p126, %p127
      %p129 = scmp.ne.s32.totalorder %s117, %s118
      %p130 = scmp.eq.s32.totalorder %s24, 3
      %p131 = por %p129, %p130
      %p133 = scmp.ne.s32.totalorder %s118, %s132
      %p134 = scmp.eq.s32.totalorder %s24, 0
      %p135 = por %p133, %p134
      %s136 = ssub.s32 %s18, %s25
      %p137 = scmp.eq.s32.totalorder %s136, 0
      %s139 = sadd.s32 %s138, 1
      %s140 = scalar_select %p137, %s138, %s139
      %p143 = pneg %p137
      %p144 = scmp.eq.s32.totalorder %s18, 3
      %p145 = por %p143, %p144
      %p146 = scmp.ne.s32.totalorder %s138, %s141
      %p147 = scmp.eq.s32.totalorder %s18, 0
      %p148 = por %p146, %p147
      %p149 = scmp.ne.s32.totalorder %s138, %s141
      %p150 = scmp.eq.s32.totalorder %s23, 3
      %p151 = por %p149, %p150
      %p152 = scmp.ne.s32.totalorder %s141, %s142
      %p153 = scmp.eq.s32.totalorder %s23, 0
      %p154 = por %p152, %p153
      %p155 = scmp.ne.s32.totalorder %s141, %s142
      %p156 = scmp.eq.s32.totalorder %s24, 3
      %p157 = por %p155, %p156
      %p159 = scmp.ne.s32.totalorder %s142, %s158
      %p160 = scmp.eq.s32.totalorder %s24, 0
      %p161 = por %p159, %p160
      %p162 = scmp.le.s32.totalorder 1, %s18
      %p163 = scmp.lt.s32.totalorder %s18, 5
      %p164 = pnand %p162, %p163
      %p165 = pneg %p164
      // Predicated region
      $region9: #{tpu_custom_call.1} parent=5 // pred_check
        _
      $region10: #{tpu_custom_call.1} parent=5 // pred_check_branch
        %167 = sbr.rel (%p164) target = $region12
      $region11: #{tpu_custom_call.1} parent=5 // pred_region
        %s168 = ssub.s32 %s18, 1
        // Predicated region
        $region13: #{tpu_custom_call.1} parent=11 // pred_check
          %p169 = pneg %p65
        $region14: #{tpu_custom_call.1} parent=11 // pred_check_branch
          %171 = sbr.rel (%p169) target = $region16
        $region15: #{tpu_custom_call.1} parent=11 // pred_region
          %s173 = ssub.s32 16384, 16384
          %174 = vsyncadd [#allocation6], %s173
          %s175 = sshll.u32 [#allocation5], 4
          %s176 = int_to_ptr.vmem [resolvable:$true] %s175
          %181 = dma.hbm_to_vmem [thread:$0]  %s1, 16384, %s176, [#allocation6], 1024, 1024, 64
        $region16: #{tpu_custom_call.1} parent=11 // pred_fallthru
          _
        // Predicated region
        $region17: #{tpu_custom_call.1} parent=11 // pred_check
          %p182 = pneg %p86
        $region18: #{tpu_custom_call.1} parent=11 // pred_check_branch
          %184 = sbr.rel (%p182) target = $region20
        $region19: #{tpu_custom_call.1} parent=11 // pred_region
          %s186 = ssub.s32 128, 128
          %187 = vsyncadd [#allocation6], %s186
          %s189 = sshll.u32 [#allocation7], 4
          %s190 = int_to_ptr.vmem [resolvable:$true] %s189
          %192 = dma.hbm_to_vmem [thread:$0]  %s2, 128, %s190, [#allocation6]
        $region20: #{tpu_custom_call.1} parent=11 // pred_fallthru
          _
        // Predicated region
        $region21: #{tpu_custom_call.1} parent=11 // pred_check
          %p193 = pneg %p107
        $region22: #{tpu_custom_call.1} parent=11 // pred_check_branch
          %195 = sbr.rel (%p193) target = $region24
        $region23: #{tpu_custom_call.1} parent=11 // pred_region
          _
        $region24: #{tpu_custom_call.1} parent=11 // pred_fallthru
          _
        // Predicated region
        $region25: #{tpu_custom_call.1} parent=11 // pred_check
          %p196 = pneg %p128
        $region26: #{tpu_custom_call.1} parent=11 // pred_check_branch
          %198 = sbr.rel (%p196) target = $region28
        $region27: #{tpu_custom_call.1} parent=11 // pred_region
          _
        $region28: #{tpu_custom_call.1} parent=11 // pred_fallthru
          _
      $region12: #{tpu_custom_call.1} parent=5 // pred_fallthru
        _
      %p199 = scmp.lt.s32.totalorder %s18, 4
      // Predicated region
      $region29: #{tpu_custom_call.1} parent=5 // pred_check
        %p200 = pneg %p199
      $region30: #{tpu_custom_call.1} parent=5 // pred_check_branch
        %202 = sbr.rel (%p200) target = $region32
      $region31: #{tpu_custom_call.1} parent=5 // pred_region
        // Predicated region
        $region33: #{tpu_custom_call.1} parent=31 // pred_check
          %p203 = pneg %p38
        $region34: #{tpu_custom_call.1} parent=31 // pred_check_branch
          %205 = sbr.rel (%p203) target = $region36
        $region35: #{tpu_custom_call.1} parent=31 // pred_region
          %s206 = sand.u32 %s28, 1
          %s207 = scalar_lea.sflag [#allocation3], %s206
          %s208 = sand.u32 %s28, 1
          %s209 = smul.addr %s208, 64
          %s210 = scalar_lea.vmem [#allocation2], %s209
          %s211 = smul.u32 8, %s18
          %s213 = ssub.s32 1024, 1024
          %214 = vsyncadd %s207, %s213
          %s215 = smul.addr %s211, 128
          %s216 = scalar_lea.hbm %s0, %s215
          %s217 = sshll.u32 %s210, 4
          %s218 = int_to_ptr.vmem [resolvable:$true] %s217
          %223 = dma.hbm_to_vmem [thread:$0]  %s216, 1024, %s218, %s207, 128, 128, 8
        $region36: #{tpu_custom_call.1} parent=31 // pred_fallthru
          _
      $region32: #{tpu_custom_call.1} parent=5 // pred_fallthru
        _
      %p224 = scmp.le.s32.totalorder 1, %s18
      %p225 = scmp.lt.s32.totalorder %s18, 5
      %p226 = pnand %p224, %p225
      %p227 = pneg %p226
      // Predicated region
      $region37: #{tpu_custom_call.1} parent=5 // pred_check
        _
      $region38: #{tpu_custom_call.1} parent=5 // pred_check_branch
        %229 = sbr.rel (%p226) target = $region40
      $region39: #{tpu_custom_call.1} parent=5 // pred_region
        %s230 = ssub.s32 %s18, 1
        %s231 = sand.u32 %s31, 1
        %s232 = scalar_lea.sflag [#allocation3], %s231
        %s233 = sand.u32 %s31, 1
        %s234 = smul.addr %s233, 64
        %s235 = scalar_lea.vmem [#allocation2], %s234
        // Predicated region
        $region41: #{tpu_custom_call.1} parent=39 // pred_check
          %p236 = pneg %p44
        $region42: #{tpu_custom_call.1} parent=39 // pred_check_branch
          %238 = sbr.rel (%p236) target = $region44
        $region43: #{tpu_custom_call.1} parent=39 // pred_region
          %239 = dma.done %s232, 1024
        $region44: #{tpu_custom_call.1} parent=39 // pred_fallthru
          _
        // Predicated region
        $region45: #{tpu_custom_call.1} parent=39 // pred_check
          %p240 = pneg %p65
        $region46: #{tpu_custom_call.1} parent=39 // pred_check_branch
          %242 = sbr.rel (%p240) target = $region48
        $region47: #{tpu_custom_call.1} parent=39 // pred_region
          %243 = dma.done [#allocation6], 16384
        $region48: #{tpu_custom_call.1} parent=39 // pred_fallthru
          _
        // Predicated region
        $region49: #{tpu_custom_call.1} parent=39 // pred_check
          %p244 = pneg %p86
        $region50: #{tpu_custom_call.1} parent=39 // pred_check_branch
          %246 = sbr.rel (%p244) target = $region52
        $region51: #{tpu_custom_call.1} parent=39 // pred_region
          %247 = dma.done [#allocation6], 128
        $region52: #{tpu_custom_call.1} parent=39 // pred_fallthru
          _
        %s248 = sand.u32 %s31, 1
        %s249 = scalar_lea.sflag [#allocation3], %s248
        %s250 = sand.u32 %s31, 1
        %s251 = smul.addr %s250, 64
        %s252 = scalar_lea.vmem [#allocation2], %s251
        %p253 = pneg %p44
        %p254 = pneg %p41
        %p255 = pneg %p65
        %p256 = pneg %p62
        %p257 = pneg %p86
        %p258 = pneg %p83
        %p259 = pneg %p107
        %p260 = pneg %p104
        %p261 = pneg %p128
        %p262 = pneg %p125
        %p263 = pneg %p154
        %p264 = pneg %p151
        %s265 = sand.u32 %s141, 1
        %s266 = scalar_lea.sflag [#allocation4], %s265
        %s267 = sand.u32 %s141, 1
        %s268 = smul.addr %s267, 64
        %s269 = scalar_lea.vmem [#allocation8], %s268
        %s270 = smul.u32 8, %s23
        %s271 = smul.u32 8, %s23
        %v272 = vld [vmem:[%s235] sm:$0xff]
        %v273 = vld [vmem:[%s235 + $0x8] sm:$0xff]
        %v274 = vld [vmem:[%s235 + $0x10] sm:$0xff]
        %v275 = vld [vmem:[%s235 + $0x18] sm:$0xff]
        %v276 = vld [vmem:[%s235 + $0x20] sm:$0xff]
        %v277 = vld [vmem:[%s235 + $0x28] sm:$0xff]
        %v278 = vld [vmem:[%s235 + $0x30] sm:$0xff]
        %v279 = vld [vmem:[%s235 + $0x38] sm:$0xff]
        %v280 = vld [vmem:[#allocation5] sm:$0xff]
        %v281 = vld [vmem:[#allocation5 + $0x8] sm:$0xff]
        %v282 = vld [vmem:[#allocation5 + $0x10] sm:$0xff]
        %v283 = vld [vmem:[#allocation5 + $0x18] sm:$0xff]
        %v284 = vld [vmem:[#allocation5 + $0x20] sm:$0xff]
        %v285 = vld [vmem:[#allocation5 + $0x28] sm:$0xff]
        %v286 = vld [vmem:[#allocation5 + $0x30] sm:$0xff]
        %v287 = vld [vmem:[#allocation5 + $0x38] sm:$0xff]
        %v288 = vld [vmem:[#allocation5 + $0x40] sm:$0xff]
        %v289 = vld [vmem:[#allocation5 + $0x48] sm:$0xff]
        %v290 = vld [vmem:[#allocation5 + $0x50] sm:$0xff]
        %v291 = vld [vmem:[#allocation5 + $0x58] sm:$0xff]
        %v292 = vld [vmem:[#allocation5 + $0x60] sm:$0xff]
        %v293 = vld [vmem:[#allocation5 + $0x68] sm:$0xff]
        %v294 = vld [vmem:[#allocation5 + $0x70] sm:$0xff]
        %v295 = vld [vmem:[#allocation5 + $0x78] sm:$0xff]
        %v296 = vld [vmem:[#allocation5 + $0x80] sm:$0xff]
        %v297 = vld [vmem:[#allocation5 + $0x88] sm:$0xff]
        %v298 = vld [vmem:[#allocation5 + $0x90] sm:$0xff]
        %v299 = vld [vmem:[#allocation5 + $0x98] sm:$0xff]
        %v300 = vld [vmem:[#allocation5 + $0xa0] sm:$0xff]
        %v301 = vld [vmem:[#allocation5 + $0xa8] sm:$0xff]
        %v302 = vld [vmem:[#allocation5 + $0xb0] sm:$0xff]
        %v303 = vld [vmem:[#allocation5 + $0xb8] sm:$0xff]
        %v304 = vld [vmem:[#allocation5 + $0xc0] sm:$0xff]
        %v305 = vld [vmem:[#allocation5 + $0xc8] sm:$0xff]
        %v306 = vld [vmem:[#allocation5 + $0xd0] sm:$0xff]
        %v307 = vld [vmem:[#allocation5 + $0xd8] sm:$0xff]
        %v308 = vld [vmem:[#allocation5 + $0xe0] sm:$0xff]
        %v309 = vld [vmem:[#allocation5 + $0xe8] sm:$0xff]
        %v310 = vld [vmem:[#allocation5 + $0xf0] sm:$0xff]
        %v311 = vld [vmem:[#allocation5 + $0xf8] sm:$0xff]
        %v312 = vld [vmem:[#allocation5 + $0x100] sm:$0xff]
        %v313 = vld [vmem:[#allocation5 + $0x108] sm:$0xff]
        %v314 = vld [vmem:[#allocation5 + $0x110] sm:$0xff]
        %v315 = vld [vmem:[#allocation5 + $0x118] sm:$0xff]
        %v316 = vld [vmem:[#allocation5 + $0x120] sm:$0xff]
        %v317 = vld [vmem:[#allocation5 + $0x128] sm:$0xff]
        %v318 = vld [vmem:[#allocation5 + $0x130] sm:$0xff]
        %v319 = vld [vmem:[#allocation5 + $0x138] sm:$0xff]
        %v320 = vld [vmem:[#allocation5 + $0x140] sm:$0xff]
        %v321 = vld [vmem:[#allocation5 + $0x148] sm:$0xff]
        %v322 = vld [vmem:[#allocation5 + $0x150] sm:$0xff]
        %v323 = vld [vmem:[#allocation5 + $0x158] sm:$0xff]
        %v324 = vld [vmem:[#allocation5 + $0x160] sm:$0xff]
        %v325 = vld [vmem:[#allocation5 + $0x168] sm:$0xff]
        %v326 = vld [vmem:[#allocation5 + $0x170] sm:$0xff]
        %v327 = vld [vmem:[#allocation5 + $0x178] sm:$0xff]
        %v328 = vld [vmem:[#allocation5 + $0x180] sm:$0xff]
        %v329 = vld [vmem:[#allocation5 + $0x188] sm:$0xff]
        %v330 = vld [vmem:[#allocation5 + $0x190] sm:$0xff]
        %v331 = vld [vmem:[#allocation5 + $0x198] sm:$0xff]
        %v332 = vld [vmem:[#allocation5 + $0x1a0] sm:$0xff]
        %v333 = vld [vmem:[#allocation5 + $0x1a8] sm:$0xff]
        %v334 = vld [vmem:[#allocation5 + $0x1b0] sm:$0xff]
        %v335 = vld [vmem:[#allocation5 + $0x1b8] sm:$0xff]
        %v336 = vld [vmem:[#allocation5 + $0x1c0] sm:$0xff]
        %v337 = vld [vmem:[#allocation5 + $0x1c8] sm:$0xff]
        %v338 = vld [vmem:[#allocation5 + $0x1d0] sm:$0xff]
        %v339 = vld [vmem:[#allocation5 + $0x1d8] sm:$0xff]
        %v340 = vld [vmem:[#allocation5 + $0x1e0] sm:$0xff]
        %v341 = vld [vmem:[#allocation5 + $0x1e8] sm:$0xff]
        %v342 = vld [vmem:[#allocation5 + $0x1f0] sm:$0xff]
        %v343 = vld [vmem:[#allocation5 + $0x1f8] sm:$0xff]
        %v344 = vld [vmem:[#allocation5 + $0x200] sm:$0xff]
        %v345 = vld [vmem:[#allocation5 + $0x208] sm:$0xff]
        %v346 = vld [vmem:[#allocation5 + $0x210] sm:$0xff]
        %v347 = vld [vmem:[#allocation5 + $0x218] sm:$0xff]
        %v348 = vld [vmem:[#allocation5 + $0x220] sm:$0xff]
        %v349 = vld [vmem:[#allocation5 + $0x228] sm:$0xff]
        %v350 = vld [vmem:[#allocation5 + $0x230] sm:$0xff]
        %v351 = vld [vmem:[#allocation5 + $0x238] sm:$0xff]
        %v352 = vld [vmem:[#allocation5 + $0x240] sm:$0xff]
        %v353 = vld [vmem:[#allocation5 + $0x248] sm:$0xff]
        %v354 = vld [vmem:[#allocation5 + $0x250] sm:$0xff]
        %v355 = vld [vmem:[#allocation5 + $0x258] sm:$0xff]
        %v356 = vld [vmem:[#allocation5 + $0x260] sm:$0xff]
        %v357 = vld [vmem:[#allocation5 + $0x268] sm:$0xff]
        %v358 = vld [vmem:[#allocation5 + $0x270] sm:$0xff]
        %v359 = vld [vmem:[#allocation5 + $0x278] sm:$0xff]
        %v360 = vld [vmem:[#allocation5 + $0x280] sm:$0xff]
        %v361 = vld [vmem:[#allocation5 + $0x288] sm:$0xff]
        %v362 = vld [vmem:[#allocation5 + $0x290] sm:$0xff]
        %v363 = vld [vmem:[#allocation5 + $0x298] sm:$0xff]
        %v364 = vld [vmem:[#allocation5 + $0x2a0] sm:$0xff]
        %v365 = vld [vmem:[#allocation5 + $0x2a8] sm:$0xff]
        %v366 = vld [vmem:[#allocation5 + $0x2b0] sm:$0xff]
        %v367 = vld [vmem:[#allocation5 + $0x2b8] sm:$0xff]
        %v368 = vld [vmem:[#allocation5 + $0x2c0] sm:$0xff]
        %v369 = vld [vmem:[#allocation5 + $0x2c8] sm:$0xff]
        %v370 = vld [vmem:[#allocation5 + $0x2d0] sm:$0xff]
        %v371 = vld [vmem:[#allocation5 + $0x2d8] sm:$0xff]
        %v372 = vld [vmem:[#allocation5 + $0x2e0] sm:$0xff]
        %v373 = vld [vmem:[#allocation5 + $0x2e8] sm:$0xff]
        %v374 = vld [vmem:[#allocation5 + $0x2f0] sm:$0xff]
        %v375 = vld [vmem:[#allocation5 + $0x2f8] sm:$0xff]
        %v376 = vld [vmem:[#allocation5 + $0x300] sm:$0xff]
        %v377 = vld [vmem:[#allocation5 + $0x308] sm:$0xff]
        %v378 = vld [vmem:[#allocation5 + $0x310] sm:$0xff]
        %v379 = vld [vmem:[#allocation5 + $0x318] sm:$0xff]
        %v380 = vld [vmem:[#allocation5 + $0x320] sm:$0xff]
        %v381 = vld [vmem:[#allocation5 + $0x328] sm:$0xff]
        %v382 = vld [vmem:[#allocation5 + $0x330] sm:$0xff]
        %v383 = vld [vmem:[#allocation5 + $0x338] sm:$0xff]
        %v384 = vld [vmem:[#allocation5 + $0x340] sm:$0xff]
        %v385 = vld [vmem:[#allocation5 + $0x348] sm:$0xff]
        %v386 = vld [vmem:[#allocation5 + $0x350] sm:$0xff]
        %v387 = vld [vmem:[#allocation5 + $0x358] sm:$0xff]
        %v388 = vld [vmem:[#allocation5 + $0x360] sm:$0xff]
        %v389 = vld [vmem:[#allocation5 + $0x368] sm:$0xff]
        %v390 = vld [vmem:[#allocation5 + $0x370] sm:$0xff]
        %v391 = vld [vmem:[#allocation5 + $0x378] sm:$0xff]
        %v392 = vld [vmem:[#allocation5 + $0x380] sm:$0xff]
        %v393 = vld [vmem:[#allocation5 + $0x388] sm:$0xff]
        %v394 = vld [vmem:[#allocation5 + $0x390] sm:$0xff]
        %v395 = vld [vmem:[#allocation5 + $0x398] sm:$0xff]
        %v396 = vld [vmem:[#allocation5 + $0x3a0] sm:$0xff]
        %v397 = vld [vmem:[#allocation5 + $0x3a8] sm:$0xff]
        %v398 = vld [vmem:[#allocation5 + $0x3b0] sm:$0xff]
        %v399 = vld [vmem:[#allocation5 + $0x3b8] sm:$0xff]
        %v400 = vld [vmem:[#allocation5 + $0x3c0] sm:$0xff]
        %v401 = vld [vmem:[#allocation5 + $0x3c8] sm:$0xff]
        %v402 = vld [vmem:[#allocation5 + $0x3d0] sm:$0xff]
        %v403 = vld [vmem:[#allocation5 + $0x3d8] sm:$0xff]
        %v404 = vld [vmem:[#allocation5 + $0x3e0] sm:$0xff]
        %v405 = vld [vmem:[#allocation5 + $0x3e8] sm:$0xff]
        %v406 = vld [vmem:[#allocation5 + $0x3f0] sm:$0xff]
        %v407 = vld [vmem:[#allocation5 + $0x3f8] sm:$0xff]
        %v408 = vld [vmem:[#allocation7] sm:$0xff]
        %v410 = vlaneseq
        %v411 = vshrl.u32 %v410, 7
        %v412 = vsub.s32 0, %v411
        %v413 = vrot.slane %v408, %v412
        %v414 = vlaneseq
        %v415 = vshrl.u32 %v414, 7
        %v416 = vsub.s32 1, %v415
        %v417 = vrot.slane %v408, %v416
        %v418 = vlaneseq
        %v419 = vshrl.u32 %v418, 7
        %v420 = vsub.s32 2, %v419
        %v421 = vrot.slane %v408, %v420
        %v422 = vlaneseq
        %v423 = vshrl.u32 %v422, 7
        %v424 = vsub.s32 3, %v423
        %v425 = vrot.slane %v408, %v424
        %v426 = vlaneseq
        %v427 = vshrl.u32 %v426, 7
        %v428 = vsub.s32 4, %v427
        %v429 = vrot.slane %v408, %v428
        %v430 = vlaneseq
        %v431 = vshrl.u32 %v430, 7
        %v432 = vsub.s32 5, %v431
        %v433 = vrot.slane %v408, %v432
        %v434 = vlaneseq
        %v435 = vshrl.u32 %v434, 7
        %v436 = vsub.s32 6, %v435
        %v437 = vrot.slane %v408, %v436
        %v438 = vlaneseq
        %v439 = vshrl.u32 %v438, 7
        %v440 = vsub.s32 7, %v439
        %v441 = vrot.slane %v408, %v440
        %450 = vmatprep.subr.mxu0 %v281
        %451 = vmatpush1.msra.mxu0 %v280
        %452 = vmatprep.subr.mxu0 %v289
        %453 = vmatpush1.msra.mxu0 %v288
        %454 = vmatprep.subr.mxu0 %v297
        %455 = vmatpush1.msra.mxu0 %v296
        %456 = vmatprep.subr.mxu0 %v305
        %457 = vmatpush1.msra.mxu0 %v304
        %458 = vmatprep.subr.mxu0 %v313
        %459 = vmatpush1.msra.mxu0 %v312
        %460 = vmatprep.subr.mxu0 %v321
        %461 = vmatpush1.msra.mxu0 %v320
        %462 = vmatprep.subr.mxu0 %v329
        %463 = vmatpush1.msra.mxu0 %v328
        %464 = vmatprep.subr.mxu0 %v337
        %465 = vmatpush1.msra.mxu0 %v336
        %466 = vmatprep.subr.mxu0 %v345
        %467 = vmatpush1.msra.mxu0 %v344
        %468 = vmatprep.subr.mxu0 %v353
        %469 = vmatpush1.msra.mxu0 %v352
        %470 = vmatprep.subr.mxu0 %v361
        %471 = vmatpush1.msra.mxu0 %v360
        %472 = vmatprep.subr.mxu0 %v369
        %473 = vmatpush1.msra.mxu0 %v368
        %474 = vmatprep.subr.mxu0 %v377
        %475 = vmatpush1.msra.mxu0 %v376
        %476 = vmatprep.subr.mxu0 %v385
        %477 = vmatpush1.msra.mxu0 %v384
        %478 = vmatprep.subr.mxu0 %v393
        %479 = vmatpush1.msra.mxu0 %v392
        %480 = vmatprep.subr.mxu0 %v401
        %481 = vmatpush1.msra.mxu0 %v400
        %482 = vmatprep.subr.mxu0 0.0
        %483 = vmatpush1.msra.mxu0 0.0
        %484 = vmatprep.subr.mxu0 0.0
        %485 = vmatpush1.msra.mxu0 0.0
        %486 = vmatprep.subr.mxu0 0.0
        %487 = vmatpush1.msra.mxu0 0.0
        %488 = vmatprep.subr.mxu0 0.0
        %489 = vmatpush1.msra.mxu0 0.0
        %490 = vmatprep.subr.mxu0 0.0
        %491 = vmatpush1.msra.mxu0 0.0
        %492 = vmatprep.subr.mxu0 0.0
        %493 = vmatpush1.msra.mxu0 0.0
        %494 = vmatprep.subr.mxu0 0.0
        %495 = vmatpush1.msra.mxu0 0.0
        %496 = vmatprep.subr.mxu0 0.0
        %497 = vmatpush1.msra.mxu0 0.0
        %498 = vmatprep.subr.mxu0 0.0
        %499 = vmatpush1.msra.mxu0 0.0
        %500 = vmatprep.subr.mxu0 0.0
        %501 = vmatpush1.msra.mxu0 0.0
        %502 = vmatprep.subr.mxu0 0.0
        %503 = vmatpush1.msra.mxu0 0.0
        %504 = vmatprep.subr.mxu0 0.0
        %505 = vmatpush1.msra.mxu0 0.0
        %506 = vmatprep.subr.mxu0 0.0
        %507 = vmatpush1.msra.mxu0 0.0
        %508 = vmatprep.subr.mxu0 0.0
        %509 = vmatpush1.msra.mxu0 0.0
        %510 = vmatprep.subr.mxu0 0.0
        %511 = vmatpush1.msra.mxu0 0.0
        %512 = vmatprep.subr.mxu0 0.0
        %513 = vmatpush1.msra.mxu0 0.0
        %514 = vmatprep.mubr.f32.mxu0 0.0
        %515 = vmatmul.mubr.f32.gmra.mrb[0].mxu0 %v272
        %v516 = vpop.f32.mrb[0].mxu0
        %v517 = vadd.f32 %v413, %v516
        %v518 = vpop.f32.mrb[0].mxu0
        %v519 = vadd.f32 %v417, %v518
        %520 = vmatprep.mubr.f32.mxu0 0.0
        %521 = vmatmul.mubr.f32.gmra.mrb[0].mxu0 %v273
        %v522 = vpop.f32.mrb[0].mxu0
        %v523 = vadd.f32 %v413, %v522
        %v524 = vpop.f32.mrb[0].mxu0
        %v525 = vadd.f32 %v417, %v524
        %526 = vmatprep.mubr.f32.mxu0 0.0
        %527 = vmatmul.mubr.f32.gmra.mrb[0].mxu0 %v274
        %v528 = vpop.f32.mrb[0].mxu0
        %v529 = vadd.f32 %v413, %v528
        %v530 = vpop.f32.mrb[0].mxu0
        %v531 = vadd.f32 %v417, %v530
        %532 = vmatprep.mubr.f32.mxu0 0.0
        %533 = vmatmul.mubr.f32.gmra.mrb[0].mxu0 %v275
        %v534 = vpop.f32.mrb[0].mxu0
        %v535 = vadd.f32 %v413, %v534
        %v536 = vpop.f32.mrb[0].mxu0
        %v537 = vadd.f32 %v417, %v536
        %538 = vmatprep.mubr.f32.mxu0 0.0
        %539 = vmatmul.mubr.f32.gmra.mrb[0].mxu0 %v276
        %v540 = vpop.f32.mrb[0].mxu0
        %v541 = vadd.f32 %v413, %v540
        %v542 = vpop.f32.mrb[0].mxu0
        %v543 = vadd.f32 %v417, %v542
        %544 = vmatprep.mubr.f32.mxu0 0.0
        %545 = vmatmul.mubr.f32.gmra.mrb[0].mxu0 %v277
        %v546 = vpop.f32.mrb[0].mxu0
        %v547 = vadd.f32 %v413, %v546
        %v548 = vpop.f32.mrb[0].mxu0
        %v549 = vadd.f32 %v417, %v548
        %550 = vmatprep.mubr.f32.mxu0 0.0
        %551 = vmatmul.mubr.f32.gmra.mrb[0].mxu0 %v278
        %v552 = vpop.f32.mrb[0].mxu0
        %v553 = vadd.f32 %v413, %v552
        %v554 = vpop.f32.mrb[0].mxu0
        %v555 = vadd.f32 %v417, %v554
        %556 = vmatprep.mubr.f32.mxu0 0.0
        %557 = vmatmul.mubr.f32.gmra.mrb[0].mxu0 %v279
        %v558 = vpop.f32.mrb[0].mxu0
        %v559 = vadd.f32 %v413, %v558
        %v560 = vpop.f32.mrb[0].mxu0
        %v561 = vadd.f32 %v417, %v560
        %562 = vdwg.mxu0
        %563 = vmatprep.subr.mxu0 %v283
        %564 = vmatpush1.msra.mxu0 %v282
        %565 = vmatprep.subr.mxu0 %v291
        %566 = vmatpush1.msra.mxu0 %v290
        %567 = vmatprep.subr.mxu0 %v299
        %568 = vmatpush1.msra.mxu0 %v298
        %569 = vmatprep.subr.mxu0 %v307
        %570 = vmatpush1.msra.mxu0 %v306
        %571 = vmatprep.subr.mxu0 %v315
        %572 = vmatpush1.msra.mxu0 %v314
        %573 = vmatprep.subr.mxu0 %v323
        %574 = vmatpush1.msra.mxu0 %v322
        %575 = vmatprep.subr.mxu0 %v331
        %576 = vmatpush1.msra.mxu0 %v330
        %577 = vmatprep.subr.mxu0 %v339
        %578 = vmatpush1.msra.mxu0 %v338
        %579 = vmatprep.subr.mxu0 %v347
        %580 = vmatpush1.msra.mxu0 %v346
        %581 = vmatprep.subr.mxu0 %v355
        %582 = vmatpush1.msra.mxu0 %v354
        %583 = vmatprep.subr.mxu0 %v363
        %584 = vmatpush1.msra.mxu0 %v362
        %585 = vmatprep.subr.mxu0 %v371
        %586 = vmatpush1.msra.mxu0 %v370
        %587 = vmatprep.subr.mxu0 %v379
        %588 = vmatpush1.msra.mxu0 %v378
        %589 = vmatprep.subr.mxu0 %v387
        %590 = vmatpush1.msra.mxu0 %v386
        %591 = vmatprep.subr.mxu0 %v395
        %592 = vmatpush1.msra.mxu0 %v394
        %593 = vmatprep.subr.mxu0 %v403
        %594 = vmatpush1.msra.mxu0 %v402
        %595 = vmatprep.subr.mxu0 0.0
        %596 = vmatpush1.msra.mxu0 0.0
        %597 = vmatprep.subr.mxu0 0.0
        %598 = vmatpush1.msra.mxu0 0.0
        %599 = vmatprep.subr.mxu0 0.0
        %600 = vmatpush1.msra.mxu0 0.0
        %601 = vmatprep.subr.mxu0 0.0
        %602 = vmatpush1.msra.mxu0 0.0
        %603 = vmatprep.subr.mxu0 0.0
        %604 = vmatpush1.msra.mxu0 0.0
        %605 = vmatprep.subr.mxu0 0.0
        %606 = vmatpush1.msra.mxu0 0.0
        %607 = vmatprep.subr.mxu0 0.0
        %608 = vmatpush1.msra.mxu0 0.0
        %609 = vmatprep.subr.mxu0 0.0
        %610 = vmatpush1.msra.mxu0 0.0
        %611 = vmatprep.subr.mxu0 0.0
        %612 = vmatpush1.msra.mxu0 0.0
        %613 = vmatprep.subr.mxu0 0.0
        %614 = vmatpush1.msra.mxu0 0.0
        %615 = vmatprep.subr.mxu0 0.0
        %616 = vmatpush1.msra.mxu0 0.0
        %617 = vmatprep.subr.mxu0 0.0
        %618 = vmatpush1.msra.mxu0 0.0
        %619 = vmatprep.subr.mxu0 0.0
        %620 = vmatpush1.msra.mxu0 0.0
        %621 = vmatprep.subr.mxu0 0.0
        %622 = vmatpush1.msra.mxu0 0.0
        %623 = vmatprep.subr.mxu0 0.0
        %624 = vmatpush1.msra.mxu0 0.0
        %625 = vmatprep.subr.mxu0 0.0
        %626 = vmatpush1.msra.mxu0 0.0
        %627 = vmatprep.mubr.f32.mxu0 0.0
        %628 = vmatmul.mubr.f32.gmra.mrb[0].mxu0 %v272
        %v629 = vpop.f32.mrb[0].mxu0
        %v630 = vadd.f32 %v421, %v629
        %v631 = vpop.f32.mrb[0].mxu0
        %v632 = vadd.f32 %v425, %v631
        %633 = vmatprep.mubr.f32.mxu0 0.0
        %634 = vmatmul.mubr.f32.gmra.mrb[0].mxu0 %v273
        %v635 = vpop.f32.mrb[0].mxu0
        %v636 = vadd.f32 %v421, %v635
        %v637 = vpop.f32.mrb[0].mxu0
        %v638 = vadd.f32 %v425, %v637
        %639 = vmatprep.mubr.f32.mxu0 0.0
        %640 = vmatmul.mubr.f32.gmra.mrb[0].mxu0 %v274
        %v641 = vpop.f32.mrb[0].mxu0
        %v642 = vadd.f32 %v421, %v641
        %v643 = vpop.f32.mrb[0].mxu0
        %v644 = vadd.f32 %v425, %v643
        %645 = vmatprep.mubr.f32.mxu0 0.0
        %646 = vmatmul.mubr.f32.gmra.mrb[0].mxu0 %v275
        %v647 = vpop.f32.mrb[0].mxu0
        %v648 = vadd.f32 %v421, %v647
        %v649 = vpop.f32.mrb[0].mxu0
        %v650 = vadd.f32 %v425, %v649
        %651 = vmatprep.mubr.f32.mxu0 0.0
        %652 = vmatmul.mubr.f32.gmra.mrb[0].mxu0 %v276
        %v653 = vpop.f32.mrb[0].mxu0
        %v654 = vadd.f32 %v421, %v653
        %v655 = vpop.f32.mrb[0].mxu0
        %v656 = vadd.f32 %v425, %v655
        %657 = vmatprep.mubr.f32.mxu0 0.0
        %658 = vmatmul.mubr.f32.gmra.mrb[0].mxu0 %v277
        %v659 = vpop.f32.mrb[0].mxu0
        %v660 = vadd.f32 %v421, %v659
        %v661 = vpop.f32.mrb[0].mxu0
        %v662 = vadd.f32 %v425, %v661
        %663 = vmatprep.mubr.f32.mxu0 0.0
        %664 = vmatmul.mubr.f32.gmra.mrb[0].mxu0 %v278
        %v665 = vpop.f32.mrb[0].mxu0
        %v666 = vadd.f32 %v421, %v665
        %v667 = vpop.f32.mrb[0].mxu0
        %v668 = vadd.f32 %v425, %v667
        %669 = vmatprep.mubr.f32.mxu0 0.0
        %670 = vmatmul.mubr.f32.gmra.mrb[0].mxu0 %v279
        %v671 = vpop.f32.mrb[0].mxu0
        %v672 = vadd.f32 %v421, %v671
        %v673 = vpop.f32.mrb[0].mxu0
        %v674 = vadd.f32 %v425, %v673
        %675 = vdwg.mxu0
        %676 = vmatprep.subr.mxu0 %v285
        %677 = vmatpush1.msra.mxu0 %v284
        %678 = vmatprep.subr.mxu0 %v293
        %679 = vmatpush1.msra.mxu0 %v292
        %680 = vmatprep.subr.mxu0 %v301
        %681 = vmatpush1.msra.mxu0 %v300
        %682 = vmatprep.subr.mxu0 %v309
        %683 = vmatpush1.msra.mxu0 %v308
        %684 = vmatprep.subr.mxu0 %v317
        %685 = vmatpush1.msra.mxu0 %v316
        %686 = vmatprep.subr.mxu0 %v325
        %687 = vmatpush1.msra.mxu0 %v324
        %688 = vmatprep.subr.mxu0 %v333
        %689 = vmatpush1.msra.mxu0 %v332
        %690 = vmatprep.subr.mxu0 %v341
        %691 = vmatpush1.msra.mxu0 %v340
        %692 = vmatprep.subr.mxu0 %v349
        %693 = vmatpush1.msra.mxu0 %v348
        %694 = vmatprep.subr.mxu0 %v357
        %695 = vmatpush1.msra.mxu0 %v356
        %696 = vmatprep.subr.mxu0 %v365
        %697 = vmatpush1.msra.mxu0 %v364
        %698 = vmatprep.subr.mxu0 %v373
        %699 = vmatpush1.msra.mxu0 %v372
        %700 = vmatprep.subr.mxu0 %v381
        %701 = vmatpush1.msra.mxu0 %v380
        %702 = vmatprep.subr.mxu0 %v389
        %703 = vmatpush1.msra.mxu0 %v388
        %704 = vmatprep.subr.mxu0 %v397
        %705 = vmatpush1.msra.mxu0 %v396
        %706 = vmatprep.subr.mxu0 %v405
        %707 = vmatpush1.msra.mxu0 %v404
        %708 = vmatprep.subr.mxu0 0.0
        %709 = vmatpush1.msra.mxu0 0.0
        %710 = vmatprep.subr.mxu0 0.0
        %711 = vmatpush1.msra.mxu0 0.0
        %712 = vmatprep.subr.mxu0 0.0
        %713 = vmatpush1.msra.mxu0 0.0
        %714 = vmatprep.subr.mxu0 0.0
        %715 = vmatpush1.msra.mxu0 0.0
        %716 = vmatprep.subr.mxu0 0.0
        %717 = vmatpush1.msra.mxu0 0.0
        %718 = vmatprep.subr.mxu0 0.0
        %719 = vmatpush1.msra.mxu0 0.0
        %720 = vmatprep.subr.mxu0 0.0
        %721 = vmatpush1.msra.mxu0 0.0
        %722 = vmatprep.subr.mxu0 0.0
        %723 = vmatpush1.msra.mxu0 0.0
        %724 = vmatprep.subr.mxu0 0.0
        %725 = vmatpush1.msra.mxu0 0.0
        %726 = vmatprep.subr.mxu0 0.0
        %727 = vmatpush1.msra.mxu0 0.0
        %728 = vmatprep.subr.mxu0 0.0
        %729 = vmatpush1.msra.mxu0 0.0
        %730 = vmatprep.subr.mxu0 0.0
        %731 = vmatpush1.msra.mxu0 0.0
        %732 = vmatprep.subr.mxu0 0.0
        %733 = vmatpush1.msra.mxu0 0.0
        %734 = vmatprep.subr.mxu0 0.0
        %735 = vmatpush1.msra.mxu0 0.0
        %736 = vmatprep.subr.mxu0 0.0
        %737 = vmatpush1.msra.mxu0 0.0
        %738 = vmatprep.subr.mxu0 0.0
        %739 = vmatpush1.msra.mxu0 0.0
        %740 = vmatprep.mubr.f32.mxu0 0.0
        %741 = vmatmul.mubr.f32.gmra.mrb[0].mxu0 %v272
        %v742 = vpop.f32.mrb[0].mxu0
        %v743 = vadd.f32 %v429, %v742
        %v744 = vpop.f32.mrb[0].mxu0
        %v745 = vadd.f32 %v433, %v744
        %746 = vmatprep.mubr.f32.mxu0 0.0
        %747 = vmatmul.mubr.f32.gmra.mrb[0].mxu0 %v273
        %v748 = vpop.f32.mrb[0].mxu0
        %v749 = vadd.f32 %v429, %v748
        %v750 = vpop.f32.mrb[0].mxu0
        %v751 = vadd.f32 %v433, %v750
        %752 = vmatprep.mubr.f32.mxu0 0.0
        %753 = vmatmul.mubr.f32.gmra.mrb[0].mxu0 %v274
        %v754 = vpop.f32.mrb[0].mxu0
        %v755 = vadd.f32 %v429, %v754
        %v756 = vpop.f32.mrb[0].mxu0
        %v757 = vadd.f32 %v433, %v756
        %758 = vmatprep.mubr.f32.mxu0 0.0
        %759 = vmatmul.mubr.f32.gmra.mrb[0].mxu0 %v275
        %v760 = vpop.f32.mrb[0].mxu0
        %v761 = vadd.f32 %v429, %v760
        %v762 = vpop.f32.mrb[0].mxu0
        %v763 = vadd.f32 %v433, %v762
        %764 = vmatprep.mubr.f32.mxu0 0.0
        %765 = vmatmul.mubr.f32.gmra.mrb[0].mxu0 %v276
        %v766 = vpop.f32.mrb[0].mxu0
        %v767 = vadd.f32 %v429, %v766
        %v768 = vpop.f32.mrb[0].mxu0
        %v769 = vadd.f32 %v433, %v768
        %770 = vmatprep.mubr.f32.mxu0 0.0
        %771 = vmatmul.mubr.f32.gmra.mrb[0].mxu0 %v277
        %v772 = vpop.f32.mrb[0].mxu0
        %v773 = vadd.f32 %v429, %v772
        %v774 = vpop.f32.mrb[0].mxu0
        %v775 = vadd.f32 %v433, %v774
        %776 = vmatprep.mubr.f32.mxu0 0.0
        %777 = vmatmul.mubr.f32.gmra.mrb[0].mxu0 %v278
        %v778 = vpop.f32.mrb[0].mxu0
        %v779 = vadd.f32 %v429, %v778
        %v780 = vpop.f32.mrb[0].mxu0
        %v781 = vadd.f32 %v433, %v780
        %782 = vmatprep.mubr.f32.mxu0 0.0
        %783 = vmatmul.mubr.f32.gmra.mrb[0].mxu0 %v279
        %v784 = vpop.f32.mrb[0].mxu0
        %v785 = vadd.f32 %v429, %v784
        %v786 = vpop.f32.mrb[0].mxu0
        %v787 = vadd.f32 %v433, %v786
        %788 = vdwg.mxu0
        %789 = vmatprep.subr.mxu0 %v287
        %790 = vmatpush1.msra.mxu0 %v286
        %791 = vmatprep.subr.mxu0 %v295
        %792 = vmatpush1.msra.mxu0 %v294
        %793 = vmatprep.subr.mxu0 %v303
        %794 = vmatpush1.msra.mxu0 %v302
        %795 = vmatprep.subr.mxu0 %v311
        %796 = vmatpush1.msra.mxu0 %v310
        %797 = vmatprep.subr.mxu0 %v319
        %798 = vmatpush1.msra.mxu0 %v318
        %799 = vmatprep.subr.mxu0 %v327
        %800 = vmatpush1.msra.mxu0 %v326
        %801 = vmatprep.subr.mxu0 %v335
        %802 = vmatpush1.msra.mxu0 %v334
        %803 = vmatprep.subr.mxu0 %v343
        %804 = vmatpush1.msra.mxu0 %v342
        %805 = vmatprep.subr.mxu0 %v351
        %806 = vmatpush1.msra.mxu0 %v350
        %807 = vmatprep.subr.mxu0 %v359
        %808 = vmatpush1.msra.mxu0 %v358
        %809 = vmatprep.subr.mxu0 %v367
        %810 = vmatpush1.msra.mxu0 %v366
        %811 = vmatprep.subr.mxu0 %v375
        %812 = vmatpush1.msra.mxu0 %v374
        %813 = vmatprep.subr.mxu0 %v383
        %814 = vmatpush1.msra.mxu0 %v382
        %815 = vmatprep.subr.mxu0 %v391
        %816 = vmatpush1.msra.mxu0 %v390
        %817 = vmatprep.subr.mxu0 %v399
        %818 = vmatpush1.msra.mxu0 %v398
        %819 = vmatprep.subr.mxu0 %v407
        %820 = vmatpush1.msra.mxu0 %v406
        %821 = vmatprep.subr.mxu0 0.0
        %822 = vmatpush1.msra.mxu0 0.0
        %823 = vmatprep.subr.mxu0 0.0
        %824 = vmatpush1.msra.mxu0 0.0
        %825 = vmatprep.subr.mxu0 0.0
        %826 = vmatpush1.msra.mxu0 0.0
        %827 = vmatprep.subr.mxu0 0.0
        %828 = vmatpush1.msra.mxu0 0.0
        %829 = vmatprep.subr.mxu0 0.0
        %830 = vmatpush1.msra.mxu0 0.0
        %831 = vmatprep.subr.mxu0 0.0
        %832 = vmatpush1.msra.mxu0 0.0
        %833 = vmatprep.subr.mxu0 0.0
        %834 = vmatpush1.msra.mxu0 0.0
        %835 = vmatprep.subr.mxu0 0.0
        %836 = vmatpush1.msra.mxu0 0.0
        %837 = vmatprep.subr.mxu0 0.0
        %838 = vmatpush1.msra.mxu0 0.0
        %839 = vmatprep.subr.mxu0 0.0
        %840 = vmatpush1.msra.mxu0 0.0
        %841 = vmatprep.subr.mxu0 0.0
        %842 = vmatpush1.msra.mxu0 0.0
        %843 = vmatprep.subr.mxu0 0.0
        %844 = vmatpush1.msra.mxu0 0.0
        %845 = vmatprep.subr.mxu0 0.0
        %846 = vmatpush1.msra.mxu0 0.0
        %847 = vmatprep.subr.mxu0 0.0
        %848 = vmatpush1.msra.mxu0 0.0
        %849 = vmatprep.subr.mxu0 0.0
        %850 = vmatpush1.msra.mxu0 0.0
        %851 = vmatprep.subr.mxu0 0.0
        %852 = vmatpush1.msra.mxu0 0.0
        %853 = vmatprep.mubr.f32.mxu0 0.0
        %854 = vmatmul.mubr.f32.gmra.mrb[0].mxu0 %v272
        %v855 = vpop.f32.mrb[0].mxu0
        %v856 = vadd.f32 %v437, %v855
        %v857 = vpop.f32.mrb[0].mxu0
        %v858 = vadd.f32 %v441, %v857
        %859 = vmatprep.mubr.f32.mxu0 0.0
        %860 = vmatmul.mubr.f32.gmra.mrb[0].mxu0 %v273
        %v861 = vpop.f32.mrb[0].mxu0
        %v862 = vadd.f32 %v437, %v861
        %v863 = vpop.f32.mrb[0].mxu0
        %v864 = vadd.f32 %v441, %v863
        %865 = vmatprep.mubr.f32.mxu0 0.0
        %866 = vmatmul.mubr.f32.gmra.mrb[0].mxu0 %v274
        %v867 = vpop.f32.mrb[0].mxu0
        %v868 = vadd.f32 %v437, %v867
        %v869 = vpop.f32.mrb[0].mxu0
        %v870 = vadd.f32 %v441, %v869
        %871 = vmatprep.mubr.f32.mxu0 0.0
        %872 = vmatmul.mubr.f32.gmra.mrb[0].mxu0 %v275
        %v873 = vpop.f32.mrb[0].mxu0
        %v874 = vadd.f32 %v437, %v873
        %v875 = vpop.f32.mrb[0].mxu0
        %v876 = vadd.f32 %v441, %v875
        %877 = vmatprep.mubr.f32.mxu0 0.0
        %878 = vmatmul.mubr.f32.gmra.mrb[0].mxu0 %v276
        %v879 = vpop.f32.mrb[0].mxu0
        %v880 = vadd.f32 %v437, %v879
        %v881 = vpop.f32.mrb[0].mxu0
        %v882 = vadd.f32 %v441, %v881
        %883 = vmatprep.mubr.f32.mxu0 0.0
        %884 = vmatmul.mubr.f32.gmra.mrb[0].mxu0 %v277
        %v885 = vpop.f32.mrb[0].mxu0
        %v886 = vadd.f32 %v437, %v885
        %v887 = vpop.f32.mrb[0].mxu0
        %v888 = vadd.f32 %v441, %v887
        %889 = vmatprep.mubr.f32.mxu0 0.0
        %890 = vmatmul.mubr.f32.gmra.mrb[0].mxu0 %v278
        %v891 = vpop.f32.mrb[0].mxu0
        %v892 = vadd.f32 %v437, %v891
        %v893 = vpop.f32.mrb[0].mxu0
        %v894 = vadd.f32 %v441, %v893
        %895 = vmatprep.mubr.f32.mxu0 0.0
        %896 = vmatmul.mubr.f32.gmra.mrb[0].mxu0 %v279
        %v897 = vpop.f32.mrb[0].mxu0
        %v898 = vadd.f32 %v437, %v897
        %v899 = vpop.f32.mrb[0].mxu0
        %v900 = vadd.f32 %v441, %v899
        %901 = vdwg.mxu0
        %v902 = vxor.u32 %v517, 2147483648
        %v903 = vxor.u32 %v519, 2147483648
        %v904 = vxor.u32 %v630, 2147483648
        %v905 = vxor.u32 %v632, 2147483648
        %v906 = vxor.u32 %v743, 2147483648
        %v907 = vxor.u32 %v745, 2147483648
        %v908 = vxor.u32 %v856, 2147483648
        %v909 = vxor.u32 %v858, 2147483648
        %v910 = vxor.u32 %v523, 2147483648
        %v911 = vxor.u32 %v525, 2147483648
        %v912 = vxor.u32 %v636, 2147483648
        %v913 = vxor.u32 %v638, 2147483648
        %v914 = vxor.u32 %v749, 2147483648
        %v915 = vxor.u32 %v751, 2147483648
        %v916 = vxor.u32 %v862, 2147483648
        %v917 = vxor.u32 %v864, 2147483648
        %v918 = vxor.u32 %v529, 2147483648
        %v919 = vxor.u32 %v531, 2147483648
        %v920 = vxor.u32 %v642, 2147483648
        %v921 = vxor.u32 %v644, 2147483648
        %v922 = vxor.u32 %v755, 2147483648
        %v923 = vxor.u32 %v757, 2147483648
        %v924 = vxor.u32 %v868, 2147483648
        %v925 = vxor.u32 %v870, 2147483648
        %v926 = vxor.u32 %v535, 2147483648
        %v927 = vxor.u32 %v537, 2147483648
        %v928 = vxor.u32 %v648, 2147483648
        %v929 = vxor.u32 %v650, 2147483648
        %v930 = vxor.u32 %v761, 2147483648
        %v931 = vxor.u32 %v763, 2147483648
        %v932 = vxor.u32 %v874, 2147483648
        %v933 = vxor.u32 %v876, 2147483648
        %v934 = vxor.u32 %v541, 2147483648
        %v935 = vxor.u32 %v543, 2147483648
        %v936 = vxor.u32 %v654, 2147483648
        %v937 = vxor.u32 %v656, 2147483648
        %v938 = vxor.u32 %v767, 2147483648
        %v939 = vxor.u32 %v769, 2147483648
        %v940 = vxor.u32 %v880, 2147483648
        %v941 = vxor.u32 %v882, 2147483648
        %v942 = vxor.u32 %v547, 2147483648
        %v943 = vxor.u32 %v549, 2147483648
        %v944 = vxor.u32 %v660, 2147483648
        %v945 = vxor.u32 %v662, 2147483648
        %v946 = vxor.u32 %v773, 2147483648
        %v947 = vxor.u32 %v775, 2147483648
        %v948 = vxor.u32 %v886, 2147483648
        %v949 = vxor.u32 %v888, 2147483648
        %v950 = vxor.u32 %v553, 2147483648
        %v951 = vxor.u32 %v555, 2147483648
        %v952 = vxor.u32 %v666, 2147483648
        %v953 = vxor.u32 %v668, 2147483648
        %v954 = vxor.u32 %v779, 2147483648
        %v955 = vxor.u32 %v781, 2147483648
        %v956 = vxor.u32 %v892, 2147483648
        %v957 = vxor.u32 %v894, 2147483648
        %v958 = vxor.u32 %v559, 2147483648
        %v959 = vxor.u32 %v561, 2147483648
        %v960 = vxor.u32 %v672, 2147483648
        %v961 = vxor.u32 %v674, 2147483648
        %v962 = vxor.u32 %v785, 2147483648
        %v963 = vxor.u32 %v787, 2147483648
        %v964 = vxor.u32 %v898, 2147483648
        %v965 = vxor.u32 %v900, 2147483648
        %v966 = vmul.f32 %v902, 1.442695
        %v967 = vpow.pop %v966
        %v968 = vmul.f32 %v903, 1.442695
        %v969 = vpow.pop %v968
        %v970 = vmul.f32 %v904, 1.442695
        %v971 = vpow.pop %v970
        %v972 = vmul.f32 %v905, 1.442695
        %v973 = vpow.pop %v972
        %v974 = vmul.f32 %v906, 1.442695
        %v975 = vpow.pop %v974
        %v976 = vmul.f32 %v907, 1.442695
        %v977 = vpow.pop %v976
        %v978 = vmul.f32 %v908, 1.442695
        %v979 = vpow.pop %v978
        %v980 = vmul.f32 %v909, 1.442695
        %v981 = vpow.pop %v980
        %v982 = vmul.f32 %v910, 1.442695
        %v983 = vpow.pop %v982
        %v984 = vmul.f32 %v911, 1.442695
        %v985 = vpow.pop %v984
        %v986 = vmul.f32 %v912, 1.442695
        %v987 = vpow.pop %v986
        %v988 = vmul.f32 %v913, 1.442695
        %v989 = vpow.pop %v988
        %v990 = vmul.f32 %v914, 1.442695
        %v991 = vpow.pop %v990
        %v992 = vmul.f32 %v915, 1.442695
        %v993 = vpow.pop %v992
        %v994 = vmul.f32 %v916, 1.442695
        %v995 = vpow.pop %v994
        %v996 = vmul.f32 %v917, 1.442695
        %v997 = vpow.pop %v996
        %v998 = vmul.f32 %v918, 1.442695
        %v999 = vpow.pop %v998
        %v1000 = vmul.f32 %v919, 1.442695
        %v1001 = vpow.pop %v1000
        %v1002 = vmul.f32 %v920, 1.442695
        %v1003 = vpow.pop %v1002
        %v1004 = vmul.f32 %v921, 1.442695
        %v1005 = vpow.pop %v1004
        %v1006 = vmul.f32 %v922, 1.442695
        %v1007 = vpow.pop %v1006
        %v1008 = vmul.f32 %v923, 1.442695
        %v1009 = vpow.pop %v1008
        %v1010 = vmul.f32 %v924, 1.442695
        %v1011 = vpow.pop %v1010
        %v1012 = vmul.f32 %v925, 1.442695
        %v1013 = vpow.pop %v1012
        %v1014 = vmul.f32 %v926, 1.442695
        %v1015 = vpow.pop %v1014
        %v1016 = vmul.f32 %v927, 1.442695
        %v1017 = vpow.pop %v1016
        %v1018 = vmul.f32 %v928, 1.442695
        %v1019 = vpow.pop %v1018
        %v1020 = vmul.f32 %v929, 1.442695
        %v1021 = vpow.pop %v1020
        %v1022 = vmul.f32 %v930, 1.442695
        %v1023 = vpow.pop %v1022
        %v1024 = vmul.f32 %v931, 1.442695
        %v1025 = vpow.pop %v1024
        %v1026 = vmul.f32 %v932, 1.442695
        %v1027 = vpow.pop %v1026
        %v1028 = vmul.f32 %v933, 1.442695
        %v1029 = vpow.pop %v1028
        %v1030 = vmul.f32 %v934, 1.442695
        %v1031 = vpow.pop %v1030
        %v1032 = vmul.f32 %v935, 1.442695
        %v1033 = vpow.pop %v1032
        %v1034 = vmul.f32 %v936, 1.442695
        %v1035 = vpow.pop %v1034
        %v1036 = vmul.f32 %v937, 1.442695
        %v1037 = vpow.pop %v1036
        %v1038 = vmul.f32 %v938, 1.442695
        %v1039 = vpow.pop %v1038
        %v1040 = vmul.f32 %v939, 1.442695
        %v1041 = vpow.pop %v1040
        %v1042 = vmul.f32 %v940, 1.442695
        %v1043 = vpow.pop %v1042
        %v1044 = vmul.f32 %v941, 1.442695
        %v1045 = vpow.pop %v1044
        %v1046 = vmul.f32 %v942, 1.442695
        %v1047 = vpow.pop %v1046
        %v1048 = vmul.f32 %v943, 1.442695
        %v1049 = vpow.pop %v1048
        %v1050 = vmul.f32 %v944, 1.442695
        %v1051 = vpow.pop %v1050
        %v1052 = vmul.f32 %v945, 1.442695
        %v1053 = vpow.pop %v1052
        %v1054 = vmul.f32 %v946, 1.442695
        %v1055 = vpow.pop %v1054
        %v1056 = vmul.f32 %v947, 1.442695
        %v1057 = vpow.pop %v1056
        %v1058 = vmul.f32 %v948, 1.442695
        %v1059 = vpow.pop %v1058
        %v1060 = vmul.f32 %v949, 1.442695
        %v1061 = vpow.pop %v1060
        %v1062 = vmul.f32 %v950, 1.442695
        %v1063 = vpow.pop %v1062
        %v1064 = vmul.f32 %v951, 1.442695
        %v1065 = vpow.pop %v1064
        %v1066 = vmul.f32 %v952, 1.442695
        %v1067 = vpow.pop %v1066
        %v1068 = vmul.f32 %v953, 1.442695
        %v1069 = vpow.pop %v1068
        %v1070 = vmul.f32 %v954, 1.442695
        %v1071 = vpow.pop %v1070
        %v1072 = vmul.f32 %v955, 1.442695
        %v1073 = vpow.pop %v1072
        %v1074 = vmul.f32 %v956, 1.442695
        %v1075 = vpow.pop %v1074
        %v1076 = vmul.f32 %v957, 1.442695
        %v1077 = vpow.pop %v1076
        %v1078 = vmul.f32 %v958, 1.442695
        %v1079 = vpow.pop %v1078
        %v1080 = vmul.f32 %v959, 1.442695
        %v1081 = vpow.pop %v1080
        %v1082 = vmul.f32 %v960, 1.442695
        %v1083 = vpow.pop %v1082
        %v1084 = vmul.f32 %v961, 1.442695
        %v1085 = vpow.pop %v1084
        %v1086 = vmul.f32 %v962, 1.442695
        %v1087 = vpow.pop %v1086
        %v1088 = vmul.f32 %v963, 1.442695
        %v1089 = vpow.pop %v1088
        %v1090 = vmul.f32 %v964, 1.442695
        %v1091 = vpow.pop %v1090
        %v1092 = vmul.f32 %v965, 1.442695
        %v1093 = vpow.pop %v1092
        %v1094 = vadd.f32 %v967, 1.0
        %v1095 = vadd.f32 %v969, 1.0
        %v1096 = vadd.f32 %v971, 1.0
        %v1097 = vadd.f32 %v973, 1.0
        %v1098 = vadd.f32 %v975, 1.0
        %v1099 = vadd.f32 %v977, 1.0
        %v1100 = vadd.f32 %v979, 1.0
        %v1101 = vadd.f32 %v981, 1.0
        %v1102 = vadd.f32 %v983, 1.0
        %v1103 = vadd.f32 %v985, 1.0
        %v1104 = vadd.f32 %v987, 1.0
        %v1105 = vadd.f32 %v989, 1.0
        %v1106 = vadd.f32 %v991, 1.0
        %v1107 = vadd.f32 %v993, 1.0
        %v1108 = vadd.f32 %v995, 1.0
        %v1109 = vadd.f32 %v997, 1.0
        %v1110 = vadd.f32 %v999, 1.0
        %v1111 = vadd.f32 %v1001, 1.0
        %v1112 = vadd.f32 %v1003, 1.0
        %v1113 = vadd.f32 %v1005, 1.0
        %v1114 = vadd.f32 %v1007, 1.0
        %v1115 = vadd.f32 %v1009, 1.0
        %v1116 = vadd.f32 %v1011, 1.0
        %v1117 = vadd.f32 %v1013, 1.0
        %v1118 = vadd.f32 %v1015, 1.0
        %v1119 = vadd.f32 %v1017, 1.0
        %v1120 = vadd.f32 %v1019, 1.0
        %v1121 = vadd.f32 %v1021, 1.0
        %v1122 = vadd.f32 %v1023, 1.0
        %v1123 = vadd.f32 %v1025, 1.0
        %v1124 = vadd.f32 %v1027, 1.0
        %v1125 = vadd.f32 %v1029, 1.0
        %v1126 = vadd.f32 %v1031, 1.0
        %v1127 = vadd.f32 %v1033, 1.0
        %v1128 = vadd.f32 %v1035, 1.0
        %v1129 = vadd.f32 %v1037, 1.0
        %v1130 = vadd.f32 %v1039, 1.0
        %v1131 = vadd.f32 %v1041, 1.0
        %v1132 = vadd.f32 %v1043, 1.0
        %v1133 = vadd.f32 %v1045, 1.0
        %v1134 = vadd.f32 %v1047, 1.0
        %v1135 = vadd.f32 %v1049, 1.0
        %v1136 = vadd.f32 %v1051, 1.0
        %v1137 = vadd.f32 %v1053, 1.0
        %v1138 = vadd.f32 %v1055, 1.0
        %v1139 = vadd.f32 %v1057, 1.0
        %v1140 = vadd.f32 %v1059, 1.0
        %v1141 = vadd.f32 %v1061, 1.0
        %v1142 = vadd.f32 %v1063, 1.0
        %v1143 = vadd.f32 %v1065, 1.0
        %v1144 = vadd.f32 %v1067, 1.0
        %v1145 = vadd.f32 %v1069, 1.0
        %v1146 = vadd.f32 %v1071, 1.0
        %v1147 = vadd.f32 %v1073, 1.0
        %v1148 = vadd.f32 %v1075, 1.0
        %v1149 = vadd.f32 %v1077, 1.0
        %v1150 = vadd.f32 %v1079, 1.0
        %v1151 = vadd.f32 %v1081, 1.0
        %v1152 = vadd.f32 %v1083, 1.0
        %v1153 = vadd.f32 %v1085, 1.0
        %v1154 = vadd.f32 %v1087, 1.0
        %v1155 = vadd.f32 %v1089, 1.0
        %v1156 = vadd.f32 %v1091, 1.0
        %v1157 = vadd.f32 %v1093, 1.0
        %v1158 = vrcp.pop %v1094
        %v1159 = vmul.f32 1.0, %v1158
        %v1160 = vrcp.pop %v1095
        %v1161 = vmul.f32 1.0, %v1160
        %v1162 = vrcp.pop %v1096
        %v1163 = vmul.f32 1.0, %v1162
        %v1164 = vrcp.pop %v1097
        %v1165 = vmul.f32 1.0, %v1164
        %v1166 = vrcp.pop %v1098
        %v1167 = vmul.f32 1.0, %v1166
        %v1168 = vrcp.pop %v1099
        %v1169 = vmul.f32 1.0, %v1168
        %v1170 = vrcp.pop %v1100
        %v1171 = vmul.f32 1.0, %v1170
        %v1172 = vrcp.pop %v1101
        %v1173 = vmul.f32 1.0, %v1172
        %v1174 = vrcp.pop %v1102
        %v1175 = vmul.f32 1.0, %v1174
        %v1176 = vrcp.pop %v1103
        %v1177 = vmul.f32 1.0, %v1176
        %v1178 = vrcp.pop %v1104
        %v1179 = vmul.f32 1.0, %v1178
        %v1180 = vrcp.pop %v1105
        %v1181 = vmul.f32 1.0, %v1180
        %v1182 = vrcp.pop %v1106
        %v1183 = vmul.f32 1.0, %v1182
        %v1184 = vrcp.pop %v1107
        %v1185 = vmul.f32 1.0, %v1184
        %v1186 = vrcp.pop %v1108
        %v1187 = vmul.f32 1.0, %v1186
        %v1188 = vrcp.pop %v1109
        %v1189 = vmul.f32 1.0, %v1188
        %v1190 = vrcp.pop %v1110
        %v1191 = vmul.f32 1.0, %v1190
        %v1192 = vrcp.pop %v1111
        %v1193 = vmul.f32 1.0, %v1192
        %v1194 = vrcp.pop %v1112
        %v1195 = vmul.f32 1.0, %v1194
        %v1196 = vrcp.pop %v1113
        %v1197 = vmul.f32 1.0, %v1196
        %v1198 = vrcp.pop %v1114
        %v1199 = vmul.f32 1.0, %v1198
        %v1200 = vrcp.pop %v1115
        %v1201 = vmul.f32 1.0, %v1200
        %v1202 = vrcp.pop %v1116
        %v1203 = vmul.f32 1.0, %v1202
        %v1204 = vrcp.pop %v1117
        %v1205 = vmul.f32 1.0, %v1204
        %v1206 = vrcp.pop %v1118
        %v1207 = vmul.f32 1.0, %v1206
        %v1208 = vrcp.pop %v1119
        %v1209 = vmul.f32 1.0, %v1208
        %v1210 = vrcp.pop %v1120
        %v1211 = vmul.f32 1.0, %v1210
        %v1212 = vrcp.pop %v1121
        %v1213 = vmul.f32 1.0, %v1212
        %v1214 = vrcp.pop %v1122
        %v1215 = vmul.f32 1.0, %v1214
        %v1216 = vrcp.pop %v1123
        %v1217 = vmul.f32 1.0, %v1216
        %v1218 = vrcp.pop %v1124
        %v1219 = vmul.f32 1.0, %v1218
        %v1220 = vrcp.pop %v1125
        %v1221 = vmul.f32 1.0, %v1220
        %v1222 = vrcp.pop %v1126
        %v1223 = vmul.f32 1.0, %v1222
        %v1224 = vrcp.pop %v1127
        %v1225 = vmul.f32 1.0, %v1224
        %v1226 = vrcp.pop %v1128
        %v1227 = vmul.f32 1.0, %v1226
        %v1228 = vrcp.pop %v1129
        %v1229 = vmul.f32 1.0, %v1228
        %v1230 = vrcp.pop %v1130
        %v1231 = vmul.f32 1.0, %v1230
        %v1232 = vrcp.pop %v1131
        %v1233 = vmul.f32 1.0, %v1232
        %v1234 = vrcp.pop %v1132
        %v1235 = vmul.f32 1.0, %v1234
        %v1236 = vrcp.pop %v1133
        %v1237 = vmul.f32 1.0, %v1236
        %v1238 = vrcp.pop %v1134
        %v1239 = vmul.f32 1.0, %v1238
        %v1240 = vrcp.pop %v1135
        %v1241 = vmul.f32 1.0, %v1240
        %v1242 = vrcp.pop %v1136
        %v1243 = vmul.f32 1.0, %v1242
        %v1244 = vrcp.pop %v1137
        %v1245 = vmul.f32 1.0, %v1244
        %v1246 = vrcp.pop %v1138
        %v1247 = vmul.f32 1.0, %v1246
        %v1248 = vrcp.pop %v1139
        %v1249 = vmul.f32 1.0, %v1248
        %v1250 = vrcp.pop %v1140
        %v1251 = vmul.f32 1.0, %v1250
        %v1252 = vrcp.pop %v1141
        %v1253 = vmul.f32 1.0, %v1252
        %v1254 = vrcp.pop %v1142
        %v1255 = vmul.f32 1.0, %v1254
        %v1256 = vrcp.pop %v1143
        %v1257 = vmul.f32 1.0, %v1256
        %v1258 = vrcp.pop %v1144
        %v1259 = vmul.f32 1.0, %v1258
        %v1260 = vrcp.pop %v1145
        %v1261 = vmul.f32 1.0, %v1260
        %v1262 = vrcp.pop %v1146
        %v1263 = vmul.f32 1.0, %v1262
        %v1264 = vrcp.pop %v1147
        %v1265 = vmul.f32 1.0, %v1264
        %v1266 = vrcp.pop %v1148
        %v1267 = vmul.f32 1.0, %v1266
        %v1268 = vrcp.pop %v1149
        %v1269 = vmul.f32 1.0, %v1268
        %v1270 = vrcp.pop %v1150
        %v1271 = vmul.f32 1.0, %v1270
        %v1272 = vrcp.pop %v1151
        %v1273 = vmul.f32 1.0, %v1272
        %v1274 = vrcp.pop %v1152
        %v1275 = vmul.f32 1.0, %v1274
        %v1276 = vrcp.pop %v1153
        %v1277 = vmul.f32 1.0, %v1276
        %v1278 = vrcp.pop %v1154
        %v1279 = vmul.f32 1.0, %v1278
        %v1280 = vrcp.pop %v1155
        %v1281 = vmul.f32 1.0, %v1280
        %v1282 = vrcp.pop %v1156
        %v1283 = vmul.f32 1.0, %v1282
        %v1284 = vrcp.pop %v1157
        %v1285 = vmul.f32 1.0, %v1284
        %v1286 = vld [vmem:[%s3] sm:$0xff]
        %v1288 = vlaneseq
        %v1289 = vshrl.u32 %v1288, 7
        %v1290 = vsub.s32 0, %v1289
        %v1291 = vrot.slane %v1286, %v1290
        %v1292 = vlaneseq
        %v1293 = vshrl.u32 %v1292, 7
        %v1294 = vsub.s32 1, %v1293
        %v1295 = vrot.slane %v1286, %v1294
        %v1296 = vlaneseq
        %v1297 = vshrl.u32 %v1296, 7
        %v1298 = vsub.s32 2, %v1297
        %v1299 = vrot.slane %v1286, %v1298
        %v1300 = vlaneseq
        %v1301 = vshrl.u32 %v1300, 7
        %v1302 = vsub.s32 3, %v1301
        %v1303 = vrot.slane %v1286, %v1302
        %v1304 = vlaneseq
        %v1305 = vshrl.u32 %v1304, 7
        %v1306 = vsub.s32 4, %v1305
        %v1307 = vrot.slane %v1286, %v1306
        %v1308 = vlaneseq
        %v1309 = vshrl.u32 %v1308, 7
        %v1310 = vsub.s32 5, %v1309
        %v1311 = vrot.slane %v1286, %v1310
        %v1312 = vlaneseq
        %v1313 = vshrl.u32 %v1312, 7
        %v1314 = vsub.s32 6, %v1313
        %v1315 = vrot.slane %v1286, %v1314
        %v1316 = vlaneseq
        %v1317 = vshrl.u32 %v1316, 7
        %v1318 = vsub.s32 7, %v1317
        %v1319 = vrot.slane %v1286, %v1318
        %v1328 = vmul.f32 %v1159, %v1291
        %v1329 = vmul.f32 %v1161, %v1295
        %v1330 = vmul.f32 %v1163, %v1299
        %v1331 = vmul.f32 %v1165, %v1303
        %v1332 = vmul.f32 %v1167, %v1307
        %v1333 = vmul.f32 %v1169, %v1311
        %v1334 = vmul.f32 %v1171, %v1315
        %v1335 = vmul.f32 %v1173, %v1319
        %v1336 = vmul.f32 %v1175, %v1291
        %v1337 = vmul.f32 %v1177, %v1295
        %v1338 = vmul.f32 %v1179, %v1299
        %v1339 = vmul.f32 %v1181, %v1303
        %v1340 = vmul.f32 %v1183, %v1307
        %v1341 = vmul.f32 %v1185, %v1311
        %v1342 = vmul.f32 %v1187, %v1315
        %v1343 = vmul.f32 %v1189, %v1319
        %v1344 = vmul.f32 %v1191, %v1291
        %v1345 = vmul.f32 %v1193, %v1295
        %v1346 = vmul.f32 %v1195, %v1299
        %v1347 = vmul.f32 %v1197, %v1303
        %v1348 = vmul.f32 %v1199, %v1307
        %v1349 = vmul.f32 %v1201, %v1311
        %v1350 = vmul.f32 %v1203, %v1315
        %v1351 = vmul.f32 %v1205, %v1319
        %v1352 = vmul.f32 %v1207, %v1291
        %v1353 = vmul.f32 %v1209, %v1295
        %v1354 = vmul.f32 %v1211, %v1299
        %v1355 = vmul.f32 %v1213, %v1303
        %v1356 = vmul.f32 %v1215, %v1307
        %v1357 = vmul.f32 %v1217, %v1311
        %v1358 = vmul.f32 %v1219, %v1315
        %v1359 = vmul.f32 %v1221, %v1319
        %v1360 = vmul.f32 %v1223, %v1291
        %v1361 = vmul.f32 %v1225, %v1295
        %v1362 = vmul.f32 %v1227, %v1299
        %v1363 = vmul.f32 %v1229, %v1303
        %v1364 = vmul.f32 %v1231, %v1307
        %v1365 = vmul.f32 %v1233, %v1311
        %v1366 = vmul.f32 %v1235, %v1315
        %v1367 = vmul.f32 %v1237, %v1319
        %v1368 = vmul.f32 %v1239, %v1291
        %v1369 = vmul.f32 %v1241, %v1295
        %v1370 = vmul.f32 %v1243, %v1299
        %v1371 = vmul.f32 %v1245, %v1303
        %v1372 = vmul.f32 %v1247, %v1307
        %v1373 = vmul.f32 %v1249, %v1311
        %v1374 = vmul.f32 %v1251, %v1315
        %v1375 = vmul.f32 %v1253, %v1319
        %v1376 = vmul.f32 %v1255, %v1291
        %v1377 = vmul.f32 %v1257, %v1295
        %v1378 = vmul.f32 %v1259, %v1299
        %v1379 = vmul.f32 %v1261, %v1303
        %v1380 = vmul.f32 %v1263, %v1307
        %v1381 = vmul.f32 %v1265, %v1311
        %v1382 = vmul.f32 %v1267, %v1315
        %v1383 = vmul.f32 %v1269, %v1319
        %v1384 = vmul.f32 %v1271, %v1291
        %v1385 = vmul.f32 %v1273, %v1295
        %v1386 = vmul.f32 %v1275, %v1299
        %v1387 = vmul.f32 %v1277, %v1303
        %v1388 = vmul.f32 %v1279, %v1307
        %v1389 = vmul.f32 %v1281, %v1311
        %v1390 = vmul.f32 %v1283, %v1315
        %v1391 = vmul.f32 %v1285, %v1319
        %v1392 = vadd.f32 %v1328, %v1329
        %v1393 = vadd.f32 %v1336, %v1337
        %v1394 = vadd.f32 %v1344, %v1345
        %v1395 = vadd.f32 %v1352, %v1353
        %v1396 = vadd.f32 %v1360, %v1361
        %v1397 = vadd.f32 %v1368, %v1369
        %v1398 = vadd.f32 %v1376, %v1377
        %v1399 = vadd.f32 %v1384, %v1385
        %v1400 = vadd.f32 %v1330, %v1331
        %v1401 = vadd.f32 %v1338, %v1339
        %v1402 = vadd.f32 %v1346, %v1347
        %v1403 = vadd.f32 %v1354, %v1355
        %v1404 = vadd.f32 %v1362, %v1363
        %v1405 = vadd.f32 %v1370, %v1371
        %v1406 = vadd.f32 %v1378, %v1379
        %v1407 = vadd.f32 %v1386, %v1387
        %v1408 = vadd.f32 %v1332, %v1333
        %v1409 = vadd.f32 %v1340, %v1341
        %v1410 = vadd.f32 %v1348, %v1349
        %v1411 = vadd.f32 %v1356, %v1357
        %v1412 = vadd.f32 %v1364, %v1365
        %v1413 = vadd.f32 %v1372, %v1373
        %v1414 = vadd.f32 %v1380, %v1381
        %v1415 = vadd.f32 %v1388, %v1389
        %v1416 = vadd.f32 %v1334, %v1335
        %v1417 = vadd.f32 %v1342, %v1343
        %v1418 = vadd.f32 %v1350, %v1351
        %v1419 = vadd.f32 %v1358, %v1359
        %v1420 = vadd.f32 %v1366, %v1367
        %v1421 = vadd.f32 %v1374, %v1375
        %v1422 = vadd.f32 %v1382, %v1383
        %v1423 = vadd.f32 %v1390, %v1391
        %v1424 = vadd.f32 %v1392, %v1400
        %v1425 = vadd.f32 %v1393, %v1401
        %v1426 = vadd.f32 %v1394, %v1402
        %v1427 = vadd.f32 %v1395, %v1403
        %v1428 = vadd.f32 %v1396, %v1404
        %v1429 = vadd.f32 %v1397, %v1405
        %v1430 = vadd.f32 %v1398, %v1406
        %v1431 = vadd.f32 %v1399, %v1407
        %v1432 = vadd.f32 %v1408, %v1416
        %v1433 = vadd.f32 %v1409, %v1417
        %v1434 = vadd.f32 %v1410, %v1418
        %v1435 = vadd.f32 %v1411, %v1419
        %v1436 = vadd.f32 %v1412, %v1420
        %v1437 = vadd.f32 %v1413, %v1421
        %v1438 = vadd.f32 %v1414, %v1422
        %v1439 = vadd.f32 %v1415, %v1423
        %v1440 = vadd.f32 %v1424, %v1432
        %v1441 = vadd.f32 %v1425, %v1433
        %v1442 = vadd.f32 %v1426, %v1434
        %v1443 = vadd.f32 %v1427, %v1435
        %v1444 = vadd.f32 %v1428, %v1436
        %v1445 = vadd.f32 %v1429, %v1437
        %v1446 = vadd.f32 %v1430, %v1438
        %v1447 = vadd.f32 %v1431, %v1439
        %v1448 = vld [vmem:[%s4] sm:$0x1]
        %v1450 = vlaneseq
        %v1451 = vshrl.u32 %v1450, 7
        %v1452 = vsub.s32 0, %v1451
        %v1453 = vrot.slane %v1448, %v1452
        %v1455 = vadd.f32 %v1440, %v1453
        %v1456 = vadd.f32 %v1441, %v1453
        %v1457 = vadd.f32 %v1442, %v1453
        %v1458 = vadd.f32 %v1443, %v1453
        %v1459 = vadd.f32 %v1444, %v1453
        %v1460 = vadd.f32 %v1445, %v1453
        %v1461 = vadd.f32 %v1446, %v1453
        %v1462 = vadd.f32 %v1447, %v1453
        %1463 = vst [vmem:[%s269] sm:$0xff] %v1455
        %1464 = vst [vmem:[%s269 + $0x8] sm:$0xff] %v1456
        %1465 = vst [vmem:[%s269 + $0x10] sm:$0xff] %v1457
        %1466 = vst [vmem:[%s269 + $0x18] sm:$0xff] %v1458
        %1467 = vst [vmem:[%s269 + $0x20] sm:$0xff] %v1459
        %1468 = vst [vmem:[%s269 + $0x28] sm:$0xff] %v1460
        %1469 = vst [vmem:[%s269 + $0x30] sm:$0xff] %v1461
        %1470 = vst [vmem:[%s269 + $0x38] sm:$0xff] %v1462
        %s1471 = sand.u32 %s141, 1
        %s1472 = scalar_lea.sflag [#allocation4], %s1471
        %s1473 = sand.u32 %s141, 1
        %s1474 = smul.addr %s1473, 64
        %s1475 = scalar_lea.vmem [#allocation8], %s1474
        // Predicated region
        $region53: #{tpu_custom_call.1} parent=39 // pred_check
          %p1476 = pneg %p151
        $region54: #{tpu_custom_call.1} parent=39 // pred_check_branch
          %1478 = sbr.rel (%p1476) target = $region56
        $region55: #{tpu_custom_call.1} parent=39 // pred_region
          %s1479 = smul.u32 8, %s23
          %s1481 = ssub.s32 1024, 1024
          %1482 = vsyncadd %s1472, %s1481
          %s1483 = smul.addr %s1479, 128
          %s1484 = scalar_lea.hbm %s5, %s1483
          %s1485 = sshll.u32 %s1475, 4
          %s1486 = int_to_ptr.vmem [resolvable:$true] %s1485
          %1491 = dma.vmem_to_hbm [thread:$0]  %s1486, 1024, %s1484, %s1472, 128, 128, 8
        $region56: #{tpu_custom_call.1} parent=39 // pred_fallthru
          _
      $region40: #{tpu_custom_call.1} parent=5 // pred_fallthru
        _
      %p1492 = scmp.le.s32.totalorder 2, %s18
      // Predicated region
      $region57: #{tpu_custom_call.1} parent=5 // pred_check
        %p1493 = pneg %p1492
      $region58: #{tpu_custom_call.1} parent=5 // pred_check_branch
        %1495 = sbr.rel (%p1493) target = $region60
      $region59: #{tpu_custom_call.1} parent=5 // pred_region
        %s1496 = ssub.s32 %s18, 2
        // Predicated region
        $region61: #{tpu_custom_call.1} parent=59 // pred_check
          %p1497 = pneg %p157
        $region62: #{tpu_custom_call.1} parent=59 // pred_check_branch
          %1499 = sbr.rel (%p1497) target = $region64
        $region63: #{tpu_custom_call.1} parent=59 // pred_region
          %s1500 = sand.u32 %s142, 1
          %s1501 = scalar_lea.sflag [#allocation4], %s1500
          %s1502 = sand.u32 %s142, 1
          %s1503 = smul.addr %s1502, 64
          %s1504 = scalar_lea.vmem [#allocation8], %s1503
          %1505 = dma.done %s1501, 1024
        $region64: #{tpu_custom_call.1} parent=59 // pred_fallthru
          _
      $region60: #{tpu_custom_call.1} parent=5 // pred_fallthru
        _
    $region6: #{tpu_custom_call.1} parent=1 // loop_footer
      %s22 = sadd.s32 1, %s18
    $region7: #{tpu_custom_call.1} parent=1 // loop_footer_branch
      %17 = sbr.rel target = $region3
    $region8: #{tpu_custom_call.1} parent=1 // loop_exit
      _
    %1506 = vsyncpa [#allocation3], 1
    %s1507 = scalar_lea.sflag [#allocation3], 1
    %1508 = vsyncpa %s1507, 1
    %1509 = vsyncpa [#allocation6], 1
    %1510 = vsyncpa [#allocation4], 1
    %s1511 = scalar_lea.sflag [#allocation4], 1
    %1512 = vsyncpa %s1511, 1

</llo_original>
